<compile_context>
chip_gen: v5e
topology: v5e:2x2
jax: 0.10.0
libtpu: 0.0.40
codegen_flags: <defaults>
</compile_context>

<pallas_src>
import functools

import jax
import jax.numpy as jnp
from jax.experimental import pallas as pl
from jax.experimental.pallas import tpu as pltpu

EPS = 1e-5


# ------------------------------ fused kernel --------------------------------
def _bottleneck_kernel(*refs, dilation, row_tile, downsample):
    if downsample:
        (x_ref, wr_ref, br_ref, w3_ref, b3_ref, wi_ref, bi_ref,
         wp_ref, bp_ref, o_ref, hpad_ref, acc_ref) = refs
    else:
        (x_ref, wr_ref, br_ref, w3_ref, b3_ref, wi_ref, bi_ref,
         o_ref, hpad_ref, acc_ref) = refs
        wp_ref = bp_ref = None

    d = dilation
    th = row_tile
    _, ho, wo, in_c = x_ref.shape
    mid_c = wr_ref.shape[1]
    out_c = o_ref.shape[3]

    # ---- once per image (row-block 0): reduce = 1x1 conv (BN scale folded
    #      into weights) + bias + ReLU, stored into a zero-padded VMEM scratch
    #      (the zero border implements the 3x3 conv's spatial zero padding).
    @pl.when(pl.program_id(1) == 0)
    def _():
        x2 = x_ref[...].reshape(ho * wo, in_c)                     # bf16
        hred = jnp.dot(x2, wr_ref[...], preferred_element_type=jnp.float32)
        hred = jnp.maximum(hred + br_ref[...], 0.0)
        hpad_ref[...] = jnp.zeros_like(hpad_ref)
        hpad_ref[pl.ds(d, ho), pl.ds(d, wo), :] = hred.reshape(ho, wo, mid_c)

    # ---- per row tile: dilated 3x3 as 9 shifted-window matmuls accumulated
    #      in a VMEM f32 scratch, then BN+ReLU, increase 1x1 + BN,
    #      residual add (identity or proj), final ReLU.
    r0 = pl.multiple_of(pl.program_id(1) * th, th)
    acc_ref[...] = jnp.zeros_like(acc_ref)
    for dy in range(3):                             # static unroll over taps
        # One halo row-window per ky: single VMEM load + single bf16 cast,
        # the 3 kx shifts are static register slices of it.
        rows = hpad_ref[pl.ds(r0 + dy * d, th), :, :].astype(jnp.bfloat16)
        for dx in range(3):
            tap = rows[:, dx * d: dx * d + wo, :].reshape(th * wo, mid_c)
            acc_ref[...] += jnp.dot(tap, w3_ref[3 * dy + dx],
                                    preferred_element_type=jnp.float32)
    h3 = jnp.maximum(acc_ref[...] + b3_ref[...], 0.0)

    y = jnp.dot(h3.astype(jnp.bfloat16), wi_ref[...],
                preferred_element_type=jnp.float32) + bi_ref[...]

    x_rows = x_ref[:, pl.ds(r0, th), :, :].reshape(th * wo, in_c)
    if downsample:
        res = jnp.dot(x_rows, wp_ref[...],
                      preferred_element_type=jnp.float32) + bp_ref[...]
    else:
        res = x_rows.astype(jnp.float32)   # identity: stride==1, in_c==out_c
    out = jnp.maximum(y + res, 0.0)
    o_ref[...] = out.reshape(1, th, wo, out_c).astype(o_ref.dtype)


# ------------------------------- wrappers ------------------------------------
def _choose_row_tile(ho, requested):
    if requested is None:
        requested = ho
    requested = max(1, min(int(requested), ho))
    for th in range(requested, 0, -1):
        if ho % th == 0:
            return th
    return 1


def bottleneck_forward(x, p, *, stride, dilation, downsample, row_tile=None):
    """x: (N, H, W, Cin) bf16 NHWC.  Returns (N, Ho, Wo, Cout) bf16."""
    n, h, w, in_c = x.shape
    mid_c = p["wr"].shape[1]
    out_c = p["wi"].shape[1]
    d = dilation

    if not downsample and (stride != 1 or in_c != out_c):
        raise ValueError("identity residual requires stride == 1 and in_c == out_c")

    # 1x1 conv with stride == strided spatial subsampling (single cheap XLA
    # slice; also shrinks the per-image DMA into the kernel by stride**2).
    # TODO(synk): fold the stride into a manual-DMA gather instead of a wrapper slice.
    x_s = x[:, ::stride, ::stride, :] if stride != 1 else x
    ho, wo = x_s.shape[1], x_s.shape[2]
    th = _choose_row_tile(ho, row_tile)
    n_rb = ho // th

    args = [x_s, p["wr"], p["br"], p["w3"], p["b3"], p["wi"], p["bi"]]
    in_specs = [
        # Whole image per batch step; the block index is constant along the
        # row axis so this DMA is only issued when the batch index changes.
        pl.BlockSpec((1, ho, wo, in_c), lambda nb, rb: (nb, 0, 0, 0)),
        pl.BlockSpec((in_c, mid_c), lambda nb, rb: (0, 0)),
        pl.BlockSpec((1, mid_c), lambda nb, rb: (0, 0)),
        pl.BlockSpec((9, mid_c, mid_c), lambda nb, rb: (0, 0, 0)),
        pl.BlockSpec((1, mid_c), lambda nb, rb: (0, 0)),
        pl.BlockSpec((mid_c, out_c), lambda nb, rb: (0, 0)),
        pl.BlockSpec((1, out_c), lambda nb, rb: (0, 0)),
    ]
    if downsample:
        args += [p["wp"], p["bp"]]
        in_specs += [
            pl.BlockSpec((in_c, out_c), lambda nb, rb: (0, 0)),
            pl.BlockSpec((1, out_c), lambda nb, rb: (0, 0)),
        ]

    kernel = functools.partial(_bottleneck_kernel, dilation=d, row_tile=th,
                               downsample=downsample)
    return pl.pallas_call(
        kernel,
        grid=(n, n_rb),
        in_specs=in_specs,
        out_specs=pl.BlockSpec((1, th, wo, out_c), lambda nb, rb: (nb, rb, 0, 0)),
        out_shape=jax.ShapeDtypeStruct((n, ho, wo, out_c), jnp.bfloat16),
        scratch_shapes=[
            pltpu.VMEM((ho + 2 * d, wo + 2 * d, mid_c), jnp.float32),  # padded hred
            pltpu.VMEM((th * wo, mid_c), jnp.float32),                 # 3x3 accumulator
        ],
        compiler_params=pltpu.CompilerParams(
            dimension_semantics=("parallel", "arbitrary")),
    )(*args)


@functools.partial(jax.jit, static_argnames=("cfg", "row_tile"))
def resblock_forward(x_nchw, kparams, cfg, row_tile=None):
    x = jnp.transpose(x_nchw, (0, 2, 3, 1)).astype(jnp.bfloat16)   # NCHW -> NHWC
    for p, (stride, dilation, downsample) in zip(kparams, cfg):
        x = bottleneck_forward(x, p, stride=stride, dilation=dilation,
                               downsample=downsample, row_tile=row_tile)
    return jnp.transpose(x, (0, 3, 1, 2)).astype(jnp.float32)      # NHWC -> NCHW


# --------------------- parameter init / offline BN fold ----------------------
def _init_bn(key, c):
    k1, k2, k3, k4 = jax.random.split(key, 4)
    return dict(
        gamma=1.0 + 0.1 * jax.random.normal(k1, (c,), jnp.float32),
        beta=0.1 * jax.random.normal(k2, (c,), jnp.float32),
        mean=0.1 * jax.random.normal(k3, (c,), jnp.float32),
        var=0.5 + 0.1 * jnp.abs(jax.random.normal(k4, (c,), jnp.float32)),
    )


def init_bottleneck(key, in_c, mid_c, out_c, downsample):
    ks = jax.random.split(key, 10)
    p = dict(
        reduce_w=0.1 * jax.random.normal(ks[0], (1, 1, in_c, mid_c), jnp.float32),
        reduce_bn=_init_bn(ks[1], mid_c),
        c3_w=0.1 * jax.random.normal(ks[2], (3, 3, mid_c, mid_c), jnp.float32),
        c3_bn=_init_bn(ks[3], mid_c),
        inc_w=0.1 * jax.random.normal(ks[4], (1, 1, mid_c, out_c), jnp.float32),
        inc_cb=0.1 * jax.random.normal(ks[5], (out_c,), jnp.float32),
        inc_bn=_init_bn(ks[6], out_c),
    )
    if downsample:
        p.update(
            proj_w=0.1 * jax.random.normal(ks[7], (1, 1, in_c, out_c), jnp.float32),
            proj_cb=0.1 * jax.random.normal(ks[8], (out_c,), jnp.float32),
            proj_bn=_init_bn(ks[9], out_c),
        )
    return p


def _fold(w_hwio, bn, conv_bias=None):
    """Fold eval-mode BN scale into the conv weight; return (bf16 W, f32 bias)."""
    s = bn["gamma"] / jnp.sqrt(bn["var"] + EPS)
    b = bn["beta"] - bn["mean"] * s
    if conv_bias is not None:
        b = b + conv_bias * s
    return (w_hwio * s).astype(jnp.bfloat16), b.reshape(1, -1).astype(jnp.float32)


def fold_bottleneck_params(p, downsample):
    in_c, mid_c = p["reduce_w"].shape[2], p["reduce_w"].shape[3]
    out_c = p["inc_w"].shape[3]
    wr, br = _fold(p["reduce_w"], p["reduce_bn"])
    w3, b3 = _fold(p["c3_w"], p["c3_bn"])
    wi, bi = _fold(p["inc_w"], p["inc_bn"], p["inc_cb"])
    kp = dict(wr=wr.reshape(in_c, mid_c), br=br,
              w3=w3.reshape(9, mid_c, mid_c), b3=b3,
              wi=wi.reshape(mid_c, out_c), bi=bi)
    if downsample:
        wp, bp = _fold(p["proj_w"], p["proj_bn"], p["proj_cb"])
        kp["wp"] = wp.reshape(in_c, out_c)
        kp["bp"] = bp
    return kp


# ------------------------------ reference (JAX) -------------------------------
def _ref_conv(x, w, stride=1, dilation=1, padding=0):
    return jax.lax.conv_general_dilated(
        x, w, (stride, stride), ((padding, padding), (padding, padding)),
        rhs_dilation=(dilation, dilation),
        dimension_numbers=("NHWC", "HWIO", "NHWC"))


def _ref_bn(y, bn):
    s = bn["gamma"] / jnp.sqrt(bn["var"] + EPS)
    return y * s + (bn["beta"] - bn["mean"] * s)


def ref_resblock(x_nchw, raw_params, cfg):
    x = jnp.transpose(x_nchw, (0, 2, 3, 1)).astype(jnp.float32)
    for p, (stride, dilation, downsample) in zip(raw_params, cfg):
        h = jnp.maximum(_ref_bn(_ref_conv(x, p["reduce_w"], stride=stride),
                                p["reduce_bn"]), 0.0)
        h = jnp.maximum(_ref_bn(_ref_conv(h, p["c3_w"], dilation=dilation,
                                          padding=dilation), p["c3_bn"]), 0.0)
        h = _ref_bn(_ref_conv(h, p["inc_w"]) + p["inc_cb"], p["inc_bn"])
        if downsample:
            res = _ref_bn(_ref_conv(x, p["proj_w"], stride=stride) + p["proj_cb"],
                          p["proj_bn"])
        else:
            res = x
        x = jnp.maximum(h + res, 0.0)
    return jnp.transpose(x, (0, 3, 1, 2))


# ---------------------------------- main --------------------------------------
if __name__ == "__main__":
    # ResBlock(n_layers=2, in_channels=8, mid_c=4, out_c=16, stride=2, dilation=2)
    n_layers, in_c, mid_c, out_c, stride, dilation = 2, 8, 4, 16, 2, 2

    key = jax.random.PRNGKey(0)
    kx, kp = jax.random.split(key)
    x = jax.random.normal(kx, (2, in_c, 16, 16), jnp.float32)   # NCHW like PyTorch

    keys = jax.random.split(kp, n_layers)
    raw_params = [init_bottleneck(keys[0], in_c, mid_c, out_c, True)]
    cfg = [(stride, dilation, True)]
    for i in range(1, n_layers):
        raw_params.append(init_bottleneck(keys[i], out_c, mid_c, out_c, False))
        cfg.append((1, dilation, False))
    cfg = tuple(cfg)
    kparams = [fold_bottleneck_params(p, downsample=c[2])
               for p, c in zip(raw_params, cfg)]

    # row_tile=4 exercises the multi-row-block (halo) path of the kernel.
    out = jax.block_until_ready(resblock_forward(x, kparams, cfg=cfg, row_tile=4))
    ref = jax.block_until_ready(ref_resblock(x, raw_params, cfg))

    assert out.shape == (2, out_c, 8, 8), out.shape
    err = float(jnp.max(jnp.abs(out - ref)))
    # Kernel runs bf16 on the MXU path (f32 accumulation); compare against the
    # pure-f32 reference with bf16-level tolerance.
    assert jnp.allclose(out, ref, rtol=5e-2, atol=5e-2), f"max abs error {err}"

    print("KERNEL_OK")
</pallas_src>

<mosaic_0001>
module attributes {stable_mosaic.version = 11 : i64} {
  func.func @_bottleneck_kernel(%arg0: i32, %arg1: i32, %arg2: memref<1x8x8x8xbf16, #tpu.memory_space<vmem>>, %arg3: memref<8x4xbf16, #tpu.memory_space<vmem>>, %arg4: memref<1x4xf32, #tpu.memory_space<vmem>>, %arg5: memref<9x4x4xbf16, #tpu.memory_space<vmem>>, %arg6: memref<1x4xf32, #tpu.memory_space<vmem>>, %arg7: memref<4x16xbf16, #tpu.memory_space<vmem>>, %arg8: memref<1x16xf32, #tpu.memory_space<vmem>>, %arg9: memref<8x16xbf16, #tpu.memory_space<vmem>>, %arg10: memref<1x16xf32, #tpu.memory_space<vmem>>, %arg11: memref<1x4x8x16xbf16, #tpu.memory_space<vmem>>, %arg12: memref<12x12x4xf32, #tpu.memory_space<vmem>>, %arg13: memref<32x4xf32, #tpu.memory_space<vmem>>) attributes {dimension_semantics = [#tpu.dimension_semantics<parallel>, #tpu.dimension_semantics<arbitrary>], iteration_bounds = array<i64: 2, 2>, scalar_prefetch = 0 : i64, scratch_operands = 2 : i64, tpu.core_type = #tpu.core_type<tc>, window_params = [{transform_indices = @transform_0, window_bounds = array<i64: 1, 8, 8, 8>}, {pipeline_mode = #tpu.pipeline_mode<synchronous>, transform_indices = @transform_1, window_bounds = array<i64: 8, 4>}, {pipeline_mode = #tpu.pipeline_mode<synchronous>, transform_indices = @transform_2, window_bounds = array<i64: 1, 4>}, {pipeline_mode = #tpu.pipeline_mode<synchronous>, transform_indices = @transform_3, window_bounds = array<i64: 9, 4, 4>}, {pipeline_mode = #tpu.pipeline_mode<synchronous>, transform_indices = @transform_4, window_bounds = array<i64: 1, 4>}, {pipeline_mode = #tpu.pipeline_mode<synchronous>, transform_indices = @transform_5, window_bounds = array<i64: 4, 16>}, {pipeline_mode = #tpu.pipeline_mode<synchronous>, transform_indices = @transform_6, window_bounds = array<i64: 1, 16>}, {pipeline_mode = #tpu.pipeline_mode<synchronous>, transform_indices = @transform_7, window_bounds = array<i64: 8, 16>}, {pipeline_mode = #tpu.pipeline_mode<synchronous>, transform_indices = @transform_8, window_bounds = array<i64: 1, 16>}, {transform_indices = @transform_9, window_bounds = array<i64: 1, 4, 8, 16>}]} {
    %c0_i32 = arith.constant 0 : i32
    %0 = arith.cmpi eq, %arg1, %c0_i32 : i32
    %1 = arith.extui %0 : i1 to i32
    %c0_i32_0 = arith.constant 0 : i32
    %2 = arith.cmpi ne, %1, %c0_i32_0 : i32
    scf.if %2 {
      %c0_97 = arith.constant 0 : index
      %c0_98 = arith.constant 0 : index
      %c0_99 = arith.constant 0 : index
      %c0_100 = arith.constant 0 : index
      %117 = vector.load %arg2[%c0_97, %c0_98, %c0_99, %c0_100] : memref<1x8x8x8xbf16, #tpu.memory_space<vmem>>, vector<1x8x8x8xbf16>
      %118 = vector.shape_cast %117 : vector<1x8x8x8xbf16> to vector<64x8xbf16>
      %c0_101 = arith.constant 0 : index
      %c0_102 = arith.constant 0 : index
      %119 = vector.load %arg3[%c0_101, %c0_102] : memref<8x4xbf16, #tpu.memory_space<vmem>>, vector<8x4xbf16>
      %cst_103 = arith.constant dense<0.000000e+00> : vector<64x4xf32>
      %120 = tpu.matmul %118, %119, %cst_103 {dimension_numbers = #tpu.dot_dimension_numbers<[1], [0], [0], [1], [0, 0, 1, 1], [], []>} : vector<64x8xbf16>, vector<8x4xbf16>, vector<64x4xf32> -> vector<64x4xf32>
      %c0_104 = arith.constant 0 : index
      %c0_105 = arith.constant 0 : index
      %121 = vector.load %arg4[%c0_104, %c0_105] : memref<1x4xf32, #tpu.memory_space<vmem>>, vector<1x4xf32>
      %122 = vector.broadcast %121 : vector<1x4xf32> to vector<64x4xf32>
      %123 = arith.addf %120, %122 : vector<64x4xf32>
      %cst_106 = arith.constant 0.000000e+00 : f32
      %124 = vector.broadcast %cst_106 : f32 to vector<64x4xf32>
      %125 = arith.maximumf %123, %124 : vector<64x4xf32>
      %cst_107 = arith.constant 0.000000e+00 : f32
      %126 = vector.broadcast %cst_107 : f32 to vector<12x12x4xf32>
      %c0_108 = arith.constant 0 : index
      %c0_109 = arith.constant 0 : index
      %c0_110 = arith.constant 0 : index
      %127 = vector.load %arg12[%c0_108, %c0_109, %c0_110] : memref<12x12x4xf32, #tpu.memory_space<vmem>>, vector<12x12x4xf32>
      tpu.vector_store %arg12[%c0_108, %c0_109, %c0_110], %126 {strides = array<i32>} : memref<12x12x4xf32, #tpu.memory_space<vmem>>, vector<12x12x4xf32>,
      %128 = vector.shape_cast %125 : vector<64x4xf32> to vector<8x8x4xf32>
      %c2_111 = arith.constant 2 : index
      %c2_112 = arith.constant 2 : index
      %c0_113 = arith.constant 0 : index
      %129 = vector.load %arg12[%c2_111, %c2_112, %c0_113] : memref<12x12x4xf32, #tpu.memory_space<vmem>>, vector<8x8x4xf32>
      tpu.vector_store %arg12[%c2_111, %c2_112, %c0_113], %128 {strides = array<i32>} : memref<12x12x4xf32, #tpu.memory_space<vmem>>, vector<8x8x4xf32>,
    } else {
    }
    %c4_i32 = arith.constant 4 : i32
    %3 = arith.muli %arg1, %c4_i32 : i32
    %4 = tpu.assume_multiple %3, 4 : i32
    %cst = arith.constant 0.000000e+00 : f32
    %5 = vector.broadcast %cst : f32 to vector<32x4xf32>
    %c0 = arith.constant 0 : index
    %c0_1 = arith.constant 0 : index
    %6 = vector.load %arg13[%c0, %c0_1] : memref<32x4xf32, #tpu.memory_space<vmem>>, vector<32x4xf32>
    tpu.vector_store %arg13[%c0, %c0_1], %5 {strides = array<i32>} : memref<32x4xf32, #tpu.memory_space<vmem>>, vector<32x4xf32>,
    %c0_i32_2 = arith.constant 0 : i32
    %7 = arith.addi %4, %c0_i32_2 : i32
    %8 = arith.index_cast %7 : i32 to index
    %c0_3 = arith.constant 0 : index
    %c0_4 = arith.constant 0 : index
    %9 = vector.load %arg12[%8, %c0_3, %c0_4] : memref<12x12x4xf32, #tpu.memory_space<vmem>>, vector<4x12x4xf32>
    %10 = arith.truncf %9 : vector<4x12x4xf32> to vector<4x12x4xbf16>
    %11 = vector.extract_strided_slice %10 {offsets = [0, 0, 0], sizes = [4, 8, 4], strides = [1, 1, 1]} : vector<4x12x4xbf16> to vector<4x8x4xbf16>
    %12 = vector.shape_cast %11 : vector<4x8x4xbf16> to vector<32x4xbf16>
    %c0_5 = arith.constant 0 : index
    %c0_6 = arith.constant 0 : index
    %13 = vector.load %arg13[%c0_5, %c0_6] : memref<32x4xf32, #tpu.memory_space<vmem>>, vector<32x4xf32>
    %c0_7 = arith.constant 0 : index
    %c0_8 = arith.constant 0 : index
    %c0_9 = arith.constant 0 : index
    %14 = vector.load %arg5[%c0_7, %c0_8, %c0_9] : memref<9x4x4xbf16, #tpu.memory_space<vmem>>, vector<1x4x4xbf16>
    %15 = vector.shape_cast %14 : vector<1x4x4xbf16> to vector<4x4xbf16>
    %cst_10 = arith.constant dense<0.000000e+00> : vector<32x4xf32>
    %16 = tpu.matmul %12, %15, %cst_10 {dimension_numbers = #tpu.dot_dimension_numbers<[1], [0], [0], [1], [0, 0, 1, 1], [], []>} : vector<32x4xbf16>, vector<4x4xbf16>, vector<32x4xf32> -> vector<32x4xf32>
    %17 = arith.addf %13, %16 : vector<32x4xf32>
    %c0_11 = arith.constant 0 : index
    %c0_12 = arith.constant 0 : index
    %18 = vector.load %arg13[%c0_11, %c0_12] : memref<32x4xf32, #tpu.memory_space<vmem>>, vector<32x4xf32>
    tpu.vector_store %arg13[%c0_11, %c0_12], %17 {strides = array<i32>} : memref<32x4xf32, #tpu.memory_space<vmem>>, vector<32x4xf32>,
    %19 = vector.extract_strided_slice %10 {offsets = [0, 2, 0], sizes = [4, 8, 4], strides = [1, 1, 1]} : vector<4x12x4xbf16> to vector<4x8x4xbf16>
    %20 = vector.shape_cast %19 : vector<4x8x4xbf16> to vector<32x4xbf16>
    %c0_13 = arith.constant 0 : index
    %c0_14 = arith.constant 0 : index
    %21 = vector.load %arg13[%c0_13, %c0_14] : memref<32x4xf32, #tpu.memory_space<vmem>>, vector<32x4xf32>
    %c1 = arith.constant 1 : index
    %c0_15 = arith.constant 0 : index
    %c0_16 = arith.constant 0 : index
    %22 = vector.load %arg5[%c1, %c0_15, %c0_16] : memref<9x4x4xbf16, #tpu.memory_space<vmem>>, vector<1x4x4xbf16>
    %23 = vector.shape_cast %22 : vector<1x4x4xbf16> to vector<4x4xbf16>
    %cst_17 = arith.constant dense<0.000000e+00> : vector<32x4xf32>
    %24 = tpu.matmul %20, %23, %cst_17 {dimension_numbers = #tpu.dot_dimension_numbers<[1], [0], [0], [1], [0, 0, 1, 1], [], []>} : vector<32x4xbf16>, vector<4x4xbf16>, vector<32x4xf32> -> vector<32x4xf32>
    %25 = arith.addf %21, %24 : vector<32x4xf32>
    %c0_18 = arith.constant 0 : index
    %c0_19 = arith.constant 0 : index
    %26 = vector.load %arg13[%c0_18, %c0_19] : memref<32x4xf32, #tpu.memory_space<vmem>>, vector<32x4xf32>
    tpu.vector_store %arg13[%c0_18, %c0_19], %25 {strides = array<i32>} : memref<32x4xf32, #tpu.memory_space<vmem>>, vector<32x4xf32>,
    %27 = vector.extract_strided_slice %10 {offsets = [0, 4, 0], sizes = [4, 8, 4], strides = [1, 1, 1]} : vector<4x12x4xbf16> to vector<4x8x4xbf16>
    %28 = vector.shape_cast %27 : vector<4x8x4xbf16> to vector<32x4xbf16>
    %c0_20 = arith.constant 0 : index
    %c0_21 = arith.constant 0 : index
    %29 = vector.load %arg13[%c0_20, %c0_21] : memref<32x4xf32, #tpu.memory_space<vmem>>, vector<32x4xf32>
    %c2 = arith.constant 2 : index
    %c0_22 = arith.constant 0 : index
    %c0_23 = arith.constant 0 : index
    %30 = vector.load %arg5[%c2, %c0_22, %c0_23] : memref<9x4x4xbf16, #tpu.memory_space<vmem>>, vector<1x4x4xbf16>
    %31 = vector.shape_cast %30 : vector<1x4x4xbf16> to vector<4x4xbf16>
    %cst_24 = arith.constant dense<0.000000e+00> : vector<32x4xf32>
    %32 = tpu.matmul %28, %31, %cst_24 {dimension_numbers = #tpu.dot_dimension_numbers<[1], [0], [0], [1], [0, 0, 1, 1], [], []>} : vector<32x4xbf16>, vector<4x4xbf16>, vector<32x4xf32> -> vector<32x4xf32>
    %33 = arith.addf %29, %32 : vector<32x4xf32>
    %c0_25 = arith.constant 0 : index
    %c0_26 = arith.constant 0 : index
    %34 = vector.load %arg13[%c0_25, %c0_26] : memref<32x4xf32, #tpu.memory_space<vmem>>, vector<32x4xf32>
    tpu.vector_store %arg13[%c0_25, %c0_26], %33 {strides = array<i32>} : memref<32x4xf32, #tpu.memory_space<vmem>>, vector<32x4xf32>,
    %c2_i32 = arith.constant 2 : i32
    %35 = arith.addi %4, %c2_i32 : i32
    %36 = arith.index_cast %35 : i32 to index
    %c0_27 = arith.constant 0 : index
    %c0_28 = arith.constant 0 : index
    %37 = vector.load %arg12[%36, %c0_27, %c0_28] : memref<12x12x4xf32, #tpu.memory_space<vmem>>, vector<4x12x4xf32>
    %38 = arith.truncf %37 : vector<4x12x4xf32> to vector<4x12x4xbf16>
    %39 = vector.extract_strided_slice %38 {offsets = [0, 0, 0], sizes = [4, 8, 4], strides = [1, 1, 1]} : vector<4x12x4xbf16> to vector<4x8x4xbf16>
    %40 = vector.shape_cast %39 : vector<4x8x4xbf16> to vector<32x4xbf16>
    %c0_29 = arith.constant 0 : index
    %c0_30 = arith.constant 0 : index
    %41 = vector.load %arg13[%c0_29, %c0_30] : memref<32x4xf32, #tpu.memory_space<vmem>>, vector<32x4xf32>
    %c3 = arith.constant 3 : index
    %c0_31 = arith.constant 0 : index
    %c0_32 = arith.constant 0 : index
    %42 = vector.load %arg5[%c3, %c0_31, %c0_32] : memref<9x4x4xbf16, #tpu.memory_space<vmem>>, vector<1x4x4xbf16>
    %43 = vector.shape_cast %42 : vector<1x4x4xbf16> to vector<4x4xbf16>
    %cst_33 = arith.constant dense<0.000000e+00> : vector<32x4xf32>
    %44 = tpu.matmul %40, %43, %cst_33 {dimension_numbers = #tpu.dot_dimension_numbers<[1], [0], [0], [1], [0, 0, 1, 1], [], []>} : vector<32x4xbf16>, vector<4x4xbf16>, vector<32x4xf32> -> vector<32x4xf32>
    %45 = arith.addf %41, %44 : vector<32x4xf32>
    %c0_34 = arith.constant 0 : index
    %c0_35 = arith.constant 0 : index
    %46 = vector.load %arg13[%c0_34, %c0_35] : memref<32x4xf32, #tpu.memory_space<vmem>>, vector<32x4xf32>
    tpu.vector_store %arg13[%c0_34, %c0_35], %45 {strides = array<i32>} : memref<32x4xf32, #tpu.memory_space<vmem>>, vector<32x4xf32>,
    %47 = vector.extract_strided_slice %38 {offsets = [0, 2, 0], sizes = [4, 8, 4], strides = [1, 1, 1]} : vector<4x12x4xbf16> to vector<4x8x4xbf16>
    %48 = vector.shape_cast %47 : vector<4x8x4xbf16> to vector<32x4xbf16>
    %c0_36 = arith.constant 0 : index
    %c0_37 = arith.constant 0 : index
    %49 = vector.load %arg13[%c0_36, %c0_37] : memref<32x4xf32, #tpu.memory_space<vmem>>, vector<32x4xf32>
    %c4 = arith.constant 4 : index
    %c0_38 = arith.constant 0 : index
    %c0_39 = arith.constant 0 : index
    %50 = vector.load %arg5[%c4, %c0_38, %c0_39] : memref<9x4x4xbf16, #tpu.memory_space<vmem>>, vector<1x4x4xbf16>
    %51 = vector.shape_cast %50 : vector<1x4x4xbf16> to vector<4x4xbf16>
    %cst_40 = arith.constant dense<0.000000e+00> : vector<32x4xf32>
    %52 = tpu.matmul %48, %51, %cst_40 {dimension_numbers = #tpu.dot_dimension_numbers<[1], [0], [0], [1], [0, 0, 1, 1], [], []>} : vector<32x4xbf16>, vector<4x4xbf16>, vector<32x4xf32> -> vector<32x4xf32>
    %53 = arith.addf %49, %52 : vector<32x4xf32>
    %c0_41 = arith.constant 0 : index
    %c0_42 = arith.constant 0 : index
    %54 = vector.load %arg13[%c0_41, %c0_42] : memref<32x4xf32, #tpu.memory_space<vmem>>, vector<32x4xf32>
    tpu.vector_store %arg13[%c0_41, %c0_42], %53 {strides = array<i32>} : memref<32x4xf32, #tpu.memory_space<vmem>>, vector<32x4xf32>,
    %55 = vector.extract_strided_slice %38 {offsets = [0, 4, 0], sizes = [4, 8, 4], strides = [1, 1, 1]} : vector<4x12x4xbf16> to vector<4x8x4xbf16>
    %56 = vector.shape_cast %55 : vector<4x8x4xbf16> to vector<32x4xbf16>
    %c0_43 = arith.constant 0 : index
    %c0_44 = arith.constant 0 : index
    %57 = vector.load %arg13[%c0_43, %c0_44] : memref<32x4xf32, #tpu.memory_space<vmem>>, vector<32x4xf32>
    %c5 = arith.constant 5 : index
    %c0_45 = arith.constant 0 : index
    %c0_46 = arith.constant 0 : index
    %58 = vector.load %arg5[%c5, %c0_45, %c0_46] : memref<9x4x4xbf16, #tpu.memory_space<vmem>>, vector<1x4x4xbf16>
    %59 = vector.shape_cast %58 : vector<1x4x4xbf16> to vector<4x4xbf16>
    %cst_47 = arith.constant dense<0.000000e+00> : vector<32x4xf32>
    %60 = tpu.matmul %56, %59, %cst_47 {dimension_numbers = #tpu.dot_dimension_numbers<[1], [0], [0], [1], [0, 0, 1, 1], [], []>} : vector<32x4xbf16>, vector<4x4xbf16>, vector<32x4xf32> -> vector<32x4xf32>
    %61 = arith.addf %57, %60 : vector<32x4xf32>
    %c0_48 = arith.constant 0 : index
    %c0_49 = arith.constant 0 : index
    %62 = vector.load %arg13[%c0_48, %c0_49] : memref<32x4xf32, #tpu.memory_space<vmem>>, vector<32x4xf32>
    tpu.vector_store %arg13[%c0_48, %c0_49], %61 {strides = array<i32>} : memref<32x4xf32, #tpu.memory_space<vmem>>, vector<32x4xf32>,
    %c4_i32_50 = arith.constant 4 : i32
    %63 = arith.addi %4, %c4_i32_50 : i32
    %64 = arith.index_cast %63 : i32 to index
    %c0_51 = arith.constant 0 : index
    %c0_52 = arith.constant 0 : index
    %65 = vector.load %arg12[%64, %c0_51, %c0_52] : memref<12x12x4xf32, #tpu.memory_space<vmem>>, vector<4x12x4xf32>
    %66 = arith.truncf %65 : vector<4x12x4xf32> to vector<4x12x4xbf16>
    %67 = vector.extract_strided_slice %66 {offsets = [0, 0, 0], sizes = [4, 8, 4], strides = [1, 1, 1]} : vector<4x12x4xbf16> to vector<4x8x4xbf16>
    %68 = vector.shape_cast %67 : vector<4x8x4xbf16> to vector<32x4xbf16>
    %c0_53 = arith.constant 0 : index
    %c0_54 = arith.constant 0 : index
    %69 = vector.load %arg13[%c0_53, %c0_54] : memref<32x4xf32, #tpu.memory_space<vmem>>, vector<32x4xf32>
    %c6 = arith.constant 6 : index
    %c0_55 = arith.constant 0 : index
    %c0_56 = arith.constant 0 : index
    %70 = vector.load %arg5[%c6, %c0_55, %c0_56] : memref<9x4x4xbf16, #tpu.memory_space<vmem>>, vector<1x4x4xbf16>
    %71 = vector.shape_cast %70 : vector<1x4x4xbf16> to vector<4x4xbf16>
    %cst_57 = arith.constant dense<0.000000e+00> : vector<32x4xf32>
    %72 = tpu.matmul %68, %71, %cst_57 {dimension_numbers = #tpu.dot_dimension_numbers<[1], [0], [0], [1], [0, 0, 1, 1], [], []>} : vector<32x4xbf16>, vector<4x4xbf16>, vector<32x4xf32> -> vector<32x4xf32>
    %73 = arith.addf %69, %72 : vector<32x4xf32>
    %c0_58 = arith.constant 0 : index
    %c0_59 = arith.constant 0 : index
    %74 = vector.load %arg13[%c0_58, %c0_59] : memref<32x4xf32, #tpu.memory_space<vmem>>, vector<32x4xf32>
    tpu.vector_store %arg13[%c0_58, %c0_59], %73 {strides = array<i32>} : memref<32x4xf32, #tpu.memory_space<vmem>>, vector<32x4xf32>,
    %75 = vector.extract_strided_slice %66 {offsets = [0, 2, 0], sizes = [4, 8, 4], strides = [1, 1, 1]} : vector<4x12x4xbf16> to vector<4x8x4xbf16>
    %76 = vector.shape_cast %75 : vector<4x8x4xbf16> to vector<32x4xbf16>
    %c0_60 = arith.constant 0 : index
    %c0_61 = arith.constant 0 : index
    %77 = vector.load %arg13[%c0_60, %c0_61] : memref<32x4xf32, #tpu.memory_space<vmem>>, vector<32x4xf32>
    %c7 = arith.constant 7 : index
    %c0_62 = arith.constant 0 : index
    %c0_63 = arith.constant 0 : index
    %78 = vector.load %arg5[%c7, %c0_62, %c0_63] : memref<9x4x4xbf16, #tpu.memory_space<vmem>>, vector<1x4x4xbf16>
    %79 = vector.shape_cast %78 : vector<1x4x4xbf16> to vector<4x4xbf16>
    %cst_64 = arith.constant dense<0.000000e+00> : vector<32x4xf32>
    %80 = tpu.matmul %76, %79, %cst_64 {dimension_numbers = #tpu.dot_dimension_numbers<[1], [0], [0], [1], [0, 0, 1, 1], [], []>} : vector<32x4xbf16>, vector<4x4xbf16>, vector<32x4xf32> -> vector<32x4xf32>
    %81 = arith.addf %77, %80 : vector<32x4xf32>
    %c0_65 = arith.constant 0 : index
    %c0_66 = arith.constant 0 : index
    %82 = vector.load %arg13[%c0_65, %c0_66] : memref<32x4xf32, #tpu.memory_space<vmem>>, vector<32x4xf32>
    tpu.vector_store %arg13[%c0_65, %c0_66], %81 {strides = array<i32>} : memref<32x4xf32, #tpu.memory_space<vmem>>, vector<32x4xf32>,
    %83 = vector.extract_strided_slice %66 {offsets = [0, 4, 0], sizes = [4, 8, 4], strides = [1, 1, 1]} : vector<4x12x4xbf16> to vector<4x8x4xbf16>
    %84 = vector.shape_cast %83 : vector<4x8x4xbf16> to vector<32x4xbf16>
    %c0_67 = arith.constant 0 : index
    %c0_68 = arith.constant 0 : index
    %85 = vector.load %arg13[%c0_67, %c0_68] : memref<32x4xf32, #tpu.memory_space<vmem>>, vector<32x4xf32>
    %c8 = arith.constant 8 : index
    %c0_69 = arith.constant 0 : index
    %c0_70 = arith.constant 0 : index
    %86 = vector.load %arg5[%c8, %c0_69, %c0_70] : memref<9x4x4xbf16, #tpu.memory_space<vmem>>, vector<1x4x4xbf16>
    %87 = vector.shape_cast %86 : vector<1x4x4xbf16> to vector<4x4xbf16>
    %cst_71 = arith.constant dense<0.000000e+00> : vector<32x4xf32>
    %88 = tpu.matmul %84, %87, %cst_71 {dimension_numbers = #tpu.dot_dimension_numbers<[1], [0], [0], [1], [0, 0, 1, 1], [], []>} : vector<32x4xbf16>, vector<4x4xbf16>, vector<32x4xf32> -> vector<32x4xf32>
    %89 = arith.addf %85, %88 : vector<32x4xf32>
    %c0_72 = arith.constant 0 : index
    %c0_73 = arith.constant 0 : index
    %90 = vector.load %arg13[%c0_72, %c0_73] : memref<32x4xf32, #tpu.memory_space<vmem>>, vector<32x4xf32>
    tpu.vector_store %arg13[%c0_72, %c0_73], %89 {strides = array<i32>} : memref<32x4xf32, #tpu.memory_space<vmem>>, vector<32x4xf32>,
    %c0_74 = arith.constant 0 : index
    %c0_75 = arith.constant 0 : index
    %91 = vector.load %arg13[%c0_74, %c0_75] : memref<32x4xf32, #tpu.memory_space<vmem>>, vector<32x4xf32>
    %c0_76 = arith.constant 0 : index
    %c0_77 = arith.constant 0 : index
    %92 = vector.load %arg6[%c0_76, %c0_77] : memref<1x4xf32, #tpu.memory_space<vmem>>, vector<1x4xf32>
    %93 = vector.broadcast %92 : vector<1x4xf32> to vector<32x4xf32>
    %94 = arith.addf %91, %93 : vector<32x4xf32>
    %cst_78 = arith.constant 0.000000e+00 : f32
    %95 = vector.broadcast %cst_78 : f32 to vector<32x4xf32>
    %96 = arith.maximumf %94, %95 : vector<32x4xf32>
    %97 = arith.truncf %96 : vector<32x4xf32> to vector<32x4xbf16>
    %c0_79 = arith.constant 0 : index
    %c0_80 = arith.constant 0 : index
    %98 = vector.load %arg7[%c0_79, %c0_80] : memref<4x16xbf16, #tpu.memory_space<vmem>>, vector<4x16xbf16>
    %cst_81 = arith.constant dense<0.000000e+00> : vector<32x16xf32>
    %99 = tpu.matmul %97, %98, %cst_81 {dimension_numbers = #tpu.dot_dimension_numbers<[1], [0], [0], [1], [0, 0, 1, 1], [], []>} : vector<32x4xbf16>, vector<4x16xbf16>, vector<32x16xf32> -> vector<32x16xf32>
    %c0_82 = arith.constant 0 : index
    %c0_83 = arith.constant 0 : index
    %100 = vector.load %arg8[%c0_82, %c0_83] : memref<1x16xf32, #tpu.memory_space<vmem>>, vector<1x16xf32>
    %101 = vector.broadcast %100 : vector<1x16xf32> to vector<32x16xf32>
    %102 = arith.addf %99, %101 : vector<32x16xf32>
    %c0_84 = arith.constant 0 : index
    %103 = arith.index_cast %4 : i32 to index
    %c0_85 = arith.constant 0 : index
    %c0_86 = arith.constant 0 : index
    %104 = vector.load %arg2[%c0_84, %103, %c0_85, %c0_86] : memref<1x8x8x8xbf16, #tpu.memory_space<vmem>>, vector<1x4x8x8xbf16>
    %105 = vector.shape_cast %104 : vector<1x4x8x8xbf16> to vector<32x8xbf16>
    %c0_87 = arith.constant 0 : index
    %c0_88 = arith.constant 0 : index
    %106 = vector.load %arg9[%c0_87, %c0_88] : memref<8x16xbf16, #tpu.memory_space<vmem>>, vector<8x16xbf16>
    %cst_89 = arith.constant dense<0.000000e+00> : vector<32x16xf32>
    %107 = tpu.matmul %105, %106, %cst_89 {dimension_numbers = #tpu.dot_dimension_numbers<[1], [0], [0], [1], [0, 0, 1, 1], [], []>} : vector<32x8xbf16>, vector<8x16xbf16>, vector<32x16xf32> -> vector<32x16xf32>
    %c0_90 = arith.constant 0 : index
    %c0_91 = arith.constant 0 : index
    %108 = vector.load %arg10[%c0_90, %c0_91] : memref<1x16xf32, #tpu.memory_space<vmem>>, vector<1x16xf32>
    %109 = vector.broadcast %108 : vector<1x16xf32> to vector<32x16xf32>
    %110 = arith.addf %107, %109 : vector<32x16xf32>
    %111 = arith.addf %102, %110 : vector<32x16xf32>
    %cst_92 = arith.constant 0.000000e+00 : f32
    %112 = vector.broadcast %cst_92 : f32 to vector<32x16xf32>
    %113 = arith.maximumf %111, %112 : vector<32x16xf32>
    %114 = vector.shape_cast %113 : vector<32x16xf32> to vector<1x4x8x16xf32>
    %115 = arith.truncf %114 : vector<1x4x8x16xf32> to vector<1x4x8x16xbf16>
    %c0_93 = arith.constant 0 : index
    %c0_94 = arith.constant 0 : index
    %c0_95 = arith.constant 0 : index
    %c0_96 = arith.constant 0 : index
    %116 = vector.load %arg11[%c0_93, %c0_94, %c0_95, %c0_96] : memref<1x4x8x16xbf16, #tpu.memory_space<vmem>>, vector<1x4x8x16xbf16>
    tpu.vector_store %arg11[%c0_93, %c0_94, %c0_95, %c0_96], %115 {strides = array<i32>} : memref<1x4x8x16xbf16, #tpu.memory_space<vmem>>, vector<1x4x8x16xbf16>,
    return
  }
  func.func @transform_0(%arg0: i32, %arg1: i32) -> (i32, i32, i32, i32) {
    %c0_i32 = arith.constant 0 : i32
    %c0_i32_0 = arith.constant 0 : i32
    %c0_i32_1 = arith.constant 0 : i32
    %c0_i32_2 = arith.constant 0 : i32
    return %arg0, %c0_i32, %c0_i32_0, %c0_i32_1 : i32, i32, i32, i32
  }
  func.func @transform_1(%arg0: i32, %arg1: i32) -> (i32, i32) {
    %c0_i32 = arith.constant 0 : i32
    %c0_i32_0 = arith.constant 0 : i32
    %c0_i32_1 = arith.constant 0 : i32
    return %c0_i32, %c0_i32_0 : i32, i32
  }
  func.func @transform_2(%arg0: i32, %arg1: i32) -> (i32, i32) {
    %c0_i32 = arith.constant 0 : i32
    %c0_i32_0 = arith.constant 0 : i32
    %c0_i32_1 = arith.constant 0 : i32
    return %c0_i32, %c0_i32_0 : i32, i32
  }
  func.func @transform_3(%arg0: i32, %arg1: i32) -> (i32, i32, i32) {
    %c0_i32 = arith.constant 0 : i32
    %c0_i32_0 = arith.constant 0 : i32
    %c0_i32_1 = arith.constant 0 : i32
    %c0_i32_2 = arith.constant 0 : i32
    return %c0_i32, %c0_i32_0, %c0_i32_1 : i32, i32, i32
  }
  func.func @transform_4(%arg0: i32, %arg1: i32) -> (i32, i32) {
    %c0_i32 = arith.constant 0 : i32
    %c0_i32_0 = arith.constant 0 : i32
    %c0_i32_1 = arith.constant 0 : i32
    return %c0_i32, %c0_i32_0 : i32, i32
  }
  func.func @transform_5(%arg0: i32, %arg1: i32) -> (i32, i32) {
    %c0_i32 = arith.constant 0 : i32
    %c0_i32_0 = arith.constant 0 : i32
    %c0_i32_1 = arith.constant 0 : i32
    return %c0_i32, %c0_i32_0 : i32, i32
  }
  func.func @transform_6(%arg0: i32, %arg1: i32) -> (i32, i32) {
    %c0_i32 = arith.constant 0 : i32
    %c0_i32_0 = arith.constant 0 : i32
    %c0_i32_1 = arith.constant 0 : i32
    return %c0_i32, %c0_i32_0 : i32, i32
  }
  func.func @transform_7(%arg0: i32, %arg1: i32) -> (i32, i32) {
    %c0_i32 = arith.constant 0 : i32
    %c0_i32_0 = arith.constant 0 : i32
    %c0_i32_1 = arith.constant 0 : i32
    return %c0_i32, %c0_i32_0 : i32, i32
  }
  func.func @transform_8(%arg0: i32, %arg1: i32) -> (i32, i32) {
    %c0_i32 = arith.constant 0 : i32
    %c0_i32_0 = arith.constant 0 : i32
    %c0_i32_1 = arith.constant 0 : i32
    return %c0_i32, %c0_i32_0 : i32, i32
  }
  func.func @transform_9(%arg0: i32, %arg1: i32) -> (i32, i32, i32, i32) {
    %c0_i32 = arith.constant 0 : i32
    %c0_i32_0 = arith.constant 0 : i32
    %c0_i32_1 = arith.constant 0 : i32
    return %arg0, %arg1, %c0_i32, %c0_i32_0 : i32, i32, i32, i32
  }
}

module attributes {stable_mosaic.version = 11 : i64} {
  func.func @_bottleneck_kernel(%arg0: i32, %arg1: i32, %arg2: memref<1x8x8x16xbf16, #tpu.memory_space<vmem>>, %arg3: memref<16x4xbf16, #tpu.memory_space<vmem>>, %arg4: memref<1x4xf32, #tpu.memory_space<vmem>>, %arg5: memref<9x4x4xbf16, #tpu.memory_space<vmem>>, %arg6: memref<1x4xf32, #tpu.memory_space<vmem>>, %arg7: memref<4x16xbf16, #tpu.memory_space<vmem>>, %arg8: memref<1x16xf32, #tpu.memory_space<vmem>>, %arg9: memref<1x4x8x16xbf16, #tpu.memory_space<vmem>>, %arg10: memref<12x12x4xf32, #tpu.memory_space<vmem>>, %arg11: memref<32x4xf32, #tpu.memory_space<vmem>>) attributes {dimension_semantics = [#tpu.dimension_semantics<parallel>, #tpu.dimension_semantics<arbitrary>], iteration_bounds = array<i64: 2, 2>, scalar_prefetch = 0 : i64, scratch_operands = 2 : i64, tpu.core_type = #tpu.core_type<tc>, window_params = [{transform_indices = @transform_0, window_bounds = array<i64: 1, 8, 8, 16>}, {pipeline_mode = #tpu.pipeline_mode<synchronous>, transform_indices = @transform_1, window_bounds = array<i64: 16, 4>}, {pipeline_mode = #tpu.pipeline_mode<synchronous>, transform_indices = @transform_2, window_bounds = array<i64: 1, 4>}, {pipeline_mode = #tpu.pipeline_mode<synchronous>, transform_indices = @transform_3, window_bounds = array<i64: 9, 4, 4>}, {pipeline_mode = #tpu.pipeline_mode<synchronous>, transform_indices = @transform_4, window_bounds = array<i64: 1, 4>}, {pipeline_mode = #tpu.pipeline_mode<synchronous>, transform_indices = @transform_5, window_bounds = array<i64: 4, 16>}, {pipeline_mode = #tpu.pipeline_mode<synchronous>, transform_indices = @transform_6, window_bounds = array<i64: 1, 16>}, {transform_indices = @transform_7, window_bounds = array<i64: 1, 4, 8, 16>}]} {
    %c0_i32 = arith.constant 0 : i32
    %0 = arith.cmpi eq, %arg1, %c0_i32 : i32
    %1 = arith.extui %0 : i1 to i32
    %c0_i32_0 = arith.constant 0 : i32
    %2 = arith.cmpi ne, %1, %c0_i32_0 : i32
    scf.if %2 {
      %c0_92 = arith.constant 0 : index
      %c0_93 = arith.constant 0 : index
      %c0_94 = arith.constant 0 : index
      %c0_95 = arith.constant 0 : index
      %113 = vector.load %arg2[%c0_92, %c0_93, %c0_94, %c0_95] : memref<1x8x8x16xbf16, #tpu.memory_space<vmem>>, vector<1x8x8x16xbf16>
      %114 = vector.shape_cast %113 : vector<1x8x8x16xbf16> to vector<64x16xbf16>
      %c0_96 = arith.constant 0 : index
      %c0_97 = arith.constant 0 : index
      %115 = vector.load %arg3[%c0_96, %c0_97] : memref<16x4xbf16, #tpu.memory_space<vmem>>, vector<16x4xbf16>
      %cst_98 = arith.constant dense<0.000000e+00> : vector<64x4xf32>
      %116 = tpu.matmul %114, %115, %cst_98 {dimension_numbers = #tpu.dot_dimension_numbers<[1], [0], [0], [1], [0, 0, 1, 1], [], []>} : vector<64x16xbf16>, vector<16x4xbf16>, vector<64x4xf32> -> vector<64x4xf32>
      %c0_99 = arith.constant 0 : index
      %c0_100 = arith.constant 0 : index
      %117 = vector.load %arg4[%c0_99, %c0_100] : memref<1x4xf32, #tpu.memory_space<vmem>>, vector<1x4xf32>
      %118 = vector.broadcast %117 : vector<1x4xf32> to vector<64x4xf32>
      %119 = arith.addf %116, %118 : vector<64x4xf32>
      %cst_101 = arith.constant 0.000000e+00 : f32
      %120 = vector.broadcast %cst_101 : f32 to vector<64x4xf32>
      %121 = arith.maximumf %119, %120 : vector<64x4xf32>
      %cst_102 = arith.constant 0.000000e+00 : f32
      %122 = vector.broadcast %cst_102 : f32 to vector<12x12x4xf32>
      %c0_103 = arith.constant 0 : index
      %c0_104 = arith.constant 0 : index
      %c0_105 = arith.constant 0 : index
      %123 = vector.load %arg10[%c0_103, %c0_104, %c0_105] : memref<12x12x4xf32, #tpu.memory_space<vmem>>, vector<12x12x4xf32>
      tpu.vector_store %arg10[%c0_103, %c0_104, %c0_105], %122 {strides = array<i32>} : memref<12x12x4xf32, #tpu.memory_space<vmem>>, vector<12x12x4xf32>,
      %124 = vector.shape_cast %121 : vector<64x4xf32> to vector<8x8x4xf32>
      %c2_106 = arith.constant 2 : index
      %c2_107 = arith.constant 2 : index
      %c0_108 = arith.constant 0 : index
      %125 = vector.load %arg10[%c2_106, %c2_107, %c0_108] : memref<12x12x4xf32, #tpu.memory_space<vmem>>, vector<8x8x4xf32>
      tpu.vector_store %arg10[%c2_106, %c2_107, %c0_108], %124 {strides = array<i32>} : memref<12x12x4xf32, #tpu.memory_space<vmem>>, vector<8x8x4xf32>,
    } else {
    }
    %c4_i32 = arith.constant 4 : i32
    %3 = arith.muli %arg1, %c4_i32 : i32
    %4 = tpu.assume_multiple %3, 4 : i32
    %cst = arith.constant 0.000000e+00 : f32
    %5 = vector.broadcast %cst : f32 to vector<32x4xf32>
    %c0 = arith.constant 0 : index
    %c0_1 = arith.constant 0 : index
    %6 = vector.load %arg11[%c0, %c0_1] : memref<32x4xf32, #tpu.memory_space<vmem>>, vector<32x4xf32>
    tpu.vector_store %arg11[%c0, %c0_1], %5 {strides = array<i32>} : memref<32x4xf32, #tpu.memory_space<vmem>>, vector<32x4xf32>,
    %c0_i32_2 = arith.constant 0 : i32
    %7 = arith.addi %4, %c0_i32_2 : i32
    %8 = arith.index_cast %7 : i32 to index
    %c0_3 = arith.constant 0 : index
    %c0_4 = arith.constant 0 : index
    %9 = vector.load %arg10[%8, %c0_3, %c0_4] : memref<12x12x4xf32, #tpu.memory_space<vmem>>, vector<4x12x4xf32>
    %10 = arith.truncf %9 : vector<4x12x4xf32> to vector<4x12x4xbf16>
    %11 = vector.extract_strided_slice %10 {offsets = [0, 0, 0], sizes = [4, 8, 4], strides = [1, 1, 1]} : vector<4x12x4xbf16> to vector<4x8x4xbf16>
    %12 = vector.shape_cast %11 : vector<4x8x4xbf16> to vector<32x4xbf16>
    %c0_5 = arith.constant 0 : index
    %c0_6 = arith.constant 0 : index
    %13 = vector.load %arg11[%c0_5, %c0_6] : memref<32x4xf32, #tpu.memory_space<vmem>>, vector<32x4xf32>
    %c0_7 = arith.constant 0 : index
    %c0_8 = arith.constant 0 : index
    %c0_9 = arith.constant 0 : index
    %14 = vector.load %arg5[%c0_7, %c0_8, %c0_9] : memref<9x4x4xbf16, #tpu.memory_space<vmem>>, vector<1x4x4xbf16>
    %15 = vector.shape_cast %14 : vector<1x4x4xbf16> to vector<4x4xbf16>
    %cst_10 = arith.constant dense<0.000000e+00> : vector<32x4xf32>
    %16 = tpu.matmul %12, %15, %cst_10 {dimension_numbers = #tpu.dot_dimension_numbers<[1], [0], [0], [1], [0, 0, 1, 1], [], []>} : vector<32x4xbf16>, vector<4x4xbf16>, vector<32x4xf32> -> vector<32x4xf32>
    %17 = arith.addf %13, %16 : vector<32x4xf32>
    %c0_11 = arith.constant 0 : index
    %c0_12 = arith.constant 0 : index
    %18 = vector.load %arg11[%c0_11, %c0_12] : memref<32x4xf32, #tpu.memory_space<vmem>>, vector<32x4xf32>
    tpu.vector_store %arg11[%c0_11, %c0_12], %17 {strides = array<i32>} : memref<32x4xf32, #tpu.memory_space<vmem>>, vector<32x4xf32>,
    %19 = vector.extract_strided_slice %10 {offsets = [0, 2, 0], sizes = [4, 8, 4], strides = [1, 1, 1]} : vector<4x12x4xbf16> to vector<4x8x4xbf16>
    %20 = vector.shape_cast %19 : vector<4x8x4xbf16> to vector<32x4xbf16>
    %c0_13 = arith.constant 0 : index
    %c0_14 = arith.constant 0 : index
    %21 = vector.load %arg11[%c0_13, %c0_14] : memref<32x4xf32, #tpu.memory_space<vmem>>, vector<32x4xf32>
    %c1 = arith.constant 1 : index
    %c0_15 = arith.constant 0 : index
    %c0_16 = arith.constant 0 : index
    %22 = vector.load %arg5[%c1, %c0_15, %c0_16] : memref<9x4x4xbf16, #tpu.memory_space<vmem>>, vector<1x4x4xbf16>
    %23 = vector.shape_cast %22 : vector<1x4x4xbf16> to vector<4x4xbf16>
    %cst_17 = arith.constant dense<0.000000e+00> : vector<32x4xf32>
    %24 = tpu.matmul %20, %23, %cst_17 {dimension_numbers = #tpu.dot_dimension_numbers<[1], [0], [0], [1], [0, 0, 1, 1], [], []>} : vector<32x4xbf16>, vector<4x4xbf16>, vector<32x4xf32> -> vector<32x4xf32>
    %25 = arith.addf %21, %24 : vector<32x4xf32>
    %c0_18 = arith.constant 0 : index
    %c0_19 = arith.constant 0 : index
    %26 = vector.load %arg11[%c0_18, %c0_19] : memref<32x4xf32, #tpu.memory_space<vmem>>, vector<32x4xf32>
    tpu.vector_store %arg11[%c0_18, %c0_19], %25 {strides = array<i32>} : memref<32x4xf32, #tpu.memory_space<vmem>>, vector<32x4xf32>,
    %27 = vector.extract_strided_slice %10 {offsets = [0, 4, 0], sizes = [4, 8, 4], strides = [1, 1, 1]} : vector<4x12x4xbf16> to vector<4x8x4xbf16>
    %28 = vector.shape_cast %27 : vector<4x8x4xbf16> to vector<32x4xbf16>
    %c0_20 = arith.constant 0 : index
    %c0_21 = arith.constant 0 : index
    %29 = vector.load %arg11[%c0_20, %c0_21] : memref<32x4xf32, #tpu.memory_space<vmem>>, vector<32x4xf32>
    %c2 = arith.constant 2 : index
    %c0_22 = arith.constant 0 : index
    %c0_23 = arith.constant 0 : index
    %30 = vector.load %arg5[%c2, %c0_22, %c0_23] : memref<9x4x4xbf16, #tpu.memory_space<vmem>>, vector<1x4x4xbf16>
    %31 = vector.shape_cast %30 : vector<1x4x4xbf16> to vector<4x4xbf16>
    %cst_24 = arith.constant dense<0.000000e+00> : vector<32x4xf32>
    %32 = tpu.matmul %28, %31, %cst_24 {dimension_numbers = #tpu.dot_dimension_numbers<[1], [0], [0], [1], [0, 0, 1, 1], [], []>} : vector<32x4xbf16>, vector<4x4xbf16>, vector<32x4xf32> -> vector<32x4xf32>
    %33 = arith.addf %29, %32 : vector<32x4xf32>
    %c0_25 = arith.constant 0 : index
    %c0_26 = arith.constant 0 : index
    %34 = vector.load %arg11[%c0_25, %c0_26] : memref<32x4xf32, #tpu.memory_space<vmem>>, vector<32x4xf32>
    tpu.vector_store %arg11[%c0_25, %c0_26], %33 {strides = array<i32>} : memref<32x4xf32, #tpu.memory_space<vmem>>, vector<32x4xf32>,
    %c2_i32 = arith.constant 2 : i32
    %35 = arith.addi %4, %c2_i32 : i32
    %36 = arith.index_cast %35 : i32 to index
    %c0_27 = arith.constant 0 : index
    %c0_28 = arith.constant 0 : index
    %37 = vector.load %arg10[%36, %c0_27, %c0_28] : memref<12x12x4xf32, #tpu.memory_space<vmem>>, vector<4x12x4xf32>
    %38 = arith.truncf %37 : vector<4x12x4xf32> to vector<4x12x4xbf16>
    %39 = vector.extract_strided_slice %38 {offsets = [0, 0, 0], sizes = [4, 8, 4], strides = [1, 1, 1]} : vector<4x12x4xbf16> to vector<4x8x4xbf16>
    %40 = vector.shape_cast %39 : vector<4x8x4xbf16> to vector<32x4xbf16>
    %c0_29 = arith.constant 0 : index
    %c0_30 = arith.constant 0 : index
    %41 = vector.load %arg11[%c0_29, %c0_30] : memref<32x4xf32, #tpu.memory_space<vmem>>, vector<32x4xf32>
    %c3 = arith.constant 3 : index
    %c0_31 = arith.constant 0 : index
    %c0_32 = arith.constant 0 : index
    %42 = vector.load %arg5[%c3, %c0_31, %c0_32] : memref<9x4x4xbf16, #tpu.memory_space<vmem>>, vector<1x4x4xbf16>
    %43 = vector.shape_cast %42 : vector<1x4x4xbf16> to vector<4x4xbf16>
    %cst_33 = arith.constant dense<0.000000e+00> : vector<32x4xf32>
    %44 = tpu.matmul %40, %43, %cst_33 {dimension_numbers = #tpu.dot_dimension_numbers<[1], [0], [0], [1], [0, 0, 1, 1], [], []>} : vector<32x4xbf16>, vector<4x4xbf16>, vector<32x4xf32> -> vector<32x4xf32>
    %45 = arith.addf %41, %44 : vector<32x4xf32>
    %c0_34 = arith.constant 0 : index
    %c0_35 = arith.constant 0 : index
    %46 = vector.load %arg11[%c0_34, %c0_35] : memref<32x4xf32, #tpu.memory_space<vmem>>, vector<32x4xf32>
    tpu.vector_store %arg11[%c0_34, %c0_35], %45 {strides = array<i32>} : memref<32x4xf32, #tpu.memory_space<vmem>>, vector<32x4xf32>,
    %47 = vector.extract_strided_slice %38 {offsets = [0, 2, 0], sizes = [4, 8, 4], strides = [1, 1, 1]} : vector<4x12x4xbf16> to vector<4x8x4xbf16>
    %48 = vector.shape_cast %47 : vector<4x8x4xbf16> to vector<32x4xbf16>
    %c0_36 = arith.constant 0 : index
    %c0_37 = arith.constant 0 : index
    %49 = vector.load %arg11[%c0_36, %c0_37] : memref<32x4xf32, #tpu.memory_space<vmem>>, vector<32x4xf32>
    %c4 = arith.constant 4 : index
    %c0_38 = arith.constant 0 : index
    %c0_39 = arith.constant 0 : index
    %50 = vector.load %arg5[%c4, %c0_38, %c0_39] : memref<9x4x4xbf16, #tpu.memory_space<vmem>>, vector<1x4x4xbf16>
    %51 = vector.shape_cast %50 : vector<1x4x4xbf16> to vector<4x4xbf16>
    %cst_40 = arith.constant dense<0.000000e+00> : vector<32x4xf32>
    %52 = tpu.matmul %48, %51, %cst_40 {dimension_numbers = #tpu.dot_dimension_numbers<[1], [0], [0], [1], [0, 0, 1, 1], [], []>} : vector<32x4xbf16>, vector<4x4xbf16>, vector<32x4xf32> -> vector<32x4xf32>
    %53 = arith.addf %49, %52 : vector<32x4xf32>
    %c0_41 = arith.constant 0 : index
    %c0_42 = arith.constant 0 : index
    %54 = vector.load %arg11[%c0_41, %c0_42] : memref<32x4xf32, #tpu.memory_space<vmem>>, vector<32x4xf32>
    tpu.vector_store %arg11[%c0_41, %c0_42], %53 {strides = array<i32>} : memref<32x4xf32, #tpu.memory_space<vmem>>, vector<32x4xf32>,
    %55 = vector.extract_strided_slice %38 {offsets = [0, 4, 0], sizes = [4, 8, 4], strides = [1, 1, 1]} : vector<4x12x4xbf16> to vector<4x8x4xbf16>
    %56 = vector.shape_cast %55 : vector<4x8x4xbf16> to vector<32x4xbf16>
    %c0_43 = arith.constant 0 : index
    %c0_44 = arith.constant 0 : index
    %57 = vector.load %arg11[%c0_43, %c0_44] : memref<32x4xf32, #tpu.memory_space<vmem>>, vector<32x4xf32>
    %c5 = arith.constant 5 : index
    %c0_45 = arith.constant 0 : index
    %c0_46 = arith.constant 0 : index
    %58 = vector.load %arg5[%c5, %c0_45, %c0_46] : memref<9x4x4xbf16, #tpu.memory_space<vmem>>, vector<1x4x4xbf16>
    %59 = vector.shape_cast %58 : vector<1x4x4xbf16> to vector<4x4xbf16>
    %cst_47 = arith.constant dense<0.000000e+00> : vector<32x4xf32>
    %60 = tpu.matmul %56, %59, %cst_47 {dimension_numbers = #tpu.dot_dimension_numbers<[1], [0], [0], [1], [0, 0, 1, 1], [], []>} : vector<32x4xbf16>, vector<4x4xbf16>, vector<32x4xf32> -> vector<32x4xf32>
    %61 = arith.addf %57, %60 : vector<32x4xf32>
    %c0_48 = arith.constant 0 : index
    %c0_49 = arith.constant 0 : index
    %62 = vector.load %arg11[%c0_48, %c0_49] : memref<32x4xf32, #tpu.memory_space<vmem>>, vector<32x4xf32>
    tpu.vector_store %arg11[%c0_48, %c0_49], %61 {strides = array<i32>} : memref<32x4xf32, #tpu.memory_space<vmem>>, vector<32x4xf32>,
    %c4_i32_50 = arith.constant 4 : i32
    %63 = arith.addi %4, %c4_i32_50 : i32
    %64 = arith.index_cast %63 : i32 to index
    %c0_51 = arith.constant 0 : index
    %c0_52 = arith.constant 0 : index
    %65 = vector.load %arg10[%64, %c0_51, %c0_52] : memref<12x12x4xf32, #tpu.memory_space<vmem>>, vector<4x12x4xf32>
    %66 = arith.truncf %65 : vector<4x12x4xf32> to vector<4x12x4xbf16>
    %67 = vector.extract_strided_slice %66 {offsets = [0, 0, 0], sizes = [4, 8, 4], strides = [1, 1, 1]} : vector<4x12x4xbf16> to vector<4x8x4xbf16>
    %68 = vector.shape_cast %67 : vector<4x8x4xbf16> to vector<32x4xbf16>
    %c0_53 = arith.constant 0 : index
    %c0_54 = arith.constant 0 : index
    %69 = vector.load %arg11[%c0_53, %c0_54] : memref<32x4xf32, #tpu.memory_space<vmem>>, vector<32x4xf32>
    %c6 = arith.constant 6 : index
    %c0_55 = arith.constant 0 : index
    %c0_56 = arith.constant 0 : index
    %70 = vector.load %arg5[%c6, %c0_55, %c0_56] : memref<9x4x4xbf16, #tpu.memory_space<vmem>>, vector<1x4x4xbf16>
    %71 = vector.shape_cast %70 : vector<1x4x4xbf16> to vector<4x4xbf16>
    %cst_57 = arith.constant dense<0.000000e+00> : vector<32x4xf32>
    %72 = tpu.matmul %68, %71, %cst_57 {dimension_numbers = #tpu.dot_dimension_numbers<[1], [0], [0], [1], [0, 0, 1, 1], [], []>} : vector<32x4xbf16>, vector<4x4xbf16>, vector<32x4xf32> -> vector<32x4xf32>
    %73 = arith.addf %69, %72 : vector<32x4xf32>
    %c0_58 = arith.constant 0 : index
    %c0_59 = arith.constant 0 : index
    %74 = vector.load %arg11[%c0_58, %c0_59] : memref<32x4xf32, #tpu.memory_space<vmem>>, vector<32x4xf32>
    tpu.vector_store %arg11[%c0_58, %c0_59], %73 {strides = array<i32>} : memref<32x4xf32, #tpu.memory_space<vmem>>, vector<32x4xf32>,
    %75 = vector.extract_strided_slice %66 {offsets = [0, 2, 0], sizes = [4, 8, 4], strides = [1, 1, 1]} : vector<4x12x4xbf16> to vector<4x8x4xbf16>
    %76 = vector.shape_cast %75 : vector<4x8x4xbf16> to vector<32x4xbf16>
    %c0_60 = arith.constant 0 : index
    %c0_61 = arith.constant 0 : index
    %77 = vector.load %arg11[%c0_60, %c0_61] : memref<32x4xf32, #tpu.memory_space<vmem>>, vector<32x4xf32>
    %c7 = arith.constant 7 : index
    %c0_62 = arith.constant 0 : index
    %c0_63 = arith.constant 0 : index
    %78 = vector.load %arg5[%c7, %c0_62, %c0_63] : memref<9x4x4xbf16, #tpu.memory_space<vmem>>, vector<1x4x4xbf16>
    %79 = vector.shape_cast %78 : vector<1x4x4xbf16> to vector<4x4xbf16>
    %cst_64 = arith.constant dense<0.000000e+00> : vector<32x4xf32>
    %80 = tpu.matmul %76, %79, %cst_64 {dimension_numbers = #tpu.dot_dimension_numbers<[1], [0], [0], [1], [0, 0, 1, 1], [], []>} : vector<32x4xbf16>, vector<4x4xbf16>, vector<32x4xf32> -> vector<32x4xf32>
    %81 = arith.addf %77, %80 : vector<32x4xf32>
    %c0_65 = arith.constant 0 : index
    %c0_66 = arith.constant 0 : index
    %82 = vector.load %arg11[%c0_65, %c0_66] : memref<32x4xf32, #tpu.memory_space<vmem>>, vector<32x4xf32>
    tpu.vector_store %arg11[%c0_65, %c0_66], %81 {strides = array<i32>} : memref<32x4xf32, #tpu.memory_space<vmem>>, vector<32x4xf32>,
    %83 = vector.extract_strided_slice %66 {offsets = [0, 4, 0], sizes = [4, 8, 4], strides = [1, 1, 1]} : vector<4x12x4xbf16> to vector<4x8x4xbf16>
    %84 = vector.shape_cast %83 : vector<4x8x4xbf16> to vector<32x4xbf16>
    %c0_67 = arith.constant 0 : index
    %c0_68 = arith.constant 0 : index
    %85 = vector.load %arg11[%c0_67, %c0_68] : memref<32x4xf32, #tpu.memory_space<vmem>>, vector<32x4xf32>
    %c8 = arith.constant 8 : index
    %c0_69 = arith.constant 0 : index
    %c0_70 = arith.constant 0 : index
    %86 = vector.load %arg5[%c8, %c0_69, %c0_70] : memref<9x4x4xbf16, #tpu.memory_space<vmem>>, vector<1x4x4xbf16>
    %87 = vector.shape_cast %86 : vector<1x4x4xbf16> to vector<4x4xbf16>
    %cst_71 = arith.constant dense<0.000000e+00> : vector<32x4xf32>
    %88 = tpu.matmul %84, %87, %cst_71 {dimension_numbers = #tpu.dot_dimension_numbers<[1], [0], [0], [1], [0, 0, 1, 1], [], []>} : vector<32x4xbf16>, vector<4x4xbf16>, vector<32x4xf32> -> vector<32x4xf32>
    %89 = arith.addf %85, %88 : vector<32x4xf32>
    %c0_72 = arith.constant 0 : index
    %c0_73 = arith.constant 0 : index
    %90 = vector.load %arg11[%c0_72, %c0_73] : memref<32x4xf32, #tpu.memory_space<vmem>>, vector<32x4xf32>
    tpu.vector_store %arg11[%c0_72, %c0_73], %89 {strides = array<i32>} : memref<32x4xf32, #tpu.memory_space<vmem>>, vector<32x4xf32>,
    %c0_74 = arith.constant 0 : index
    %c0_75 = arith.constant 0 : index
    %91 = vector.load %arg11[%c0_74, %c0_75] : memref<32x4xf32, #tpu.memory_space<vmem>>, vector<32x4xf32>
    %c0_76 = arith.constant 0 : index
    %c0_77 = arith.constant 0 : index
    %92 = vector.load %arg6[%c0_76, %c0_77] : memref<1x4xf32, #tpu.memory_space<vmem>>, vector<1x4xf32>
    %93 = vector.broadcast %92 : vector<1x4xf32> to vector<32x4xf32>
    %94 = arith.addf %91, %93 : vector<32x4xf32>
    %cst_78 = arith.constant 0.000000e+00 : f32
    %95 = vector.broadcast %cst_78 : f32 to vector<32x4xf32>
    %96 = arith.maximumf %94, %95 : vector<32x4xf32>
    %97 = arith.truncf %96 : vector<32x4xf32> to vector<32x4xbf16>
    %c0_79 = arith.constant 0 : index
    %c0_80 = arith.constant 0 : index
    %98 = vector.load %arg7[%c0_79, %c0_80] : memref<4x16xbf16, #tpu.memory_space<vmem>>, vector<4x16xbf16>
    %cst_81 = arith.constant dense<0.000000e+00> : vector<32x16xf32>
    %99 = tpu.matmul %97, %98, %cst_81 {dimension_numbers = #tpu.dot_dimension_numbers<[1], [0], [0], [1], [0, 0, 1, 1], [], []>} : vector<32x4xbf16>, vector<4x16xbf16>, vector<32x16xf32> -> vector<32x16xf32>
    %c0_82 = arith.constant 0 : index
    %c0_83 = arith.constant 0 : index
    %100 = vector.load %arg8[%c0_82, %c0_83] : memref<1x16xf32, #tpu.memory_space<vmem>>, vector<1x16xf32>
    %101 = vector.broadcast %100 : vector<1x16xf32> to vector<32x16xf32>
    %102 = arith.addf %99, %101 : vector<32x16xf32>
    %c0_84 = arith.constant 0 : index
    %103 = arith.index_cast %4 : i32 to index
    %c0_85 = arith.constant 0 : index
    %c0_86 = arith.constant 0 : index
    %104 = vector.load %arg2[%c0_84, %103, %c0_85, %c0_86] : memref<1x8x8x16xbf16, #tpu.memory_space<vmem>>, vector<1x4x8x16xbf16>
    %105 = vector.shape_cast %104 : vector<1x4x8x16xbf16> to vector<32x16xbf16>
    %106 = arith.extf %105 : vector<32x16xbf16> to vector<32x16xf32>
    %107 = arith.addf %102, %106 : vector<32x16xf32>
    %cst_87 = arith.constant 0.000000e+00 : f32
    %108 = vector.broadcast %cst_87 : f32 to vector<32x16xf32>
    %109 = arith.maximumf %107, %108 : vector<32x16xf32>
    %110 = vector.shape_cast %109 : vector<32x16xf32> to vector<1x4x8x16xf32>
    %111 = arith.truncf %110 : vector<1x4x8x16xf32> to vector<1x4x8x16xbf16>
    %c0_88 = arith.constant 0 : index
    %c0_89 = arith.constant 0 : index
    %c0_90 = arith.constant 0 : index
    %c0_91 = arith.constant 0 : index
    %112 = vector.load %arg9[%c0_88, %c0_89, %c0_90, %c0_91] : memref<1x4x8x16xbf16, #tpu.memory_space<vmem>>, vector<1x4x8x16xbf16>
    tpu.vector_store %arg9[%c0_88, %c0_89, %c0_90, %c0_91], %111 {strides = array<i32>} : memref<1x4x8x16xbf16, #tpu.memory_space<vmem>>, vector<1x4x8x16xbf16>,
    return
  }
  func.func @transform_0(%arg0: i32, %arg1: i32) -> (i32, i32, i32, i32) {
    %c0_i32 = arith.constant 0 : i32
    %c0_i32_0 = arith.constant 0 : i32
    %c0_i32_1 = arith.constant 0 : i32
    %c0_i32_2 = arith.constant 0 : i32
    return %arg0, %c0_i32, %c0_i32_0, %c0_i32_1 : i32, i32, i32, i32
  }
  func.func @transform_1(%arg0: i32, %arg1: i32) -> (i32, i32) {
    %c0_i32 = arith.constant 0 : i32
    %c0_i32_0 = arith.constant 0 : i32
    %c0_i32_1 = arith.constant 0 : i32
    return %c0_i32, %c0_i32_0 : i32, i32
  }
  func.func @transform_2(%arg0: i32, %arg1: i32) -> (i32, i32) {
    %c0_i32 = arith.constant 0 : i32
    %c0_i32_0 = arith.constant 0 : i32
    %c0_i32_1 = arith.constant 0 : i32
    return %c0_i32, %c0_i32_0 : i32, i32
  }
  func.func @transform_3(%arg0: i32, %arg1: i32) -> (i32, i32, i32) {
    %c0_i32 = arith.constant 0 : i32
    %c0_i32_0 = arith.constant 0 : i32
    %c0_i32_1 = arith.constant 0 : i32
    %c0_i32_2 = arith.constant 0 : i32
    return %c0_i32, %c0_i32_0, %c0_i32_1 : i32, i32, i32
  }
  func.func @transform_4(%arg0: i32, %arg1: i32) -> (i32, i32) {
    %c0_i32 = arith.constant 0 : i32
    %c0_i32_0 = arith.constant 0 : i32
    %c0_i32_1 = arith.constant 0 : i32
    return %c0_i32, %c0_i32_0 : i32, i32
  }
  func.func @transform_5(%arg0: i32, %arg1: i32) -> (i32, i32) {
    %c0_i32 = arith.constant 0 : i32
    %c0_i32_0 = arith.constant 0 : i32
    %c0_i32_1 = arith.constant 0 : i32
    return %c0_i32, %c0_i32_0 : i32, i32
  }
  func.func @transform_6(%arg0: i32, %arg1: i32) -> (i32, i32) {
    %c0_i32 = arith.constant 0 : i32
    %c0_i32_0 = arith.constant 0 : i32
    %c0_i32_1 = arith.constant 0 : i32
    return %c0_i32, %c0_i32_0 : i32, i32
  }
  func.func @transform_7(%arg0: i32, %arg1: i32) -> (i32, i32, i32, i32) {
    %c0_i32 = arith.constant 0 : i32
    %c0_i32_0 = arith.constant 0 : i32
    %c0_i32_1 = arith.constant 0 : i32
    return %arg0, %arg1, %c0_i32, %c0_i32_0 : i32, i32, i32, i32
  }
}

</mosaic_0001>

<llo_original>
// kernel: resblock_forward.2
$region0: #{resblock_forward.2}
  #allocation0 [shape = 'u32[]', space=smem, size = 0x4, offset = 0x4, fixed_abs, tag = 'smem constant byte address 0x4 - core index']
  #allocation1 [shape = 'u32[72,128]{1,0:T(1,128)}', space=vmem, size = 0x9000, scoped, tag = 'internal scratch']
  #allocation2 [shape = 'f32[12,12,4]{2,1,0:T(8,128)}', space=vmem, size = 0x18000, scoped, tag = 'scratch operand']
  #allocation3 [shape = 'f32[32,4]{1,0:T(8,128)}', space=vmem, size = 0x4000, scoped, tag = 'scratch operand']
  %s0 = inlined_call_operand.vmem [shape: bf16[2,8,8,8], index: 0, kind: input, shape index: {}]
  %s1 = inlined_call_operand.vmem [shape: bf16[8,4], index: 1, kind: input, shape index: {}]
  %s2 = inlined_call_operand.vmem [shape: f32[1,4], index: 2, kind: input, shape index: {}]
  %s3 = inlined_call_operand.vmem [shape: bf16[9,4,4], index: 3, kind: input, shape index: {}]
  %s4 = inlined_call_operand.vmem [shape: f32[1,4], index: 4, kind: input, shape index: {}]
  %s5 = inlined_call_operand.vmem [shape: bf16[4,16], index: 5, kind: input, shape index: {}]
  %s6 = inlined_call_operand.vmem [shape: f32[1,16], index: 6, kind: input, shape index: {}]
  %s7 = inlined_call_operand.vmem [shape: bf16[8,16], index: 7, kind: input, shape index: {}]
  %s8 = inlined_call_operand.vmem [shape: f32[1,16], index: 8, kind: input, shape index: {}]
  %s9 = inlined_call_operand.vmem [shape: bf16[2,8,8,16], index: 9, kind: output, shape index: {}]
  %s10 = sld [smem:[#allocation0]]
  $region73: #{resblock_forward.2} parent=0
    _
  %s12 = ssub.s32 1, %s10
  %s13 = scalar_select 0, %s12, %s10
  loop: start=0, step=1, limit=6
  $region2: #{resblock_forward.2} parent=0 // loop_pre_header
    _
  $region3: #{resblock_forward.2} parent=0 // loop_header
    %s15 = sphi 0, %s19
    %p16 = scmp.ge.s32.totalorder %s15, 6
    %s22 = sphi 0, %s34
    %s23 = sphi 0, %s30
    %s24 = sphi 0, %s22
    %s25 = sphi 0, %s23
    %s26 = sphi 0, %s24
    %s27 = sphi 0, %s25
    %s37 = sphi 0, %s39
    %s40 = sphi 0, %s37
    %s41 = sphi 0, %s40
    %s57 = sphi 0, %s41
    %s61 = sphi 0, %s61
    %s63 = sphi 0, %s61
    %s64 = sphi 0, %s63
    %s78 = sphi 0, %s64
    %s82 = sphi 0, %s82
    %s84 = sphi 0, %s82
    %s85 = sphi 0, %s84
    %s99 = sphi 0, %s85
    %s103 = sphi 0, %s103
    %s105 = sphi 0, %s103
    %s106 = sphi 0, %s105
    %s120 = sphi 0, %s106
    %s124 = sphi 0, %s124
    %s126 = sphi 0, %s124
    %s127 = sphi 0, %s126
    %s141 = sphi 0, %s127
    %s145 = sphi 0, %s145
    %s147 = sphi 0, %s145
    %s148 = sphi 0, %s147
    %s162 = sphi 0, %s148
    %s166 = sphi 0, %s166
    %s168 = sphi 0, %s166
    %s169 = sphi 0, %s168
    %s183 = sphi 0, %s169
    %s187 = sphi 0, %s187
    %s189 = sphi 0, %s187
    %s190 = sphi 0, %s189
    %s204 = sphi 0, %s190
    %s208 = sphi 0, %s208
    %s210 = sphi 0, %s208
    %s211 = sphi 0, %s210
    %s225 = sphi 0, %s211
    %s233 = sphi 0, %s235
    %s236 = sphi 0, %s233
    %s237 = sphi 0, %s236
    %s253 = sphi 0, %s237
  $region4: #{resblock_forward.2} parent=0 // loop_header_branch
    %18 = sbr.rel (%p16) target = $region8
  $region5: #{resblock_forward.2} parent=0 // loop_body
    %s20 = ssub.s32 %s15, 1
    %s21 = ssub.s32 %s15, 2
    %s28 = sadd.s32 1, %s23
    %p29 = scmp.ge.s32.totalorder %s28, 2
    %s30 = scalar_select %p29, 0, %s28
    %s31 = sadd.s32 1, %s22
    %s32 = scalar_select %p29, %s31, %s22
    %p33 = scmp.ge.s32.totalorder %s32, 2
    %s34 = scalar_select %p33, 0, %s32
    %s35 = ssub.s32 %s22, %s34
    %p36 = scmp.eq.s32.totalorder %s35, 0
    %s38 = sadd.s32 %s37, 1
    %s39 = scalar_select %p36, %s37, %s38
    %p42 = pneg %p36
    %p43 = scmp.eq.s32.totalorder %s15, 3
    %p44 = por %p42, %p43
    %p45 = scmp.ne.s32.totalorder %s37, %s40
    %p46 = scmp.eq.s32.totalorder %s15, 0
    %p47 = por %p45, %p46
    %p48 = scmp.ne.s32.totalorder %s37, %s40
    %p49 = scmp.eq.s32.totalorder %s20, 3
    %p50 = por %p48, %p49
    %p51 = scmp.ne.s32.totalorder %s40, %s41
    %p52 = scmp.eq.s32.totalorder %s20, 0
    %p53 = por %p51, %p52
    %p54 = scmp.ne.s32.totalorder %s40, %s41
    %p55 = scmp.eq.s32.totalorder %s21, 3
    %p56 = por %p54, %p55
    %p58 = scmp.ne.s32.totalorder %s41, %s57
    %p59 = scmp.eq.s32.totalorder %s21, 0
    %p60 = por %p58, %p59
    %s62 = sadd.s32 %s61, 1
    %p65 = scmp.eq.s32.totalorder %s15, 3
    %p66 = scmp.ne.s32.totalorder %s61, %s63
    %p67 = scmp.eq.s32.totalorder %s15, 0
    %p68 = por %p66, %p67
    %p69 = scmp.ne.s32.totalorder %s61, %s63
    %p70 = scmp.eq.s32.totalorder %s20, 3
    %p71 = por %p69, %p70
    %p72 = scmp.ne.s32.totalorder %s63, %s64
    %p73 = scmp.eq.s32.totalorder %s20, 0
    %p74 = por %p72, %p73
    %p75 = scmp.ne.s32.totalorder %s63, %s64
    %p76 = scmp.eq.s32.totalorder %s21, 3
    %p77 = por %p75, %p76
    %p79 = scmp.ne.s32.totalorder %s64, %s78
    %p80 = scmp.eq.s32.totalorder %s21, 0
    %p81 = por %p79, %p80
    %s83 = sadd.s32 %s82, 1
    %p86 = scmp.eq.s32.totalorder %s15, 3
    %p87 = scmp.ne.s32.totalorder %s82, %s84
    %p88 = scmp.eq.s32.totalorder %s15, 0
    %p89 = por %p87, %p88
    %p90 = scmp.ne.s32.totalorder %s82, %s84
    %p91 = scmp.eq.s32.totalorder %s20, 3
    %p92 = por %p90, %p91
    %p93 = scmp.ne.s32.totalorder %s84, %s85
    %p94 = scmp.eq.s32.totalorder %s20, 0
    %p95 = por %p93, %p94
    %p96 = scmp.ne.s32.totalorder %s84, %s85
    %p97 = scmp.eq.s32.totalorder %s21, 3
    %p98 = por %p96, %p97
    %p100 = scmp.ne.s32.totalorder %s85, %s99
    %p101 = scmp.eq.s32.totalorder %s21, 0
    %p102 = por %p100, %p101
    %s104 = sadd.s32 %s103, 1
    %p107 = scmp.eq.s32.totalorder %s15, 3
    %p108 = scmp.ne.s32.totalorder %s103, %s105
    %p109 = scmp.eq.s32.totalorder %s15, 0
    %p110 = por %p108, %p109
    %p111 = scmp.ne.s32.totalorder %s103, %s105
    %p112 = scmp.eq.s32.totalorder %s20, 3
    %p113 = por %p111, %p112
    %p114 = scmp.ne.s32.totalorder %s105, %s106
    %p115 = scmp.eq.s32.totalorder %s20, 0
    %p116 = por %p114, %p115
    %p117 = scmp.ne.s32.totalorder %s105, %s106
    %p118 = scmp.eq.s32.totalorder %s21, 3
    %p119 = por %p117, %p118
    %p121 = scmp.ne.s32.totalorder %s106, %s120
    %p122 = scmp.eq.s32.totalorder %s21, 0
    %p123 = por %p121, %p122
    %s125 = sadd.s32 %s124, 1
    %p128 = scmp.eq.s32.totalorder %s15, 3
    %p129 = scmp.ne.s32.totalorder %s124, %s126
    %p130 = scmp.eq.s32.totalorder %s15, 0
    %p131 = por %p129, %p130
    %p132 = scmp.ne.s32.totalorder %s124, %s126
    %p133 = scmp.eq.s32.totalorder %s20, 3
    %p134 = por %p132, %p133
    %p135 = scmp.ne.s32.totalorder %s126, %s127
    %p136 = scmp.eq.s32.totalorder %s20, 0
    %p137 = por %p135, %p136
    %p138 = scmp.ne.s32.totalorder %s126, %s127
    %p139 = scmp.eq.s32.totalorder %s21, 3
    %p140 = por %p138, %p139
    %p142 = scmp.ne.s32.totalorder %s127, %s141
    %p143 = scmp.eq.s32.totalorder %s21, 0
    %p144 = por %p142, %p143
    %s146 = sadd.s32 %s145, 1
    %p149 = scmp.eq.s32.totalorder %s15, 3
    %p150 = scmp.ne.s32.totalorder %s145, %s147
    %p151 = scmp.eq.s32.totalorder %s15, 0
    %p152 = por %p150, %p151
    %p153 = scmp.ne.s32.totalorder %s145, %s147
    %p154 = scmp.eq.s32.totalorder %s20, 3
    %p155 = por %p153, %p154
    %p156 = scmp.ne.s32.totalorder %s147, %s148
    %p157 = scmp.eq.s32.totalorder %s20, 0
    %p158 = por %p156, %p157
    %p159 = scmp.ne.s32.totalorder %s147, %s148
    %p160 = scmp.eq.s32.totalorder %s21, 3
    %p161 = por %p159, %p160
    %p163 = scmp.ne.s32.totalorder %s148, %s162
    %p164 = scmp.eq.s32.totalorder %s21, 0
    %p165 = por %p163, %p164
    %s167 = sadd.s32 %s166, 1
    %p170 = scmp.eq.s32.totalorder %s15, 3
    %p171 = scmp.ne.s32.totalorder %s166, %s168
    %p172 = scmp.eq.s32.totalorder %s15, 0
    %p173 = por %p171, %p172
    %p174 = scmp.ne.s32.totalorder %s166, %s168
    %p175 = scmp.eq.s32.totalorder %s20, 3
    %p176 = por %p174, %p175
    %p177 = scmp.ne.s32.totalorder %s168, %s169
    %p178 = scmp.eq.s32.totalorder %s20, 0
    %p179 = por %p177, %p178
    %p180 = scmp.ne.s32.totalorder %s168, %s169
    %p181 = scmp.eq.s32.totalorder %s21, 3
    %p182 = por %p180, %p181
    %p184 = scmp.ne.s32.totalorder %s169, %s183
    %p185 = scmp.eq.s32.totalorder %s21, 0
    %p186 = por %p184, %p185
    %s188 = sadd.s32 %s187, 1
    %p191 = scmp.eq.s32.totalorder %s15, 3
    %p192 = scmp.ne.s32.totalorder %s187, %s189
    %p193 = scmp.eq.s32.totalorder %s15, 0
    %p194 = por %p192, %p193
    %p195 = scmp.ne.s32.totalorder %s187, %s189
    %p196 = scmp.eq.s32.totalorder %s20, 3
    %p197 = por %p195, %p196
    %p198 = scmp.ne.s32.totalorder %s189, %s190
    %p199 = scmp.eq.s32.totalorder %s20, 0
    %p200 = por %p198, %p199
    %p201 = scmp.ne.s32.totalorder %s189, %s190
    %p202 = scmp.eq.s32.totalorder %s21, 3
    %p203 = por %p201, %p202
    %p205 = scmp.ne.s32.totalorder %s190, %s204
    %p206 = scmp.eq.s32.totalorder %s21, 0
    %p207 = por %p205, %p206
    %s209 = sadd.s32 %s208, 1
    %p212 = scmp.eq.s32.totalorder %s15, 3
    %p213 = scmp.ne.s32.totalorder %s208, %s210
    %p214 = scmp.eq.s32.totalorder %s15, 0
    %p215 = por %p213, %p214
    %p216 = scmp.ne.s32.totalorder %s208, %s210
    %p217 = scmp.eq.s32.totalorder %s20, 3
    %p218 = por %p216, %p217
    %p219 = scmp.ne.s32.totalorder %s210, %s211
    %p220 = scmp.eq.s32.totalorder %s20, 0
    %p221 = por %p219, %p220
    %p222 = scmp.ne.s32.totalorder %s210, %s211
    %p223 = scmp.eq.s32.totalorder %s21, 3
    %p224 = por %p222, %p223
    %p226 = scmp.ne.s32.totalorder %s211, %s225
    %p227 = scmp.eq.s32.totalorder %s21, 0
    %p228 = por %p226, %p227
    %s229 = ssub.s32 %s22, %s34
    %s230 = ssub.s32 %s23, %s30
    %s231 = sor.u32 %s229, %s230
    %p232 = scmp.eq.s32.totalorder %s231, 0
    %s234 = sadd.s32 %s233, 1
    %s235 = scalar_select %p232, %s233, %s234
    %p238 = pneg %p232
    %p239 = scmp.eq.s32.totalorder %s15, 3
    %p240 = por %p238, %p239
    %p241 = scmp.ne.s32.totalorder %s233, %s236
    %p242 = scmp.eq.s32.totalorder %s15, 0
    %p243 = por %p241, %p242
    %p244 = scmp.ne.s32.totalorder %s233, %s236
    %p245 = scmp.eq.s32.totalorder %s20, 3
    %p246 = por %p244, %p245
    %p247 = scmp.ne.s32.totalorder %s236, %s237
    %p248 = scmp.eq.s32.totalorder %s20, 0
    %p249 = por %p247, %p248
    %p250 = scmp.ne.s32.totalorder %s236, %s237
    %p251 = scmp.eq.s32.totalorder %s21, 3
    %p252 = por %p250, %p251
    %p254 = scmp.ne.s32.totalorder %s237, %s253
    %p255 = scmp.eq.s32.totalorder %s21, 0
    %p256 = por %p254, %p255
    %p257 = scmp.le.s32.totalorder 1, %s15
    %p258 = scmp.lt.s32.totalorder %s15, 5
    %p259 = pnand %p257, %p258
    %p260 = pneg %p259
    // Predicated region
    $region9: #{resblock_forward.2} parent=5 // pred_check
      _
    $region10: #{resblock_forward.2} parent=5 // pred_check_branch
      %262 = sbr.rel (%p259) target = $region12
    $region11: #{resblock_forward.2} parent=5 // pred_region
      %s263 = ssub.s32 %s15, 1
      // Predicated region
      $region13: #{resblock_forward.2} parent=11 // pred_check
        %p264 = pneg %p74
      $region14: #{resblock_forward.2} parent=11 // pred_check_branch
        %266 = sbr.rel (%p264) target = $region16
      $region15: #{resblock_forward.2} parent=11 // pred_region
        _
      $region16: #{resblock_forward.2} parent=11 // pred_fallthru
        _
      // Predicated region
      $region17: #{resblock_forward.2} parent=11 // pred_check
        %p267 = pneg %p95
      $region18: #{resblock_forward.2} parent=11 // pred_check_branch
        %269 = sbr.rel (%p267) target = $region20
      $region19: #{resblock_forward.2} parent=11 // pred_region
        _
      $region20: #{resblock_forward.2} parent=11 // pred_fallthru
        _
      // Predicated region
      $region21: #{resblock_forward.2} parent=11 // pred_check
        %p270 = pneg %p116
      $region22: #{resblock_forward.2} parent=11 // pred_check_branch
        %272 = sbr.rel (%p270) target = $region24
      $region23: #{resblock_forward.2} parent=11 // pred_region
        _
      $region24: #{resblock_forward.2} parent=11 // pred_fallthru
        _
      // Predicated region
      $region25: #{resblock_forward.2} parent=11 // pred_check
        %p273 = pneg %p137
      $region26: #{resblock_forward.2} parent=11 // pred_check_branch
        %275 = sbr.rel (%p273) target = $region28
      $region27: #{resblock_forward.2} parent=11 // pred_region
        _
      $region28: #{resblock_forward.2} parent=11 // pred_fallthru
        _
      // Predicated region
      $region29: #{resblock_forward.2} parent=11 // pred_check
        %p276 = pneg %p158
      $region30: #{resblock_forward.2} parent=11 // pred_check_branch
        %278 = sbr.rel (%p276) target = $region32
      $region31: #{resblock_forward.2} parent=11 // pred_region
        _
      $region32: #{resblock_forward.2} parent=11 // pred_fallthru
        _
      // Predicated region
      $region33: #{resblock_forward.2} parent=11 // pred_check
        %p279 = pneg %p179
      $region34: #{resblock_forward.2} parent=11 // pred_check_branch
        %281 = sbr.rel (%p279) target = $region36
      $region35: #{resblock_forward.2} parent=11 // pred_region
        _
      $region36: #{resblock_forward.2} parent=11 // pred_fallthru
        _
      // Predicated region
      $region37: #{resblock_forward.2} parent=11 // pred_check
        %p282 = pneg %p200
      $region38: #{resblock_forward.2} parent=11 // pred_check_branch
        %284 = sbr.rel (%p282) target = $region40
      $region39: #{resblock_forward.2} parent=11 // pred_region
        _
      $region40: #{resblock_forward.2} parent=11 // pred_fallthru
        _
      // Predicated region
      $region41: #{resblock_forward.2} parent=11 // pred_check
        %p285 = pneg %p221
      $region42: #{resblock_forward.2} parent=11 // pred_check_branch
        %287 = sbr.rel (%p285) target = $region44
      $region43: #{resblock_forward.2} parent=11 // pred_region
        _
      $region44: #{resblock_forward.2} parent=11 // pred_fallthru
        _
    $region12: #{resblock_forward.2} parent=5 // pred_fallthru
      _
    %p288 = scmp.lt.s32.totalorder %s15, 4
    // Predicated region
    $region45: #{resblock_forward.2} parent=5 // pred_check
      %p289 = pneg %p288
    $region46: #{resblock_forward.2} parent=5 // pred_check_branch
      %291 = sbr.rel (%p289) target = $region48
    $region47: #{resblock_forward.2} parent=5 // pred_region
      // Predicated region
      $region49: #{resblock_forward.2} parent=47 // pred_check
        %p292 = pneg %p47
      $region50: #{resblock_forward.2} parent=47 // pred_check_branch
        %294 = sbr.rel (%p292) target = $region52
      $region51: #{resblock_forward.2} parent=47 // pred_region
        %p295 = scmp.lt.s32.totalorder %s22, 1
        %s296 = scalar_select %p295, %s22, 1
        %s297 = smul.addr %s296, 8
        %s298 = smul.addr %s297, 4
        %s299 = scalar_lea.vmem %s0, %s298
      $region52: #{resblock_forward.2} parent=47 // pred_fallthru
        _
    $region48: #{resblock_forward.2} parent=5 // pred_fallthru
      _
    %p300 = scmp.le.s32.totalorder 1, %s15
    %p301 = scmp.lt.s32.totalorder %s15, 5
    %p302 = pnand %p300, %p301
    %p303 = pneg %p302
    // Predicated region
    $region53: #{resblock_forward.2} parent=5 // pred_check
      _
    $region54: #{resblock_forward.2} parent=5 // pred_check_branch
      %305 = sbr.rel (%p302) target = $region56
    $region55: #{resblock_forward.2} parent=5 // pred_region
      %s306 = ssub.s32 %s15, 1
      %p307 = scmp.lt.s32.totalorder %s24, 1
      %s308 = scalar_select %p307, %s24, 1
      %s309 = smul.addr %s308, 8
      %s310 = smul.addr %s309, 4
      %s311 = scalar_lea.vmem %s0, %s310
      %p312 = pneg %p53
      %p313 = pneg %p50
      %p314 = pneg %p74
      %p315 = pneg %p71
      %p316 = pneg %p95
      %p317 = pneg %p92
      %p318 = pneg %p116
      %p319 = pneg %p113
      %p320 = pneg %p137
      %p321 = pneg %p134
      %p322 = pneg %p158
      %p323 = pneg %p155
      %p324 = pneg %p179
      %p325 = pneg %p176
      %p326 = pneg %p200
      %p327 = pneg %p197
      %p328 = pneg %p221
      %p329 = pneg %p218
      %p330 = pneg %p249
      %p331 = pneg %p246
      %s332 = smul.u32 4, %s25
      %p333 = scmp.lt.s32.totalorder %s24, 1
      %s334 = scalar_select %p333, %s24, 1
      %p335 = scmp.lt.s32.totalorder %s332, 7
      %s336 = scalar_select %p335, %s332, 7
      %s337 = smul.addr %s334, 8
      %s338 = sadd.s32 %s336, %s337
      %s339 = smul.addr %s338, 4
      %s340 = scalar_lea.vmem %s9, %s339
      %p341 = scmp.lt.s32.totalorder %s24, 1
      %s342 = scalar_select %p341, %s24, 1
      %s343 = smul.addr %s342, 8
      %s344 = smul.addr %s343, 4
      %s345 = scalar_lea.vmem %s0, %s344
      %s346 = smul.u32 4, %s25
      %p347 = scmp.lt.s32.totalorder %s24, 1
      %s348 = scalar_select %p347, %s24, 1
      %p349 = scmp.lt.s32.totalorder %s346, 7
      %s350 = scalar_select %p349, %s346, 7
      %s351 = smul.addr %s348, 8
      %s352 = sadd.s32 %s350, %s351
      %s353 = smul.addr %s352, 4
      %s354 = scalar_lea.vmem %s9, %s353
      %s355 = smul.u32 4, %s25
      %p357 = scmp.eq.s32.totalorder %s25, 0
      // Predicated region
      $region57: #{resblock_forward.2} parent=55 // pred_check
        %p358 = pneg %p357
      $region58: #{resblock_forward.2} parent=55 // pred_check_branch
        %360 = sbr.rel (%p358) target = $region60
      $region59: #{resblock_forward.2} parent=55 // pred_region
        %v361 = vld [vmem:[%s345] sm:$0xf]
        %v362 = vld [vmem:[%s345 + $0x4] sm:$0xf]
        %v363 = vld [vmem:[%s345 + $0x8] sm:$0xf]
        %v364 = vld [vmem:[%s345 + $0xc] sm:$0xf]
        %v365 = vld [vmem:[%s345 + $0x10] sm:$0xf]
        %v366 = vld [vmem:[%s345 + $0x14] sm:$0xf]
        %v367 = vld [vmem:[%s345 + $0x18] sm:$0xf]
        %v368 = vld [vmem:[%s345 + $0x1c] sm:$0xf]
        %v369 = vld [vmem:[%s1] sm:$0xf]
        %v370 = vld [vmem:[%s2] sm:$0x1]
        %v372 = vperm.slane %v370, 0
        %v382 = vunpack.c.l.b16 %v361
        %v383 = vunpack.c.l.b16 %v362
        %v384 = vunpack.c.l.b16 %v363
        %v385 = vunpack.c.l.b16 %v364
        %v386 = vunpack.c.l.b16 %v365
        %v387 = vunpack.c.l.b16 %v366
        %v388 = vunpack.c.l.b16 %v367
        %v389 = vunpack.c.l.b16 %v368
        %v390 = vpack.c.b16 %v383, %v382
        %v391 = vpack.c.b16 %v385, %v384
        %v392 = vpack.c.b16 %v387, %v386
        %v393 = vpack.c.b16 %v389, %v388
        %vm394 = vcmask 64512
        %v396 = vsel %vm394, %v390, 0
        %v399 = vsel %vm394, %v391, 0
        %v402 = vsel %vm394, %v392, 0
        %v405 = vsel %vm394, %v393, 0
        %vm407 = vcmask 1043456
        %v409 = vsel %vm407, %v369, 0
        %411 = vmatpush.bf16.msra.mxu0 0
        %412 = vmatpush.bf16.msra.mxu0 0
        %413 = vmatpush.bf16.msra.mxu0 0
        %414 = vmatpush.bf16.msra.mxu0 0
        %415 = vmatpush.bf16.msra.mxu0 0
        %416 = vmatpush.bf16.msra.mxu0 0
        %417 = vmatpush.bf16.msra.mxu0 0
        %418 = vmatpush.bf16.msra.mxu0 %v409
        %419 = vmatmul.bf16.gmra.mxu0 %v396
        %v420 = vpop.f32.mrf.mxu0
        %v421 = vadd.f32 %v372, %v420
        %v422 = vpop.f32.mrf.mxu0
        %v423 = vadd.f32 %v372, %v422
        %424 = vmatmul.bf16.gmra.mxu0 %v399
        %v425 = vpop.f32.mrf.mxu0
        %v426 = vadd.f32 %v372, %v425
        %v427 = vpop.f32.mrf.mxu0
        %v428 = vadd.f32 %v372, %v427
        %429 = vmatmul.bf16.gmra.mxu0 %v402
        %v430 = vpop.f32.mrf.mxu0
        %v431 = vadd.f32 %v372, %v430
        %v432 = vpop.f32.mrf.mxu0
        %v433 = vadd.f32 %v372, %v432
        %434 = vmatmul.bf16.gmra.mxu0 %v405
        %v435 = vpop.f32.mrf.mxu0
        %v436 = vadd.f32 %v372, %v435
        %v437 = vpop.f32.mrf.mxu0
        %v438 = vadd.f32 %v372, %v437
        %439 = vdwg.mxu0
        %v440 = vmax.f32 %v421, 0.0
        %v441 = vmax.f32 %v423, 0.0
        %v442 = vmax.f32 %v426, 0.0
        %v443 = vmax.f32 %v428, 0.0
        %v444 = vmax.f32 %v431, 0.0
        %v445 = vmax.f32 %v433, 0.0
        %v446 = vmax.f32 %v436, 0.0
        %v447 = vmax.f32 %v438, 0.0
        %vm448 = vcmask 31744
        %449 = vst.msk [vmem:[#allocation2] sm:$0xff] %vm448, 0.0
        %vm450 = vcmask 27648
        %451 = vst.msk [vmem:[#allocation2 + $0x8] sm:$0xf] %vm450, 0.0
        %452 = vst.msk [vmem:[#allocation2 + $0x10] sm:$0xff] %vm448, 0.0
        %453 = vst.msk [vmem:[#allocation2 + $0x18] sm:$0xf] %vm450, 0.0
        %454 = vst.msk [vmem:[#allocation2 + $0x20] sm:$0xff] %vm448, 0.0
        %455 = vst.msk [vmem:[#allocation2 + $0x28] sm:$0xf] %vm450, 0.0
        %456 = vst.msk [vmem:[#allocation2 + $0x30] sm:$0xff] %vm448, 0.0
        %457 = vst.msk [vmem:[#allocation2 + $0x38] sm:$0xf] %vm450, 0.0
        %458 = vst.msk [vmem:[#allocation2 + $0x40] sm:$0xff] %vm448, 0.0
        %459 = vst.msk [vmem:[#allocation2 + $0x48] sm:$0xf] %vm450, 0.0
        %460 = vst.msk [vmem:[#allocation2 + $0x50] sm:$0xff] %vm448, 0.0
        %461 = vst.msk [vmem:[#allocation2 + $0x58] sm:$0xf] %vm450, 0.0
        %462 = vst.msk [vmem:[#allocation2 + $0x60] sm:$0xff] %vm448, 0.0
        %463 = vst.msk [vmem:[#allocation2 + $0x68] sm:$0xf] %vm450, 0.0
        %464 = vst.msk [vmem:[#allocation2 + $0x70] sm:$0xff] %vm448, 0.0
        %465 = vst.msk [vmem:[#allocation2 + $0x78] sm:$0xf] %vm450, 0.0
        %466 = vst.msk [vmem:[#allocation2 + $0x80] sm:$0xff] %vm448, 0.0
        %467 = vst.msk [vmem:[#allocation2 + $0x88] sm:$0xf] %vm450, 0.0
        %468 = vst.msk [vmem:[#allocation2 + $0x90] sm:$0xff] %vm448, 0.0
        %469 = vst.msk [vmem:[#allocation2 + $0x98] sm:$0xf] %vm450, 0.0
        %470 = vst.msk [vmem:[#allocation2 + $0xa0] sm:$0xff] %vm448, 0.0
        %471 = vst.msk [vmem:[#allocation2 + $0xa8] sm:$0xf] %vm450, 0.0
        %472 = vst.msk [vmem:[#allocation2 + $0xb0] sm:$0xff] %vm448, 0.0
        %473 = vst.msk [vmem:[#allocation2 + $0xb8] sm:$0xf] %vm450, 0.0
        %s474 = scalar_lea.vmem [#allocation2], 32
        %475 = vst.msk [vmem:[%s474 + $0x2] sm:$0xff] %vm448, %v440
        %476 = vst.msk [vmem:[%s474 + $0x12] sm:$0xff] %vm448, %v441
        %477 = vst.msk [vmem:[%s474 + $0x22] sm:$0xff] %vm448, %v442
        %478 = vst.msk [vmem:[%s474 + $0x32] sm:$0xff] %vm448, %v443
        %479 = vst.msk [vmem:[%s474 + $0x42] sm:$0xff] %vm448, %v444
        %480 = vst.msk [vmem:[%s474 + $0x52] sm:$0xff] %vm448, %v445
        %481 = vst.msk [vmem:[%s474 + $0x62] sm:$0xff] %vm448, %v446
        %482 = vst.msk [vmem:[%s474 + $0x72] sm:$0xff] %vm448, %v447
      $region60: #{resblock_forward.2} parent=55 // pred_fallthru
        _
      %s483 = smul.u32 %s25, 4
      %vm484 = vcmask 31744
      %485 = vst.msk [vmem:[#allocation3] sm:$0xff] %vm484, 0.0
      %486 = vst.msk [vmem:[#allocation3 + $0x8] sm:$0xff] %vm484, 0.0
      %487 = vst.msk [vmem:[#allocation3 + $0x10] sm:$0xff] %vm484, 0.0
      %488 = vst.msk [vmem:[#allocation3 + $0x18] sm:$0xff] %vm484, 0.0
      %s489 = smul.u32 %s483, 16
      %s490 = scalar_lea.vmem [#allocation2], %s489
      %v491 = vld [vmem:[%s490] sm:$0xff]
      %v492 = vld [vmem:[%s490 + $0x8] sm:$0xf]
      %v493 = vld [vmem:[%s490 + $0x10] sm:$0xff]
      %v494 = vld [vmem:[%s490 + $0x18] sm:$0xf]
      %v495 = vld [vmem:[%s490 + $0x20] sm:$0xff]
      %v496 = vld [vmem:[%s490 + $0x28] sm:$0xf]
      %v497 = vld [vmem:[%s490 + $0x30] sm:$0xff]
      %v498 = vld [vmem:[%s490 + $0x38] sm:$0xf]
      %v499 = vpack.c.bf16 %v491, %v491
      %v500 = vpack.c.bf16 %v492, %v492
      %v501 = vpack.c.bf16 %v493, %v493
      %v502 = vpack.c.bf16 %v494, %v494
      %v503 = vpack.c.bf16 %v495, %v495
      %v504 = vpack.c.bf16 %v496, %v496
      %v505 = vpack.c.bf16 %v497, %v497
      %v506 = vpack.c.bf16 %v498, %v498
      %v507 = vld [vmem:[#allocation3] sm:$0xff]
      %v508 = vld [vmem:[#allocation3 + $0x8] sm:$0xff]
      %v509 = vld [vmem:[#allocation3 + $0x10] sm:$0xff]
      %v510 = vld [vmem:[#allocation3 + $0x18] sm:$0xff]
      %v511 = vld [vmem:[%s3] sm:$0x3]
      %v516 = vunpack.c.l.b16 %v499
      %v517 = vunpack.c.l.b16 %v501
      %v518 = vunpack.c.l.b16 %v503
      %v519 = vunpack.c.l.b16 %v505
      %v520 = vpack.c.b16 %v517, %v516
      %v521 = vpack.c.b16 %v519, %v518
      %v523 = vsel %vm484, %v520, 0
      %v526 = vsel %vm484, %v521, 0
      %vm528 = vcmask 1041408
      %v530 = vsel %vm528, %v511, 0
      %532 = vmatpush.bf16.msra.mxu0 0
      %533 = vmatpush.bf16.msra.mxu0 0
      %534 = vmatpush.bf16.msra.mxu0 0
      %535 = vmatpush.bf16.msra.mxu0 0
      %536 = vmatpush.bf16.msra.mxu0 0
      %537 = vmatpush.bf16.msra.mxu0 0
      %538 = vmatpush.bf16.msra.mxu0 0
      %539 = vmatpush.bf16.msra.mxu0 %v530
      %540 = vmatmul.bf16.gmra.mxu0 %v523
      %v541 = vpop.f32.mrf.mxu0
      %v542 = vadd.f32 0.0, %v541
      %v543 = vpop.f32.mrf.mxu0
      %v544 = vadd.f32 0.0, %v543
      %545 = vmatmul.bf16.gmra.mxu0 %v526
      %v546 = vpop.f32.mrf.mxu0
      %v547 = vadd.f32 0.0, %v546
      %v548 = vpop.f32.mrf.mxu0
      %v549 = vadd.f32 0.0, %v548
      %550 = vdwg.mxu0
      %v551 = vadd.f32 %v507, %v542
      %v552 = vadd.f32 %v508, %v544
      %v553 = vadd.f32 %v509, %v547
      %v554 = vadd.f32 %v510, %v549
      %555 = vst.msk [vmem:[#allocation3] sm:$0xff] %vm484, %v551
      %556 = vst.msk [vmem:[#allocation3 + $0x8] sm:$0xff] %vm484, %v552
      %557 = vst.msk [vmem:[#allocation3 + $0x10] sm:$0xff] %vm484, %v553
      %558 = vst.msk [vmem:[#allocation3 + $0x18] sm:$0xff] %vm484, %v554
      %vm563 = vcmask 1042432
      %vm564 = vcmask 1046532
      %vm565 = vmor %vm563, %vm564
      %v566 = vrot.slane %v499, 5
      %v567 = vrot.slane %v566, 4
      %v568 = vrot.slane %v500, 5
      %v569 = vsel %vm565, %v567, %v568
      %v570 = vrot.slane %v501, 5
      %v571 = vrot.slane %v570, 4
      %v572 = vrot.slane %v502, 5
      %v573 = vsel %vm565, %v571, %v572
      %v574 = vrot.slane %v503, 5
      %v575 = vrot.slane %v574, 4
      %v576 = vrot.slane %v504, 5
      %v577 = vsel %vm565, %v575, %v576
      %v578 = vrot.slane %v505, 5
      %v579 = vrot.slane %v578, 4
      %v580 = vrot.slane %v506, 5
      %v581 = vsel %vm565, %v579, %v580
      %v582 = vld [vmem:[#allocation3] sm:$0xff]
      %v583 = vld [vmem:[#allocation3 + $0x8] sm:$0xff]
      %v584 = vld [vmem:[#allocation3 + $0x10] sm:$0xff]
      %v585 = vld [vmem:[#allocation3 + $0x18] sm:$0xff]
      %s586 = scalar_lea.vmem %s3, 2
      %v587 = vld [vmem:[%s586] sm:$0x3]
      %v588 = vunpack.c.l.b16 %v569
      %v589 = vunpack.c.l.b16 %v573
      %v590 = vunpack.c.l.b16 %v577
      %v591 = vunpack.c.l.b16 %v581
      %v592 = vpack.c.b16 %v589, %v588
      %v593 = vpack.c.b16 %v591, %v590
      %v595 = vsel %vm484, %v592, 0
      %v598 = vsel %vm484, %v593, 0
      %v601 = vsel %vm528, %v587, 0
      %603 = vmatpush.bf16.msra.mxu0 0
      %604 = vmatpush.bf16.msra.mxu0 0
      %605 = vmatpush.bf16.msra.mxu0 0
      %606 = vmatpush.bf16.msra.mxu0 0
      %607 = vmatpush.bf16.msra.mxu0 0
      %608 = vmatpush.bf16.msra.mxu0 0
      %609 = vmatpush.bf16.msra.mxu0 0
      %610 = vmatpush.bf16.msra.mxu0 %v601
      %611 = vmatmul.bf16.gmra.mxu0 %v595
      %v612 = vpop.f32.mrf.mxu0
      %v613 = vadd.f32 0.0, %v612
      %v614 = vpop.f32.mrf.mxu0
      %v615 = vadd.f32 0.0, %v614
      %616 = vmatmul.bf16.gmra.mxu0 %v598
      %v617 = vpop.f32.mrf.mxu0
      %v618 = vadd.f32 0.0, %v617
      %v619 = vpop.f32.mrf.mxu0
      %v620 = vadd.f32 0.0, %v619
      %621 = vdwg.mxu0
      %v622 = vadd.f32 %v582, %v613
      %v623 = vadd.f32 %v583, %v615
      %v624 = vadd.f32 %v584, %v618
      %v625 = vadd.f32 %v585, %v620
      %626 = vst.msk [vmem:[#allocation3] sm:$0xff] %vm484, %v622
      %627 = vst.msk [vmem:[#allocation3 + $0x8] sm:$0xff] %vm484, %v623
      %628 = vst.msk [vmem:[#allocation3 + $0x10] sm:$0xff] %vm484, %v624
      %629 = vst.msk [vmem:[#allocation3 + $0x18] sm:$0xff] %vm484, %v625
      %vm630 = vcmask 1041408
      %vm631 = vcmask 1045508
      %vm632 = vmor %vm630, %vm631
      %v633 = vrot.slane %v499, 6
      %v634 = vrot.slane %v633, 4
      %v635 = vrot.slane %v500, 6
      %v636 = vsel %vm632, %v634, %v635
      %v637 = vrot.slane %v501, 6
      %v638 = vrot.slane %v637, 4
      %v639 = vrot.slane %v502, 6
      %v640 = vsel %vm632, %v638, %v639
      %v641 = vrot.slane %v503, 6
      %v642 = vrot.slane %v641, 4
      %v643 = vrot.slane %v504, 6
      %v644 = vsel %vm632, %v642, %v643
      %v645 = vrot.slane %v505, 6
      %v646 = vrot.slane %v645, 4
      %v647 = vrot.slane %v506, 6
      %v648 = vsel %vm632, %v646, %v647
      %v649 = vld [vmem:[#allocation3] sm:$0xff]
      %v650 = vld [vmem:[#allocation3 + $0x8] sm:$0xff]
      %v651 = vld [vmem:[#allocation3 + $0x10] sm:$0xff]
      %v652 = vld [vmem:[#allocation3 + $0x18] sm:$0xff]
      %s653 = scalar_lea.vmem %s3, 4
      %v654 = vld [vmem:[%s653] sm:$0x3]
      %v655 = vunpack.c.l.b16 %v636
      %v656 = vunpack.c.l.b16 %v640
      %v657 = vunpack.c.l.b16 %v644
      %v658 = vunpack.c.l.b16 %v648
      %v659 = vpack.c.b16 %v656, %v655
      %v660 = vpack.c.b16 %v658, %v657
      %v662 = vsel %vm484, %v659, 0
      %v665 = vsel %vm484, %v660, 0
      %v668 = vsel %vm528, %v654, 0
      %670 = vmatpush.bf16.msra.mxu0 0
      %671 = vmatpush.bf16.msra.mxu0 0
      %672 = vmatpush.bf16.msra.mxu0 0
      %673 = vmatpush.bf16.msra.mxu0 0
      %674 = vmatpush.bf16.msra.mxu0 0
      %675 = vmatpush.bf16.msra.mxu0 0
      %676 = vmatpush.bf16.msra.mxu0 0
      %677 = vmatpush.bf16.msra.mxu0 %v668
      %678 = vmatmul.bf16.gmra.mxu0 %v662
      %v679 = vpop.f32.mrf.mxu0
      %v680 = vadd.f32 0.0, %v679
      %v681 = vpop.f32.mrf.mxu0
      %v682 = vadd.f32 0.0, %v681
      %683 = vmatmul.bf16.gmra.mxu0 %v665
      %v684 = vpop.f32.mrf.mxu0
      %v685 = vadd.f32 0.0, %v684
      %v686 = vpop.f32.mrf.mxu0
      %v687 = vadd.f32 0.0, %v686
      %688 = vdwg.mxu0
      %v689 = vadd.f32 %v649, %v680
      %v690 = vadd.f32 %v650, %v682
      %v691 = vadd.f32 %v651, %v685
      %v692 = vadd.f32 %v652, %v687
      %693 = vst.msk [vmem:[#allocation3] sm:$0xff] %vm484, %v689
      %694 = vst.msk [vmem:[#allocation3 + $0x8] sm:$0xff] %vm484, %v690
      %695 = vst.msk [vmem:[#allocation3 + $0x10] sm:$0xff] %vm484, %v691
      %696 = vst.msk [vmem:[#allocation3 + $0x18] sm:$0xff] %vm484, %v692
      %s697 = sadd.s32 %s483, 2
      %s698 = smul.u32 %s697, 16
      %s699 = scalar_lea.vmem [#allocation2], %s698
      %v700 = vld [vmem:[%s699] sm:$0xff]
      %v701 = vld [vmem:[%s699 + $0x8] sm:$0xf]
      %v702 = vld [vmem:[%s699 + $0x10] sm:$0xff]
      %v703 = vld [vmem:[%s699 + $0x18] sm:$0xf]
      %v704 = vld [vmem:[%s699 + $0x20] sm:$0xff]
      %v705 = vld [vmem:[%s699 + $0x28] sm:$0xf]
      %v706 = vld [vmem:[%s699 + $0x30] sm:$0xff]
      %v707 = vld [vmem:[%s699 + $0x38] sm:$0xf]
      %v708 = vpack.c.bf16 %v700, %v700
      %v709 = vpack.c.bf16 %v701, %v701
      %v710 = vpack.c.bf16 %v702, %v702
      %v711 = vpack.c.bf16 %v703, %v703
      %v712 = vpack.c.bf16 %v704, %v704
      %v713 = vpack.c.bf16 %v705, %v705
      %v714 = vpack.c.bf16 %v706, %v706
      %v715 = vpack.c.bf16 %v707, %v707
      %v716 = vld [vmem:[#allocation3] sm:$0xff]
      %v717 = vld [vmem:[#allocation3 + $0x8] sm:$0xff]
      %v718 = vld [vmem:[#allocation3 + $0x10] sm:$0xff]
      %v719 = vld [vmem:[#allocation3 + $0x18] sm:$0xff]
      %s720 = scalar_lea.vmem %s3, 6
      %v721 = vld [vmem:[%s720] sm:$0x3]
      %v726 = vunpack.c.l.b16 %v708
      %v727 = vunpack.c.l.b16 %v710
      %v728 = vunpack.c.l.b16 %v712
      %v729 = vunpack.c.l.b16 %v714
      %v730 = vpack.c.b16 %v727, %v726
      %v731 = vpack.c.b16 %v729, %v728
      %v733 = vsel %vm484, %v730, 0
      %v736 = vsel %vm484, %v731, 0
      %v739 = vsel %vm528, %v721, 0
      %741 = vmatpush.bf16.msra.mxu0 0
      %742 = vmatpush.bf16.msra.mxu0 0
      %743 = vmatpush.bf16.msra.mxu0 0
      %744 = vmatpush.bf16.msra.mxu0 0
      %745 = vmatpush.bf16.msra.mxu0 0
      %746 = vmatpush.bf16.msra.mxu0 0
      %747 = vmatpush.bf16.msra.mxu0 0
      %748 = vmatpush.bf16.msra.mxu0 %v739
      %749 = vmatmul.bf16.gmra.mxu0 %v733
      %v750 = vpop.f32.mrf.mxu0
      %v751 = vadd.f32 0.0, %v750
      %v752 = vpop.f32.mrf.mxu0
      %v753 = vadd.f32 0.0, %v752
      %754 = vmatmul.bf16.gmra.mxu0 %v736
      %v755 = vpop.f32.mrf.mxu0
      %v756 = vadd.f32 0.0, %v755
      %v757 = vpop.f32.mrf.mxu0
      %v758 = vadd.f32 0.0, %v757
      %759 = vdwg.mxu0
      %v760 = vadd.f32 %v716, %v751
      %v761 = vadd.f32 %v717, %v753
      %v762 = vadd.f32 %v718, %v756
      %v763 = vadd.f32 %v719, %v758
      %764 = vst.msk [vmem:[#allocation3] sm:$0xff] %vm484, %v760
      %765 = vst.msk [vmem:[#allocation3 + $0x8] sm:$0xff] %vm484, %v761
      %766 = vst.msk [vmem:[#allocation3 + $0x10] sm:$0xff] %vm484, %v762
      %767 = vst.msk [vmem:[#allocation3 + $0x18] sm:$0xff] %vm484, %v763
      %v772 = vrot.slane %v708, 5
      %v773 = vrot.slane %v772, 4
      %v774 = vrot.slane %v709, 5
      %v775 = vsel %vm565, %v773, %v774
      %v776 = vrot.slane %v710, 5
      %v777 = vrot.slane %v776, 4
      %v778 = vrot.slane %v711, 5
      %v779 = vsel %vm565, %v777, %v778
      %v780 = vrot.slane %v712, 5
      %v781 = vrot.slane %v780, 4
      %v782 = vrot.slane %v713, 5
      %v783 = vsel %vm565, %v781, %v782
      %v784 = vrot.slane %v714, 5
      %v785 = vrot.slane %v784, 4
      %v786 = vrot.slane %v715, 5
      %v787 = vsel %vm565, %v785, %v786
      %v788 = vld [vmem:[#allocation3] sm:$0xff]
      %v789 = vld [vmem:[#allocation3 + $0x8] sm:$0xff]
      %v790 = vld [vmem:[#allocation3 + $0x10] sm:$0xff]
      %v791 = vld [vmem:[#allocation3 + $0x18] sm:$0xff]
      %s792 = scalar_lea.vmem %s3, 8
      %v793 = vld [vmem:[%s792] sm:$0x3]
      %v794 = vunpack.c.l.b16 %v775
      %v795 = vunpack.c.l.b16 %v779
      %v796 = vunpack.c.l.b16 %v783
      %v797 = vunpack.c.l.b16 %v787
      %v798 = vpack.c.b16 %v795, %v794
      %v799 = vpack.c.b16 %v797, %v796
      %v801 = vsel %vm484, %v798, 0
      %v804 = vsel %vm484, %v799, 0
      %v807 = vsel %vm528, %v793, 0
      %809 = vmatpush.bf16.msra.mxu0 0
      %810 = vmatpush.bf16.msra.mxu0 0
      %811 = vmatpush.bf16.msra.mxu0 0
      %812 = vmatpush.bf16.msra.mxu0 0
      %813 = vmatpush.bf16.msra.mxu0 0
      %814 = vmatpush.bf16.msra.mxu0 0
      %815 = vmatpush.bf16.msra.mxu0 0
      %816 = vmatpush.bf16.msra.mxu0 %v807
      %817 = vmatmul.bf16.gmra.mxu0 %v801
      %v818 = vpop.f32.mrf.mxu0
      %v819 = vadd.f32 0.0, %v818
      %v820 = vpop.f32.mrf.mxu0
      %v821 = vadd.f32 0.0, %v820
      %822 = vmatmul.bf16.gmra.mxu0 %v804
      %v823 = vpop.f32.mrf.mxu0
      %v824 = vadd.f32 0.0, %v823
      %v825 = vpop.f32.mrf.mxu0
      %v826 = vadd.f32 0.0, %v825
      %827 = vdwg.mxu0
      %v828 = vadd.f32 %v788, %v819
      %v829 = vadd.f32 %v789, %v821
      %v830 = vadd.f32 %v790, %v824
      %v831 = vadd.f32 %v791, %v826
      %832 = vst.msk [vmem:[#allocation3] sm:$0xff] %vm484, %v828
      %833 = vst.msk [vmem:[#allocation3 + $0x8] sm:$0xff] %vm484, %v829
      %834 = vst.msk [vmem:[#allocation3 + $0x10] sm:$0xff] %vm484, %v830
      %835 = vst.msk [vmem:[#allocation3 + $0x18] sm:$0xff] %vm484, %v831
      %v836 = vrot.slane %v708, 6
      %v837 = vrot.slane %v836, 4
      %v838 = vrot.slane %v709, 6
      %v839 = vsel %vm632, %v837, %v838
      %v840 = vrot.slane %v710, 6
      %v841 = vrot.slane %v840, 4
      %v842 = vrot.slane %v711, 6
      %v843 = vsel %vm632, %v841, %v842
      %v844 = vrot.slane %v712, 6
      %v845 = vrot.slane %v844, 4
      %v846 = vrot.slane %v713, 6
      %v847 = vsel %vm632, %v845, %v846
      %v848 = vrot.slane %v714, 6
      %v849 = vrot.slane %v848, 4
      %v850 = vrot.slane %v715, 6
      %v851 = vsel %vm632, %v849, %v850
      %v852 = vld [vmem:[#allocation3] sm:$0xff]
      %v853 = vld [vmem:[#allocation3 + $0x8] sm:$0xff]
      %v854 = vld [vmem:[#allocation3 + $0x10] sm:$0xff]
      %v855 = vld [vmem:[#allocation3 + $0x18] sm:$0xff]
      %s856 = scalar_lea.vmem %s3, 10
      %v857 = vld [vmem:[%s856] sm:$0x3]
      %v858 = vunpack.c.l.b16 %v839
      %v859 = vunpack.c.l.b16 %v843
      %v860 = vunpack.c.l.b16 %v847
      %v861 = vunpack.c.l.b16 %v851
      %v862 = vpack.c.b16 %v859, %v858
      %v863 = vpack.c.b16 %v861, %v860
      %v865 = vsel %vm484, %v862, 0
      %v868 = vsel %vm484, %v863, 0
      %v871 = vsel %vm528, %v857, 0
      %873 = vmatpush.bf16.msra.mxu0 0
      %874 = vmatpush.bf16.msra.mxu0 0
      %875 = vmatpush.bf16.msra.mxu0 0
      %876 = vmatpush.bf16.msra.mxu0 0
      %877 = vmatpush.bf16.msra.mxu0 0
      %878 = vmatpush.bf16.msra.mxu0 0
      %879 = vmatpush.bf16.msra.mxu0 0
      %880 = vmatpush.bf16.msra.mxu0 %v871
      %881 = vmatmul.bf16.gmra.mxu0 %v865
      %v882 = vpop.f32.mrf.mxu0
      %v883 = vadd.f32 0.0, %v882
      %v884 = vpop.f32.mrf.mxu0
      %v885 = vadd.f32 0.0, %v884
      %886 = vmatmul.bf16.gmra.mxu0 %v868
      %v887 = vpop.f32.mrf.mxu0
      %v888 = vadd.f32 0.0, %v887
      %v889 = vpop.f32.mrf.mxu0
      %v890 = vadd.f32 0.0, %v889
      %891 = vdwg.mxu0
      %v892 = vadd.f32 %v852, %v883
      %v893 = vadd.f32 %v853, %v885
      %v894 = vadd.f32 %v854, %v888
      %v895 = vadd.f32 %v855, %v890
      %896 = vst.msk [vmem:[#allocation3] sm:$0xff] %vm484, %v892
      %897 = vst.msk [vmem:[#allocation3 + $0x8] sm:$0xff] %vm484, %v893
      %898 = vst.msk [vmem:[#allocation3 + $0x10] sm:$0xff] %vm484, %v894
      %899 = vst.msk [vmem:[#allocation3 + $0x18] sm:$0xff] %vm484, %v895
      %s900 = sadd.s32 %s483, 4
      %s901 = smul.u32 %s900, 16
      %s902 = scalar_lea.vmem [#allocation2], %s901
      %v903 = vld [vmem:[%s902] sm:$0xff]
      %v904 = vld [vmem:[%s902 + $0x8] sm:$0xf]
      %v905 = vld [vmem:[%s902 + $0x10] sm:$0xff]
      %v906 = vld [vmem:[%s902 + $0x18] sm:$0xf]
      %v907 = vld [vmem:[%s902 + $0x20] sm:$0xff]
      %v908 = vld [vmem:[%s902 + $0x28] sm:$0xf]
      %v909 = vld [vmem:[%s902 + $0x30] sm:$0xff]
      %v910 = vld [vmem:[%s902 + $0x38] sm:$0xf]
      %v911 = vpack.c.bf16 %v903, %v903
      %v912 = vpack.c.bf16 %v904, %v904
      %v913 = vpack.c.bf16 %v905, %v905
      %v914 = vpack.c.bf16 %v906, %v906
      %v915 = vpack.c.bf16 %v907, %v907
      %v916 = vpack.c.bf16 %v908, %v908
      %v917 = vpack.c.bf16 %v909, %v909
      %v918 = vpack.c.bf16 %v910, %v910
      %v919 = vld [vmem:[#allocation3] sm:$0xff]
      %v920 = vld [vmem:[#allocation3 + $0x8] sm:$0xff]
      %v921 = vld [vmem:[#allocation3 + $0x10] sm:$0xff]
      %v922 = vld [vmem:[#allocation3 + $0x18] sm:$0xff]
      %s923 = scalar_lea.vmem %s3, 12
      %v924 = vld [vmem:[%s923] sm:$0x3]
      %v929 = vunpack.c.l.b16 %v911
      %v930 = vunpack.c.l.b16 %v913
      %v931 = vunpack.c.l.b16 %v915
      %v932 = vunpack.c.l.b16 %v917
      %v933 = vpack.c.b16 %v930, %v929
      %v934 = vpack.c.b16 %v932, %v931
      %v936 = vsel %vm484, %v933, 0
      %v939 = vsel %vm484, %v934, 0
      %v942 = vsel %vm528, %v924, 0
      %944 = vmatpush.bf16.msra.mxu0 0
      %945 = vmatpush.bf16.msra.mxu0 0
      %946 = vmatpush.bf16.msra.mxu0 0
      %947 = vmatpush.bf16.msra.mxu0 0
      %948 = vmatpush.bf16.msra.mxu0 0
      %949 = vmatpush.bf16.msra.mxu0 0
      %950 = vmatpush.bf16.msra.mxu0 0
      %951 = vmatpush.bf16.msra.mxu0 %v942
      %952 = vmatmul.bf16.gmra.mxu0 %v936
      %v953 = vpop.f32.mrf.mxu0
      %v954 = vadd.f32 0.0, %v953
      %v955 = vpop.f32.mrf.mxu0
      %v956 = vadd.f32 0.0, %v955
      %957 = vmatmul.bf16.gmra.mxu0 %v939
      %v958 = vpop.f32.mrf.mxu0
      %v959 = vadd.f32 0.0, %v958
      %v960 = vpop.f32.mrf.mxu0
      %v961 = vadd.f32 0.0, %v960
      %962 = vdwg.mxu0
      %v963 = vadd.f32 %v919, %v954
      %v964 = vadd.f32 %v920, %v956
      %v965 = vadd.f32 %v921, %v959
      %v966 = vadd.f32 %v922, %v961
      %967 = vst.msk [vmem:[#allocation3] sm:$0xff] %vm484, %v963
      %968 = vst.msk [vmem:[#allocation3 + $0x8] sm:$0xff] %vm484, %v964
      %969 = vst.msk [vmem:[#allocation3 + $0x10] sm:$0xff] %vm484, %v965
      %970 = vst.msk [vmem:[#allocation3 + $0x18] sm:$0xff] %vm484, %v966
      %v975 = vrot.slane %v911, 5
      %v976 = vrot.slane %v975, 4
      %v977 = vrot.slane %v912, 5
      %v978 = vsel %vm565, %v976, %v977
      %v979 = vrot.slane %v913, 5
      %v980 = vrot.slane %v979, 4
      %v981 = vrot.slane %v914, 5
      %v982 = vsel %vm565, %v980, %v981
      %v983 = vrot.slane %v915, 5
      %v984 = vrot.slane %v983, 4
      %v985 = vrot.slane %v916, 5
      %v986 = vsel %vm565, %v984, %v985
      %v987 = vrot.slane %v917, 5
      %v988 = vrot.slane %v987, 4
      %v989 = vrot.slane %v918, 5
      %v990 = vsel %vm565, %v988, %v989
      %v991 = vld [vmem:[#allocation3] sm:$0xff]
      %v992 = vld [vmem:[#allocation3 + $0x8] sm:$0xff]
      %v993 = vld [vmem:[#allocation3 + $0x10] sm:$0xff]
      %v994 = vld [vmem:[#allocation3 + $0x18] sm:$0xff]
      %s995 = scalar_lea.vmem %s3, 14
      %v996 = vld [vmem:[%s995] sm:$0x3]
      %v997 = vunpack.c.l.b16 %v978
      %v998 = vunpack.c.l.b16 %v982
      %v999 = vunpack.c.l.b16 %v986
      %v1000 = vunpack.c.l.b16 %v990
      %v1001 = vpack.c.b16 %v998, %v997
      %v1002 = vpack.c.b16 %v1000, %v999
      %v1004 = vsel %vm484, %v1001, 0
      %v1007 = vsel %vm484, %v1002, 0
      %v1010 = vsel %vm528, %v996, 0
      %1012 = vmatpush.bf16.msra.mxu0 0
      %1013 = vmatpush.bf16.msra.mxu0 0
      %1014 = vmatpush.bf16.msra.mxu0 0
      %1015 = vmatpush.bf16.msra.mxu0 0
      %1016 = vmatpush.bf16.msra.mxu0 0
      %1017 = vmatpush.bf16.msra.mxu0 0
      %1018 = vmatpush.bf16.msra.mxu0 0
      %1019 = vmatpush.bf16.msra.mxu0 %v1010
      %1020 = vmatmul.bf16.gmra.mxu0 %v1004
      %v1021 = vpop.f32.mrf.mxu0
      %v1022 = vadd.f32 0.0, %v1021
      %v1023 = vpop.f32.mrf.mxu0
      %v1024 = vadd.f32 0.0, %v1023
      %1025 = vmatmul.bf16.gmra.mxu0 %v1007
      %v1026 = vpop.f32.mrf.mxu0
      %v1027 = vadd.f32 0.0, %v1026
      %v1028 = vpop.f32.mrf.mxu0
      %v1029 = vadd.f32 0.0, %v1028
      %1030 = vdwg.mxu0
      %v1031 = vadd.f32 %v991, %v1022
      %v1032 = vadd.f32 %v992, %v1024
      %v1033 = vadd.f32 %v993, %v1027
      %v1034 = vadd.f32 %v994, %v1029
      %1035 = vst.msk [vmem:[#allocation3] sm:$0xff] %vm484, %v1031
      %1036 = vst.msk [vmem:[#allocation3 + $0x8] sm:$0xff] %vm484, %v1032
      %1037 = vst.msk [vmem:[#allocation3 + $0x10] sm:$0xff] %vm484, %v1033
      %1038 = vst.msk [vmem:[#allocation3 + $0x18] sm:$0xff] %vm484, %v1034
      %v1039 = vrot.slane %v911, 6
      %v1040 = vrot.slane %v1039, 4
      %v1041 = vrot.slane %v912, 6
      %v1042 = vsel %vm632, %v1040, %v1041
      %v1043 = vrot.slane %v913, 6
      %v1044 = vrot.slane %v1043, 4
      %v1045 = vrot.slane %v914, 6
      %v1046 = vsel %vm632, %v1044, %v1045
      %v1047 = vrot.slane %v915, 6
      %v1048 = vrot.slane %v1047, 4
      %v1049 = vrot.slane %v916, 6
      %v1050 = vsel %vm632, %v1048, %v1049
      %v1051 = vrot.slane %v917, 6
      %v1052 = vrot.slane %v1051, 4
      %v1053 = vrot.slane %v918, 6
      %v1054 = vsel %vm632, %v1052, %v1053
      %v1055 = vld [vmem:[#allocation3] sm:$0xff]
      %v1056 = vld [vmem:[#allocation3 + $0x8] sm:$0xff]
      %v1057 = vld [vmem:[#allocation3 + $0x10] sm:$0xff]
      %v1058 = vld [vmem:[#allocation3 + $0x18] sm:$0xff]
      %s1059 = scalar_lea.vmem %s3, 16
      %v1060 = vld [vmem:[%s1059] sm:$0x3]
      %v1061 = vunpack.c.l.b16 %v1042
      %v1062 = vunpack.c.l.b16 %v1046
      %v1063 = vunpack.c.l.b16 %v1050
      %v1064 = vunpack.c.l.b16 %v1054
      %v1065 = vpack.c.b16 %v1062, %v1061
      %v1066 = vpack.c.b16 %v1064, %v1063
      %v1068 = vsel %vm484, %v1065, 0
      %v1071 = vsel %vm484, %v1066, 0
      %v1074 = vsel %vm528, %v1060, 0
      %1076 = vmatpush.bf16.msra.mxu0 0
      %1077 = vmatpush.bf16.msra.mxu0 0
      %1078 = vmatpush.bf16.msra.mxu0 0
      %1079 = vmatpush.bf16.msra.mxu0 0
      %1080 = vmatpush.bf16.msra.mxu0 0
      %1081 = vmatpush.bf16.msra.mxu0 0
      %1082 = vmatpush.bf16.msra.mxu0 0
      %1083 = vmatpush.bf16.msra.mxu0 %v1074
      %1084 = vmatmul.bf16.gmra.mxu0 %v1068
      %v1085 = vpop.f32.mrf.mxu0
      %v1086 = vadd.f32 0.0, %v1085
      %v1087 = vpop.f32.mrf.mxu0
      %v1088 = vadd.f32 0.0, %v1087
      %1089 = vmatmul.bf16.gmra.mxu0 %v1071
      %v1090 = vpop.f32.mrf.mxu0
      %v1091 = vadd.f32 0.0, %v1090
      %v1092 = vpop.f32.mrf.mxu0
      %v1093 = vadd.f32 0.0, %v1092
      %1094 = vdwg.mxu0
      %v1095 = vadd.f32 %v1055, %v1086
      %v1096 = vadd.f32 %v1056, %v1088
      %v1097 = vadd.f32 %v1057, %v1091
      %v1098 = vadd.f32 %v1058, %v1093
      %1099 = vst.msk [vmem:[#allocation3] sm:$0xff] %vm484, %v1095
      %1100 = vst.msk [vmem:[#allocation3 + $0x8] sm:$0xff] %vm484, %v1096
      %1101 = vst.msk [vmem:[#allocation3 + $0x10] sm:$0xff] %vm484, %v1097
      %1102 = vst.msk [vmem:[#allocation3 + $0x18] sm:$0xff] %vm484, %v1098
      %v1103 = vld [vmem:[#allocation3] sm:$0xff]
      %v1104 = vld [vmem:[#allocation3 + $0x8] sm:$0xff]
      %v1105 = vld [vmem:[#allocation3 + $0x10] sm:$0xff]
      %v1106 = vld [vmem:[#allocation3 + $0x18] sm:$0xff]
      %v1107 = vld [vmem:[%s4] sm:$0x1]
      %v1109 = vperm.slane %v1107, 0
      %v1111 = vadd.f32 %v1103, %v1109
      %v1112 = vadd.f32 %v1104, %v1109
      %v1113 = vadd.f32 %v1105, %v1109
      %v1114 = vadd.f32 %v1106, %v1109
      %v1115 = vmax.f32 %v1111, 0.0
      %v1116 = vmax.f32 %v1112, 0.0
      %v1117 = vmax.f32 %v1113, 0.0
      %v1118 = vmax.f32 %v1114, 0.0
      %v1119 = vpack.c.bf16 %v1116, %v1115
      %v1120 = vpack.c.bf16 %v1118, %v1117
      %v1121 = vld [vmem:[%s5] sm:$0x3]
      %v1122 = vld [vmem:[%s6] sm:$0x1]
      %v1124 = vperm.slane %v1122, 0
      %v1127 = vsel %vm484, %v1119, 0
      %v1130 = vsel %vm484, %v1120, 0
      %v1133 = vsel %vm528, %v1121, 0
      %1135 = vmatpush.bf16.msra.mxu0 0
      %1136 = vmatpush.bf16.msra.mxu0 0
      %1137 = vmatpush.bf16.msra.mxu0 0
      %1138 = vmatpush.bf16.msra.mxu0 0
      %1139 = vmatpush.bf16.msra.mxu0 0
      %1140 = vmatpush.bf16.msra.mxu0 0
      %1141 = vmatpush.bf16.msra.mxu0 0
      %1142 = vmatpush.bf16.msra.mxu0 %v1133
      %1143 = vmatmul.bf16.gmra.mxu0 %v1127
      %v1144 = vpop.f32.mrf.mxu0
      %v1145 = vadd.f32 %v1124, %v1144
      %v1146 = vpop.f32.mrf.mxu0
      %v1147 = vadd.f32 %v1124, %v1146
      %1148 = vmatmul.bf16.gmra.mxu0 %v1130
      %v1149 = vpop.f32.mrf.mxu0
      %v1150 = vadd.f32 %v1124, %v1149
      %v1151 = vpop.f32.mrf.mxu0
      %v1152 = vadd.f32 %v1124, %v1151
      %1153 = vdwg.mxu0
      %s1154 = smul.addr %s483, 4
      %s1155 = scalar_lea.vmem %s345, %s1154
      %v1156 = vld [vmem:[%s1155] sm:$0xf]
      %v1157 = vld [vmem:[%s1155 + $0x4] sm:$0xf]
      %v1158 = vld [vmem:[%s1155 + $0x8] sm:$0xf]
      %v1159 = vld [vmem:[%s1155 + $0xc] sm:$0xf]
      %v1160 = vld [vmem:[%s7] sm:$0xf]
      %v1161 = vld [vmem:[%s8] sm:$0x1]
      %v1163 = vperm.slane %v1161, 0
      %v1169 = vunpack.c.l.b16 %v1156
      %v1170 = vunpack.c.l.b16 %v1157
      %v1171 = vunpack.c.l.b16 %v1158
      %v1172 = vunpack.c.l.b16 %v1159
      %v1173 = vpack.c.b16 %v1170, %v1169
      %v1174 = vpack.c.b16 %v1172, %v1171
      %vm1175 = vcmask 64512
      %v1177 = vsel %vm1175, %v1173, 0
      %v1180 = vsel %vm1175, %v1174, 0
      %vm1182 = vcmask 1043456
      %v1184 = vsel %vm1182, %v1160, 0
      %1186 = vmatpush.bf16.msra.mxu0 0
      %1187 = vmatpush.bf16.msra.mxu0 0
      %1188 = vmatpush.bf16.msra.mxu0 0
      %1189 = vmatpush.bf16.msra.mxu0 0
      %1190 = vmatpush.bf16.msra.mxu0 0
      %1191 = vmatpush.bf16.msra.mxu0 0
      %1192 = vmatpush.bf16.msra.mxu0 0
      %1193 = vmatpush.bf16.msra.mxu0 %v1184
      %1194 = vmatmul.bf16.gmra.mxu0 %v1177
      %v1195 = vpop.f32.mrf.mxu0
      %v1196 = vadd.f32 %v1163, %v1195
      %v1197 = vpop.f32.mrf.mxu0
      %v1198 = vadd.f32 %v1163, %v1197
      %1199 = vmatmul.bf16.gmra.mxu0 %v1180
      %v1200 = vpop.f32.mrf.mxu0
      %v1201 = vadd.f32 %v1163, %v1200
      %v1202 = vpop.f32.mrf.mxu0
      %v1203 = vadd.f32 %v1163, %v1202
      %1204 = vdwg.mxu0
      %v1205 = vadd.f32 %v1145, %v1196
      %v1206 = vadd.f32 %v1147, %v1198
      %v1207 = vadd.f32 %v1150, %v1201
      %v1208 = vadd.f32 %v1152, %v1203
      %v1209 = vmax.f32 %v1205, 0.0
      %v1210 = vmax.f32 %v1206, 0.0
      %v1211 = vmax.f32 %v1207, 0.0
      %v1212 = vmax.f32 %v1208, 0.0
      %v1213 = vpack.c.bf16 %v1209, %v1209
      %v1214 = vpack.c.bf16 %v1210, %v1210
      %v1215 = vpack.c.bf16 %v1211, %v1211
      %v1216 = vpack.c.bf16 %v1212, %v1212
      %vm1217 = vcmask 125952
      %1218 = vst.msk [vmem:[%s354] sm:$0xf] %vm1217, %v1213
      %1219 = vst.msk [vmem:[%s354 + $0x4] sm:$0xf] %vm1217, %v1214
      %1220 = vst.msk [vmem:[%s354 + $0x8] sm:$0xf] %vm1217, %v1215
      %1221 = vst.msk [vmem:[%s354 + $0xc] sm:$0xf] %vm1217, %v1216
      %s1222 = smul.u32 4, %s25
      %p1223 = scmp.lt.s32.totalorder %s24, 1
      %s1224 = scalar_select %p1223, %s24, 1
      %p1225 = scmp.lt.s32.totalorder %s1222, 7
      %s1226 = scalar_select %p1225, %s1222, 7
      %s1227 = smul.addr %s1224, 8
      %s1228 = sadd.s32 %s1226, %s1227
      %s1229 = smul.addr %s1228, 4
      %s1230 = scalar_lea.vmem %s9, %s1229
      // Predicated region
      $region61: #{resblock_forward.2} parent=55 // pred_check
        %p1231 = pneg %p246
      $region62: #{resblock_forward.2} parent=55 // pred_check_branch
        %1233 = sbr.rel (%p1231) target = $region64
      $region63: #{resblock_forward.2} parent=55 // pred_region
        %s1234 = smul.u32 4, %s25
      $region64: #{resblock_forward.2} parent=55 // pred_fallthru
        _
    $region56: #{resblock_forward.2} parent=5 // pred_fallthru
      _
    %p1235 = scmp.le.s32.totalorder 2, %s15
    // Predicated region
    $region65: #{resblock_forward.2} parent=5 // pred_check
      %p1236 = pneg %p1235
    $region66: #{resblock_forward.2} parent=5 // pred_check_branch
      %1238 = sbr.rel (%p1236) target = $region68
    $region67: #{resblock_forward.2} parent=5 // pred_region
      %s1239 = ssub.s32 %s15, 2
      // Predicated region
      $region69: #{resblock_forward.2} parent=67 // pred_check
        %p1240 = pneg %p252
      $region70: #{resblock_forward.2} parent=67 // pred_check_branch
        %1242 = sbr.rel (%p1240) target = $region72
      $region71: #{resblock_forward.2} parent=67 // pred_region
        %s1243 = smul.u32 4, %s27
        %p1244 = scmp.lt.s32.totalorder %s26, 1
        %s1245 = scalar_select %p1244, %s26, 1
        %p1246 = scmp.lt.s32.totalorder %s1243, 7
        %s1247 = scalar_select %p1246, %s1243, 7
        %s1248 = smul.addr %s1245, 8
        %s1249 = sadd.s32 %s1247, %s1248
        %s1250 = smul.addr %s1249, 4
        %s1251 = scalar_lea.vmem %s9, %s1250
      $region72: #{resblock_forward.2} parent=67 // pred_fallthru
        _
    $region68: #{resblock_forward.2} parent=5 // pred_fallthru
      _
  $region6: #{resblock_forward.2} parent=0 // loop_footer
    %s19 = sadd.s32 1, %s15
  $region7: #{resblock_forward.2} parent=0 // loop_footer_branch
    %14 = sbr.rel target = $region3
  $region8: #{resblock_forward.2} parent=0 // loop_exit
    _

// kernel: resblock_forward.3
$region0: #{resblock_forward.3}
  #allocation0 [shape = 'u32[]', space=smem, size = 0x4, offset = 0x4, fixed_abs, tag = 'smem constant byte address 0x4 - core index']
  #allocation1 [shape = 'u32[72,128]{1,0:T(1,128)}', space=vmem, size = 0x9000, scoped, tag = 'internal scratch']
  #allocation2 [shape = 'f32[12,12,4]{2,1,0:T(8,128)}', space=vmem, size = 0x18000, scoped, tag = 'scratch operand']
  #allocation3 [shape = 'f32[32,4]{1,0:T(8,128)}', space=vmem, size = 0x4000, scoped, tag = 'scratch operand']
  %s0 = inlined_call_operand.vmem [shape: bf16[2,8,8,16], index: 0, kind: input, shape index: {}]
  %s1 = inlined_call_operand.vmem [shape: bf16[16,4], index: 1, kind: input, shape index: {}]
  %s2 = inlined_call_operand.vmem [shape: f32[1,4], index: 2, kind: input, shape index: {}]
  %s3 = inlined_call_operand.vmem [shape: bf16[9,4,4], index: 3, kind: input, shape index: {}]
  %s4 = inlined_call_operand.vmem [shape: f32[1,4], index: 4, kind: input, shape index: {}]
  %s5 = inlined_call_operand.vmem [shape: bf16[4,16], index: 5, kind: input, shape index: {}]
  %s6 = inlined_call_operand.vmem [shape: f32[1,16], index: 6, kind: input, shape index: {}]
  %s7 = inlined_call_operand.vmem [shape: bf16[2,8,8,16], index: 7, kind: output, shape index: {}]
  %s8 = sld [smem:[#allocation0]]
  $region65: #{resblock_forward.3} parent=0
    _
  %s10 = ssub.s32 1, %s8
  %s11 = scalar_select 0, %s10, %s8
  loop: start=0, step=1, limit=6
  $region2: #{resblock_forward.3} parent=0 // loop_pre_header
    _
  $region3: #{resblock_forward.3} parent=0 // loop_header
    %s13 = sphi 0, %s17
    %p14 = scmp.ge.s32.totalorder %s13, 6
    %s20 = sphi 0, %s32
    %s21 = sphi 0, %s28
    %s22 = sphi 0, %s20
    %s23 = sphi 0, %s21
    %s24 = sphi 0, %s22
    %s25 = sphi 0, %s23
    %s35 = sphi 0, %s37
    %s38 = sphi 0, %s35
    %s39 = sphi 0, %s38
    %s55 = sphi 0, %s39
    %s59 = sphi 0, %s59
    %s61 = sphi 0, %s59
    %s62 = sphi 0, %s61
    %s76 = sphi 0, %s62
    %s80 = sphi 0, %s80
    %s82 = sphi 0, %s80
    %s83 = sphi 0, %s82
    %s97 = sphi 0, %s83
    %s101 = sphi 0, %s101
    %s103 = sphi 0, %s101
    %s104 = sphi 0, %s103
    %s118 = sphi 0, %s104
    %s122 = sphi 0, %s122
    %s124 = sphi 0, %s122
    %s125 = sphi 0, %s124
    %s139 = sphi 0, %s125
    %s143 = sphi 0, %s143
    %s145 = sphi 0, %s143
    %s146 = sphi 0, %s145
    %s160 = sphi 0, %s146
    %s164 = sphi 0, %s164
    %s166 = sphi 0, %s164
    %s167 = sphi 0, %s166
    %s181 = sphi 0, %s167
    %s189 = sphi 0, %s191
    %s192 = sphi 0, %s189
    %s193 = sphi 0, %s192
    %s209 = sphi 0, %s193
  $region4: #{resblock_forward.3} parent=0 // loop_header_branch
    %16 = sbr.rel (%p14) target = $region8
  $region5: #{resblock_forward.3} parent=0 // loop_body
    %s18 = ssub.s32 %s13, 1
    %s19 = ssub.s32 %s13, 2
    %s26 = sadd.s32 1, %s21
    %p27 = scmp.ge.s32.totalorder %s26, 2
    %s28 = scalar_select %p27, 0, %s26
    %s29 = sadd.s32 1, %s20
    %s30 = scalar_select %p27, %s29, %s20
    %p31 = scmp.ge.s32.totalorder %s30, 2
    %s32 = scalar_select %p31, 0, %s30
    %s33 = ssub.s32 %s20, %s32
    %p34 = scmp.eq.s32.totalorder %s33, 0
    %s36 = sadd.s32 %s35, 1
    %s37 = scalar_select %p34, %s35, %s36
    %p40 = pneg %p34
    %p41 = scmp.eq.s32.totalorder %s13, 3
    %p42 = por %p40, %p41
    %p43 = scmp.ne.s32.totalorder %s35, %s38
    %p44 = scmp.eq.s32.totalorder %s13, 0
    %p45 = por %p43, %p44
    %p46 = scmp.ne.s32.totalorder %s35, %s38
    %p47 = scmp.eq.s32.totalorder %s18, 3
    %p48 = por %p46, %p47
    %p49 = scmp.ne.s32.totalorder %s38, %s39
    %p50 = scmp.eq.s32.totalorder %s18, 0
    %p51 = por %p49, %p50
    %p52 = scmp.ne.s32.totalorder %s38, %s39
    %p53 = scmp.eq.s32.totalorder %s19, 3
    %p54 = por %p52, %p53
    %p56 = scmp.ne.s32.totalorder %s39, %s55
    %p57 = scmp.eq.s32.totalorder %s19, 0
    %p58 = por %p56, %p57
    %s60 = sadd.s32 %s59, 1
    %p63 = scmp.eq.s32.totalorder %s13, 3
    %p64 = scmp.ne.s32.totalorder %s59, %s61
    %p65 = scmp.eq.s32.totalorder %s13, 0
    %p66 = por %p64, %p65
    %p67 = scmp.ne.s32.totalorder %s59, %s61
    %p68 = scmp.eq.s32.totalorder %s18, 3
    %p69 = por %p67, %p68
    %p70 = scmp.ne.s32.totalorder %s61, %s62
    %p71 = scmp.eq.s32.totalorder %s18, 0
    %p72 = por %p70, %p71
    %p73 = scmp.ne.s32.totalorder %s61, %s62
    %p74 = scmp.eq.s32.totalorder %s19, 3
    %p75 = por %p73, %p74
    %p77 = scmp.ne.s32.totalorder %s62, %s76
    %p78 = scmp.eq.s32.totalorder %s19, 0
    %p79 = por %p77, %p78
    %s81 = sadd.s32 %s80, 1
    %p84 = scmp.eq.s32.totalorder %s13, 3
    %p85 = scmp.ne.s32.totalorder %s80, %s82
    %p86 = scmp.eq.s32.totalorder %s13, 0
    %p87 = por %p85, %p86
    %p88 = scmp.ne.s32.totalorder %s80, %s82
    %p89 = scmp.eq.s32.totalorder %s18, 3
    %p90 = por %p88, %p89
    %p91 = scmp.ne.s32.totalorder %s82, %s83
    %p92 = scmp.eq.s32.totalorder %s18, 0
    %p93 = por %p91, %p92
    %p94 = scmp.ne.s32.totalorder %s82, %s83
    %p95 = scmp.eq.s32.totalorder %s19, 3
    %p96 = por %p94, %p95
    %p98 = scmp.ne.s32.totalorder %s83, %s97
    %p99 = scmp.eq.s32.totalorder %s19, 0
    %p100 = por %p98, %p99
    %s102 = sadd.s32 %s101, 1
    %p105 = scmp.eq.s32.totalorder %s13, 3
    %p106 = scmp.ne.s32.totalorder %s101, %s103
    %p107 = scmp.eq.s32.totalorder %s13, 0
    %p108 = por %p106, %p107
    %p109 = scmp.ne.s32.totalorder %s101, %s103
    %p110 = scmp.eq.s32.totalorder %s18, 3
    %p111 = por %p109, %p110
    %p112 = scmp.ne.s32.totalorder %s103, %s104
    %p113 = scmp.eq.s32.totalorder %s18, 0
    %p114 = por %p112, %p113
    %p115 = scmp.ne.s32.totalorder %s103, %s104
    %p116 = scmp.eq.s32.totalorder %s19, 3
    %p117 = por %p115, %p116
    %p119 = scmp.ne.s32.totalorder %s104, %s118
    %p120 = scmp.eq.s32.totalorder %s19, 0
    %p121 = por %p119, %p120
    %s123 = sadd.s32 %s122, 1
    %p126 = scmp.eq.s32.totalorder %s13, 3
    %p127 = scmp.ne.s32.totalorder %s122, %s124
    %p128 = scmp.eq.s32.totalorder %s13, 0
    %p129 = por %p127, %p128
    %p130 = scmp.ne.s32.totalorder %s122, %s124
    %p131 = scmp.eq.s32.totalorder %s18, 3
    %p132 = por %p130, %p131
    %p133 = scmp.ne.s32.totalorder %s124, %s125
    %p134 = scmp.eq.s32.totalorder %s18, 0
    %p135 = por %p133, %p134
    %p136 = scmp.ne.s32.totalorder %s124, %s125
    %p137 = scmp.eq.s32.totalorder %s19, 3
    %p138 = por %p136, %p137
    %p140 = scmp.ne.s32.totalorder %s125, %s139
    %p141 = scmp.eq.s32.totalorder %s19, 0
    %p142 = por %p140, %p141
    %s144 = sadd.s32 %s143, 1
    %p147 = scmp.eq.s32.totalorder %s13, 3
    %p148 = scmp.ne.s32.totalorder %s143, %s145
    %p149 = scmp.eq.s32.totalorder %s13, 0
    %p150 = por %p148, %p149
    %p151 = scmp.ne.s32.totalorder %s143, %s145
    %p152 = scmp.eq.s32.totalorder %s18, 3
    %p153 = por %p151, %p152
    %p154 = scmp.ne.s32.totalorder %s145, %s146
    %p155 = scmp.eq.s32.totalorder %s18, 0
    %p156 = por %p154, %p155
    %p157 = scmp.ne.s32.totalorder %s145, %s146
    %p158 = scmp.eq.s32.totalorder %s19, 3
    %p159 = por %p157, %p158
    %p161 = scmp.ne.s32.totalorder %s146, %s160
    %p162 = scmp.eq.s32.totalorder %s19, 0
    %p163 = por %p161, %p162
    %s165 = sadd.s32 %s164, 1
    %p168 = scmp.eq.s32.totalorder %s13, 3
    %p169 = scmp.ne.s32.totalorder %s164, %s166
    %p170 = scmp.eq.s32.totalorder %s13, 0
    %p171 = por %p169, %p170
    %p172 = scmp.ne.s32.totalorder %s164, %s166
    %p173 = scmp.eq.s32.totalorder %s18, 3
    %p174 = por %p172, %p173
    %p175 = scmp.ne.s32.totalorder %s166, %s167
    %p176 = scmp.eq.s32.totalorder %s18, 0
    %p177 = por %p175, %p176
    %p178 = scmp.ne.s32.totalorder %s166, %s167
    %p179 = scmp.eq.s32.totalorder %s19, 3
    %p180 = por %p178, %p179
    %p182 = scmp.ne.s32.totalorder %s167, %s181
    %p183 = scmp.eq.s32.totalorder %s19, 0
    %p184 = por %p182, %p183
    %s185 = ssub.s32 %s20, %s32
    %s186 = ssub.s32 %s21, %s28
    %s187 = sor.u32 %s185, %s186
    %p188 = scmp.eq.s32.totalorder %s187, 0
    %s190 = sadd.s32 %s189, 1
    %s191 = scalar_select %p188, %s189, %s190
    %p194 = pneg %p188
    %p195 = scmp.eq.s32.totalorder %s13, 3
    %p196 = por %p194, %p195
    %p197 = scmp.ne.s32.totalorder %s189, %s192
    %p198 = scmp.eq.s32.totalorder %s13, 0
    %p199 = por %p197, %p198
    %p200 = scmp.ne.s32.totalorder %s189, %s192
    %p201 = scmp.eq.s32.totalorder %s18, 3
    %p202 = por %p200, %p201
    %p203 = scmp.ne.s32.totalorder %s192, %s193
    %p204 = scmp.eq.s32.totalorder %s18, 0
    %p205 = por %p203, %p204
    %p206 = scmp.ne.s32.totalorder %s192, %s193
    %p207 = scmp.eq.s32.totalorder %s19, 3
    %p208 = por %p206, %p207
    %p210 = scmp.ne.s32.totalorder %s193, %s209
    %p211 = scmp.eq.s32.totalorder %s19, 0
    %p212 = por %p210, %p211
    %p213 = scmp.le.s32.totalorder 1, %s13
    %p214 = scmp.lt.s32.totalorder %s13, 5
    %p215 = pnand %p213, %p214
    %p216 = pneg %p215
    // Predicated region
    $region9: #{resblock_forward.3} parent=5 // pred_check
      _
    $region10: #{resblock_forward.3} parent=5 // pred_check_branch
      %218 = sbr.rel (%p215) target = $region12
    $region11: #{resblock_forward.3} parent=5 // pred_region
      %s219 = ssub.s32 %s13, 1
      // Predicated region
      $region13: #{resblock_forward.3} parent=11 // pred_check
        %p220 = pneg %p72
      $region14: #{resblock_forward.3} parent=11 // pred_check_branch
        %222 = sbr.rel (%p220) target = $region16
      $region15: #{resblock_forward.3} parent=11 // pred_region
        _
      $region16: #{resblock_forward.3} parent=11 // pred_fallthru
        _
      // Predicated region
      $region17: #{resblock_forward.3} parent=11 // pred_check
        %p223 = pneg %p93
      $region18: #{resblock_forward.3} parent=11 // pred_check_branch
        %225 = sbr.rel (%p223) target = $region20
      $region19: #{resblock_forward.3} parent=11 // pred_region
        _
      $region20: #{resblock_forward.3} parent=11 // pred_fallthru
        _
      // Predicated region
      $region21: #{resblock_forward.3} parent=11 // pred_check
        %p226 = pneg %p114
      $region22: #{resblock_forward.3} parent=11 // pred_check_branch
        %228 = sbr.rel (%p226) target = $region24
      $region23: #{resblock_forward.3} parent=11 // pred_region
        _
      $region24: #{resblock_forward.3} parent=11 // pred_fallthru
        _
      // Predicated region
      $region25: #{resblock_forward.3} parent=11 // pred_check
        %p229 = pneg %p135
      $region26: #{resblock_forward.3} parent=11 // pred_check_branch
        %231 = sbr.rel (%p229) target = $region28
      $region27: #{resblock_forward.3} parent=11 // pred_region
        _
      $region28: #{resblock_forward.3} parent=11 // pred_fallthru
        _
      // Predicated region
      $region29: #{resblock_forward.3} parent=11 // pred_check
        %p232 = pneg %p156
      $region30: #{resblock_forward.3} parent=11 // pred_check_branch
        %234 = sbr.rel (%p232) target = $region32
      $region31: #{resblock_forward.3} parent=11 // pred_region
        _
      $region32: #{resblock_forward.3} parent=11 // pred_fallthru
        _
      // Predicated region
      $region33: #{resblock_forward.3} parent=11 // pred_check
        %p235 = pneg %p177
      $region34: #{resblock_forward.3} parent=11 // pred_check_branch
        %237 = sbr.rel (%p235) target = $region36
      $region35: #{resblock_forward.3} parent=11 // pred_region
        _
      $region36: #{resblock_forward.3} parent=11 // pred_fallthru
        _
    $region12: #{resblock_forward.3} parent=5 // pred_fallthru
      _
    %p238 = scmp.lt.s32.totalorder %s13, 4
    // Predicated region
    $region37: #{resblock_forward.3} parent=5 // pred_check
      %p239 = pneg %p238
    $region38: #{resblock_forward.3} parent=5 // pred_check_branch
      %241 = sbr.rel (%p239) target = $region40
    $region39: #{resblock_forward.3} parent=5 // pred_region
      // Predicated region
      $region41: #{resblock_forward.3} parent=39 // pred_check
        %p242 = pneg %p45
      $region42: #{resblock_forward.3} parent=39 // pred_check_branch
        %244 = sbr.rel (%p242) target = $region44
      $region43: #{resblock_forward.3} parent=39 // pred_region
        %p245 = scmp.lt.s32.totalorder %s20, 1
        %s246 = scalar_select %p245, %s20, 1
        %s247 = smul.addr %s246, 8
        %s248 = smul.addr %s247, 4
        %s249 = scalar_lea.vmem %s0, %s248
      $region44: #{resblock_forward.3} parent=39 // pred_fallthru
        _
    $region40: #{resblock_forward.3} parent=5 // pred_fallthru
      _
    %p250 = scmp.le.s32.totalorder 1, %s13
    %p251 = scmp.lt.s32.totalorder %s13, 5
    %p252 = pnand %p250, %p251
    %p253 = pneg %p252
    // Predicated region
    $region45: #{resblock_forward.3} parent=5 // pred_check
      _
    $region46: #{resblock_forward.3} parent=5 // pred_check_branch
      %255 = sbr.rel (%p252) target = $region48
    $region47: #{resblock_forward.3} parent=5 // pred_region
      %s256 = ssub.s32 %s13, 1
      %p257 = scmp.lt.s32.totalorder %s22, 1
      %s258 = scalar_select %p257, %s22, 1
      %s259 = smul.addr %s258, 8
      %s260 = smul.addr %s259, 4
      %s261 = scalar_lea.vmem %s0, %s260
      %p262 = pneg %p51
      %p263 = pneg %p48
      %p264 = pneg %p72
      %p265 = pneg %p69
      %p266 = pneg %p93
      %p267 = pneg %p90
      %p268 = pneg %p114
      %p269 = pneg %p111
      %p270 = pneg %p135
      %p271 = pneg %p132
      %p272 = pneg %p156
      %p273 = pneg %p153
      %p274 = pneg %p177
      %p275 = pneg %p174
      %p276 = pneg %p205
      %p277 = pneg %p202
      %s278 = smul.u32 4, %s23
      %p279 = scmp.lt.s32.totalorder %s22, 1
      %s280 = scalar_select %p279, %s22, 1
      %p281 = scmp.lt.s32.totalorder %s278, 7
      %s282 = scalar_select %p281, %s278, 7
      %s283 = smul.addr %s280, 8
      %s284 = sadd.s32 %s282, %s283
      %s285 = smul.addr %s284, 4
      %s286 = scalar_lea.vmem %s7, %s285
      %p287 = scmp.lt.s32.totalorder %s22, 1
      %s288 = scalar_select %p287, %s22, 1
      %s289 = smul.addr %s288, 8
      %s290 = smul.addr %s289, 4
      %s291 = scalar_lea.vmem %s0, %s290
      %s292 = smul.u32 4, %s23
      %p293 = scmp.lt.s32.totalorder %s22, 1
      %s294 = scalar_select %p293, %s22, 1
      %p295 = scmp.lt.s32.totalorder %s292, 7
      %s296 = scalar_select %p295, %s292, 7
      %s297 = smul.addr %s294, 8
      %s298 = sadd.s32 %s296, %s297
      %s299 = smul.addr %s298, 4
      %s300 = scalar_lea.vmem %s7, %s299
      %s301 = smul.u32 4, %s23
      %p303 = scmp.eq.s32.totalorder %s23, 0
      // Predicated region
      $region49: #{resblock_forward.3} parent=47 // pred_check
        %p304 = pneg %p303
      $region50: #{resblock_forward.3} parent=47 // pred_check_branch
        %306 = sbr.rel (%p304) target = $region52
      $region51: #{resblock_forward.3} parent=47 // pred_region
        %v307 = vld [vmem:[%s291] sm:$0xf]
        %v308 = vld [vmem:[%s291 + $0x4] sm:$0xf]
        %v309 = vld [vmem:[%s291 + $0x8] sm:$0xf]
        %v310 = vld [vmem:[%s291 + $0xc] sm:$0xf]
        %v311 = vld [vmem:[%s291 + $0x10] sm:$0xf]
        %v312 = vld [vmem:[%s291 + $0x14] sm:$0xf]
        %v313 = vld [vmem:[%s291 + $0x18] sm:$0xf]
        %v314 = vld [vmem:[%s291 + $0x1c] sm:$0xf]
        %v315 = vld [vmem:[%s1] sm:$0xf]
        %v316 = vld [vmem:[%s1 + $0x4] sm:$0xf]
        %v317 = vld [vmem:[%s2] sm:$0x1]
        %v319 = vperm.slane %v317, 0
        %v329 = vunpack.c.l.b16 %v307
        %v330 = vunpack.c.l.b16 %v308
        %v331 = vunpack.c.l.b16 %v309
        %v332 = vunpack.c.l.b16 %v310
        %v333 = vunpack.c.l.b16 %v311
        %v334 = vunpack.c.l.b16 %v312
        %v335 = vunpack.c.l.b16 %v313
        %v336 = vunpack.c.l.b16 %v314
        %v337 = vpack.c.b16 %v330, %v329
        %v338 = vpack.c.b16 %v332, %v331
        %v339 = vpack.c.b16 %v334, %v333
        %v340 = vpack.c.b16 %v336, %v335
        %v343 = vunpack.c.l.b16 %v315
        %v344 = vunpack.c.l.b16 %v316
        %v345 = vpack.c.b16 %v344, %v343
        %vm347 = vcmask 130048
        %v349 = vsel %vm347, %v337, 0
        %v352 = vsel %vm347, %v338, 0
        %v355 = vsel %vm347, %v339, 0
        %v358 = vsel %vm347, %v340, 0
        %360 = vmatpush.bf16.msra.mxu0 0
        %361 = vmatpush.bf16.msra.mxu0 0
        %362 = vmatpush.bf16.msra.mxu0 0
        %363 = vmatpush.bf16.msra.mxu0 0
        %364 = vmatpush.bf16.msra.mxu0 0
        %365 = vmatpush.bf16.msra.mxu0 0
        %366 = vmatpush.bf16.msra.mxu0 0
        %367 = vmatpush.bf16.msra.mxu0 %v345
        %368 = vmatmul.bf16.gmra.mxu0 %v349
        %v369 = vpop.f32.mrf.mxu0
        %v370 = vadd.f32 %v319, %v369
        %v371 = vpop.f32.mrf.mxu0
        %v372 = vadd.f32 %v319, %v371
        %373 = vmatmul.bf16.gmra.mxu0 %v352
        %v374 = vpop.f32.mrf.mxu0
        %v375 = vadd.f32 %v319, %v374
        %v376 = vpop.f32.mrf.mxu0
        %v377 = vadd.f32 %v319, %v376
        %378 = vmatmul.bf16.gmra.mxu0 %v355
        %v379 = vpop.f32.mrf.mxu0
        %v380 = vadd.f32 %v319, %v379
        %v381 = vpop.f32.mrf.mxu0
        %v382 = vadd.f32 %v319, %v381
        %383 = vmatmul.bf16.gmra.mxu0 %v358
        %v384 = vpop.f32.mrf.mxu0
        %v385 = vadd.f32 %v319, %v384
        %v386 = vpop.f32.mrf.mxu0
        %v387 = vadd.f32 %v319, %v386
        %388 = vdwg.mxu0
        %v389 = vmax.f32 %v370, 0.0
        %v390 = vmax.f32 %v372, 0.0
        %v391 = vmax.f32 %v375, 0.0
        %v392 = vmax.f32 %v377, 0.0
        %v393 = vmax.f32 %v380, 0.0
        %v394 = vmax.f32 %v382, 0.0
        %v395 = vmax.f32 %v385, 0.0
        %v396 = vmax.f32 %v387, 0.0
        %vm397 = vcmask 31744
        %398 = vst.msk [vmem:[#allocation2] sm:$0xff] %vm397, 0.0
        %vm399 = vcmask 27648
        %400 = vst.msk [vmem:[#allocation2 + $0x8] sm:$0xf] %vm399, 0.0
        %401 = vst.msk [vmem:[#allocation2 + $0x10] sm:$0xff] %vm397, 0.0
        %402 = vst.msk [vmem:[#allocation2 + $0x18] sm:$0xf] %vm399, 0.0
        %403 = vst.msk [vmem:[#allocation2 + $0x20] sm:$0xff] %vm397, 0.0
        %404 = vst.msk [vmem:[#allocation2 + $0x28] sm:$0xf] %vm399, 0.0
        %405 = vst.msk [vmem:[#allocation2 + $0x30] sm:$0xff] %vm397, 0.0
        %406 = vst.msk [vmem:[#allocation2 + $0x38] sm:$0xf] %vm399, 0.0
        %407 = vst.msk [vmem:[#allocation2 + $0x40] sm:$0xff] %vm397, 0.0
        %408 = vst.msk [vmem:[#allocation2 + $0x48] sm:$0xf] %vm399, 0.0
        %409 = vst.msk [vmem:[#allocation2 + $0x50] sm:$0xff] %vm397, 0.0
        %410 = vst.msk [vmem:[#allocation2 + $0x58] sm:$0xf] %vm399, 0.0
        %411 = vst.msk [vmem:[#allocation2 + $0x60] sm:$0xff] %vm397, 0.0
        %412 = vst.msk [vmem:[#allocation2 + $0x68] sm:$0xf] %vm399, 0.0
        %413 = vst.msk [vmem:[#allocation2 + $0x70] sm:$0xff] %vm397, 0.0
        %414 = vst.msk [vmem:[#allocation2 + $0x78] sm:$0xf] %vm399, 0.0
        %415 = vst.msk [vmem:[#allocation2 + $0x80] sm:$0xff] %vm397, 0.0
        %416 = vst.msk [vmem:[#allocation2 + $0x88] sm:$0xf] %vm399, 0.0
        %417 = vst.msk [vmem:[#allocation2 + $0x90] sm:$0xff] %vm397, 0.0
        %418 = vst.msk [vmem:[#allocation2 + $0x98] sm:$0xf] %vm399, 0.0
        %419 = vst.msk [vmem:[#allocation2 + $0xa0] sm:$0xff] %vm397, 0.0
        %420 = vst.msk [vmem:[#allocation2 + $0xa8] sm:$0xf] %vm399, 0.0
        %421 = vst.msk [vmem:[#allocation2 + $0xb0] sm:$0xff] %vm397, 0.0
        %422 = vst.msk [vmem:[#allocation2 + $0xb8] sm:$0xf] %vm399, 0.0
        %s423 = scalar_lea.vmem [#allocation2], 32
        %424 = vst.msk [vmem:[%s423 + $0x2] sm:$0xff] %vm397, %v389
        %425 = vst.msk [vmem:[%s423 + $0x12] sm:$0xff] %vm397, %v390
        %426 = vst.msk [vmem:[%s423 + $0x22] sm:$0xff] %vm397, %v391
        %427 = vst.msk [vmem:[%s423 + $0x32] sm:$0xff] %vm397, %v392
        %428 = vst.msk [vmem:[%s423 + $0x42] sm:$0xff] %vm397, %v393
        %429 = vst.msk [vmem:[%s423 + $0x52] sm:$0xff] %vm397, %v394
        %430 = vst.msk [vmem:[%s423 + $0x62] sm:$0xff] %vm397, %v395
        %431 = vst.msk [vmem:[%s423 + $0x72] sm:$0xff] %vm397, %v396
      $region52: #{resblock_forward.3} parent=47 // pred_fallthru
        _
      %s432 = smul.u32 %s23, 4
      %vm433 = vcmask 31744
      %434 = vst.msk [vmem:[#allocation3] sm:$0xff] %vm433, 0.0
      %435 = vst.msk [vmem:[#allocation3 + $0x8] sm:$0xff] %vm433, 0.0
      %436 = vst.msk [vmem:[#allocation3 + $0x10] sm:$0xff] %vm433, 0.0
      %437 = vst.msk [vmem:[#allocation3 + $0x18] sm:$0xff] %vm433, 0.0
      %s438 = smul.u32 %s432, 16
      %s439 = scalar_lea.vmem [#allocation2], %s438
      %v440 = vld [vmem:[%s439] sm:$0xff]
      %v441 = vld [vmem:[%s439 + $0x8] sm:$0xf]
      %v442 = vld [vmem:[%s439 + $0x10] sm:$0xff]
      %v443 = vld [vmem:[%s439 + $0x18] sm:$0xf]
      %v444 = vld [vmem:[%s439 + $0x20] sm:$0xff]
      %v445 = vld [vmem:[%s439 + $0x28] sm:$0xf]
      %v446 = vld [vmem:[%s439 + $0x30] sm:$0xff]
      %v447 = vld [vmem:[%s439 + $0x38] sm:$0xf]
      %v448 = vpack.c.bf16 %v440, %v440
      %v449 = vpack.c.bf16 %v441, %v441
      %v450 = vpack.c.bf16 %v442, %v442
      %v451 = vpack.c.bf16 %v443, %v443
      %v452 = vpack.c.bf16 %v444, %v444
      %v453 = vpack.c.bf16 %v445, %v445
      %v454 = vpack.c.bf16 %v446, %v446
      %v455 = vpack.c.bf16 %v447, %v447
      %v456 = vld [vmem:[#allocation3] sm:$0xff]
      %v457 = vld [vmem:[#allocation3 + $0x8] sm:$0xff]
      %v458 = vld [vmem:[#allocation3 + $0x10] sm:$0xff]
      %v459 = vld [vmem:[#allocation3 + $0x18] sm:$0xff]
      %v460 = vld [vmem:[%s3] sm:$0x3]
      %v465 = vunpack.c.l.b16 %v448
      %v466 = vunpack.c.l.b16 %v450
      %v467 = vunpack.c.l.b16 %v452
      %v468 = vunpack.c.l.b16 %v454
      %v469 = vpack.c.b16 %v466, %v465
      %v470 = vpack.c.b16 %v468, %v467
      %v472 = vsel %vm433, %v469, 0
      %v475 = vsel %vm433, %v470, 0
      %vm477 = vcmask 1041408
      %v479 = vsel %vm477, %v460, 0
      %481 = vmatpush.bf16.msra.mxu0 0
      %482 = vmatpush.bf16.msra.mxu0 0
      %483 = vmatpush.bf16.msra.mxu0 0
      %484 = vmatpush.bf16.msra.mxu0 0
      %485 = vmatpush.bf16.msra.mxu0 0
      %486 = vmatpush.bf16.msra.mxu0 0
      %487 = vmatpush.bf16.msra.mxu0 0
      %488 = vmatpush.bf16.msra.mxu0 %v479
      %489 = vmatmul.bf16.gmra.mxu0 %v472
      %v490 = vpop.f32.mrf.mxu0
      %v491 = vadd.f32 0.0, %v490
      %v492 = vpop.f32.mrf.mxu0
      %v493 = vadd.f32 0.0, %v492
      %494 = vmatmul.bf16.gmra.mxu0 %v475
      %v495 = vpop.f32.mrf.mxu0
      %v496 = vadd.f32 0.0, %v495
      %v497 = vpop.f32.mrf.mxu0
      %v498 = vadd.f32 0.0, %v497
      %499 = vdwg.mxu0
      %v500 = vadd.f32 %v456, %v491
      %v501 = vadd.f32 %v457, %v493
      %v502 = vadd.f32 %v458, %v496
      %v503 = vadd.f32 %v459, %v498
      %504 = vst.msk [vmem:[#allocation3] sm:$0xff] %vm433, %v500
      %505 = vst.msk [vmem:[#allocation3 + $0x8] sm:$0xff] %vm433, %v501
      %506 = vst.msk [vmem:[#allocation3 + $0x10] sm:$0xff] %vm433, %v502
      %507 = vst.msk [vmem:[#allocation3 + $0x18] sm:$0xff] %vm433, %v503
      %vm512 = vcmask 1042432
      %vm513 = vcmask 1046532
      %vm514 = vmor %vm512, %vm513
      %v515 = vrot.slane %v448, 5
      %v516 = vrot.slane %v515, 4
      %v517 = vrot.slane %v449, 5
      %v518 = vsel %vm514, %v516, %v517
      %v519 = vrot.slane %v450, 5
      %v520 = vrot.slane %v519, 4
      %v521 = vrot.slane %v451, 5
      %v522 = vsel %vm514, %v520, %v521
      %v523 = vrot.slane %v452, 5
      %v524 = vrot.slane %v523, 4
      %v525 = vrot.slane %v453, 5
      %v526 = vsel %vm514, %v524, %v525
      %v527 = vrot.slane %v454, 5
      %v528 = vrot.slane %v527, 4
      %v529 = vrot.slane %v455, 5
      %v530 = vsel %vm514, %v528, %v529
      %v531 = vld [vmem:[#allocation3] sm:$0xff]
      %v532 = vld [vmem:[#allocation3 + $0x8] sm:$0xff]
      %v533 = vld [vmem:[#allocation3 + $0x10] sm:$0xff]
      %v534 = vld [vmem:[#allocation3 + $0x18] sm:$0xff]
      %s535 = scalar_lea.vmem %s3, 2
      %v536 = vld [vmem:[%s535] sm:$0x3]
      %v537 = vunpack.c.l.b16 %v518
      %v538 = vunpack.c.l.b16 %v522
      %v539 = vunpack.c.l.b16 %v526
      %v540 = vunpack.c.l.b16 %v530
      %v541 = vpack.c.b16 %v538, %v537
      %v542 = vpack.c.b16 %v540, %v539
      %v544 = vsel %vm433, %v541, 0
      %v547 = vsel %vm433, %v542, 0
      %v550 = vsel %vm477, %v536, 0
      %552 = vmatpush.bf16.msra.mxu0 0
      %553 = vmatpush.bf16.msra.mxu0 0
      %554 = vmatpush.bf16.msra.mxu0 0
      %555 = vmatpush.bf16.msra.mxu0 0
      %556 = vmatpush.bf16.msra.mxu0 0
      %557 = vmatpush.bf16.msra.mxu0 0
      %558 = vmatpush.bf16.msra.mxu0 0
      %559 = vmatpush.bf16.msra.mxu0 %v550
      %560 = vmatmul.bf16.gmra.mxu0 %v544
      %v561 = vpop.f32.mrf.mxu0
      %v562 = vadd.f32 0.0, %v561
      %v563 = vpop.f32.mrf.mxu0
      %v564 = vadd.f32 0.0, %v563
      %565 = vmatmul.bf16.gmra.mxu0 %v547
      %v566 = vpop.f32.mrf.mxu0
      %v567 = vadd.f32 0.0, %v566
      %v568 = vpop.f32.mrf.mxu0
      %v569 = vadd.f32 0.0, %v568
      %570 = vdwg.mxu0
      %v571 = vadd.f32 %v531, %v562
      %v572 = vadd.f32 %v532, %v564
      %v573 = vadd.f32 %v533, %v567
      %v574 = vadd.f32 %v534, %v569
      %575 = vst.msk [vmem:[#allocation3] sm:$0xff] %vm433, %v571
      %576 = vst.msk [vmem:[#allocation3 + $0x8] sm:$0xff] %vm433, %v572
      %577 = vst.msk [vmem:[#allocation3 + $0x10] sm:$0xff] %vm433, %v573
      %578 = vst.msk [vmem:[#allocation3 + $0x18] sm:$0xff] %vm433, %v574
      %vm579 = vcmask 1041408
      %vm580 = vcmask 1045508
      %vm581 = vmor %vm579, %vm580
      %v582 = vrot.slane %v448, 6
      %v583 = vrot.slane %v582, 4
      %v584 = vrot.slane %v449, 6
      %v585 = vsel %vm581, %v583, %v584
      %v586 = vrot.slane %v450, 6
      %v587 = vrot.slane %v586, 4
      %v588 = vrot.slane %v451, 6
      %v589 = vsel %vm581, %v587, %v588
      %v590 = vrot.slane %v452, 6
      %v591 = vrot.slane %v590, 4
      %v592 = vrot.slane %v453, 6
      %v593 = vsel %vm581, %v591, %v592
      %v594 = vrot.slane %v454, 6
      %v595 = vrot.slane %v594, 4
      %v596 = vrot.slane %v455, 6
      %v597 = vsel %vm581, %v595, %v596
      %v598 = vld [vmem:[#allocation3] sm:$0xff]
      %v599 = vld [vmem:[#allocation3 + $0x8] sm:$0xff]
      %v600 = vld [vmem:[#allocation3 + $0x10] sm:$0xff]
      %v601 = vld [vmem:[#allocation3 + $0x18] sm:$0xff]
      %s602 = scalar_lea.vmem %s3, 4
      %v603 = vld [vmem:[%s602] sm:$0x3]
      %v604 = vunpack.c.l.b16 %v585
      %v605 = vunpack.c.l.b16 %v589
      %v606 = vunpack.c.l.b16 %v593
      %v607 = vunpack.c.l.b16 %v597
      %v608 = vpack.c.b16 %v605, %v604
      %v609 = vpack.c.b16 %v607, %v606
      %v611 = vsel %vm433, %v608, 0
      %v614 = vsel %vm433, %v609, 0
      %v617 = vsel %vm477, %v603, 0
      %619 = vmatpush.bf16.msra.mxu0 0
      %620 = vmatpush.bf16.msra.mxu0 0
      %621 = vmatpush.bf16.msra.mxu0 0
      %622 = vmatpush.bf16.msra.mxu0 0
      %623 = vmatpush.bf16.msra.mxu0 0
      %624 = vmatpush.bf16.msra.mxu0 0
      %625 = vmatpush.bf16.msra.mxu0 0
      %626 = vmatpush.bf16.msra.mxu0 %v617
      %627 = vmatmul.bf16.gmra.mxu0 %v611
      %v628 = vpop.f32.mrf.mxu0
      %v629 = vadd.f32 0.0, %v628
      %v630 = vpop.f32.mrf.mxu0
      %v631 = vadd.f32 0.0, %v630
      %632 = vmatmul.bf16.gmra.mxu0 %v614
      %v633 = vpop.f32.mrf.mxu0
      %v634 = vadd.f32 0.0, %v633
      %v635 = vpop.f32.mrf.mxu0
      %v636 = vadd.f32 0.0, %v635
      %637 = vdwg.mxu0
      %v638 = vadd.f32 %v598, %v629
      %v639 = vadd.f32 %v599, %v631
      %v640 = vadd.f32 %v600, %v634
      %v641 = vadd.f32 %v601, %v636
      %642 = vst.msk [vmem:[#allocation3] sm:$0xff] %vm433, %v638
      %643 = vst.msk [vmem:[#allocation3 + $0x8] sm:$0xff] %vm433, %v639
      %644 = vst.msk [vmem:[#allocation3 + $0x10] sm:$0xff] %vm433, %v640
      %645 = vst.msk [vmem:[#allocation3 + $0x18] sm:$0xff] %vm433, %v641
      %s646 = sadd.s32 %s432, 2
      %s647 = smul.u32 %s646, 16
      %s648 = scalar_lea.vmem [#allocation2], %s647
      %v649 = vld [vmem:[%s648] sm:$0xff]
      %v650 = vld [vmem:[%s648 + $0x8] sm:$0xf]
      %v651 = vld [vmem:[%s648 + $0x10] sm:$0xff]
      %v652 = vld [vmem:[%s648 + $0x18] sm:$0xf]
      %v653 = vld [vmem:[%s648 + $0x20] sm:$0xff]
      %v654 = vld [vmem:[%s648 + $0x28] sm:$0xf]
      %v655 = vld [vmem:[%s648 + $0x30] sm:$0xff]
      %v656 = vld [vmem:[%s648 + $0x38] sm:$0xf]
      %v657 = vpack.c.bf16 %v649, %v649
      %v658 = vpack.c.bf16 %v650, %v650
      %v659 = vpack.c.bf16 %v651, %v651
      %v660 = vpack.c.bf16 %v652, %v652
      %v661 = vpack.c.bf16 %v653, %v653
      %v662 = vpack.c.bf16 %v654, %v654
      %v663 = vpack.c.bf16 %v655, %v655
      %v664 = vpack.c.bf16 %v656, %v656
      %v665 = vld [vmem:[#allocation3] sm:$0xff]
      %v666 = vld [vmem:[#allocation3 + $0x8] sm:$0xff]
      %v667 = vld [vmem:[#allocation3 + $0x10] sm:$0xff]
      %v668 = vld [vmem:[#allocation3 + $0x18] sm:$0xff]
      %s669 = scalar_lea.vmem %s3, 6
      %v670 = vld [vmem:[%s669] sm:$0x3]
      %v675 = vunpack.c.l.b16 %v657
      %v676 = vunpack.c.l.b16 %v659
      %v677 = vunpack.c.l.b16 %v661
      %v678 = vunpack.c.l.b16 %v663
      %v679 = vpack.c.b16 %v676, %v675
      %v680 = vpack.c.b16 %v678, %v677
      %v682 = vsel %vm433, %v679, 0
      %v685 = vsel %vm433, %v680, 0
      %v688 = vsel %vm477, %v670, 0
      %690 = vmatpush.bf16.msra.mxu0 0
      %691 = vmatpush.bf16.msra.mxu0 0
      %692 = vmatpush.bf16.msra.mxu0 0
      %693 = vmatpush.bf16.msra.mxu0 0
      %694 = vmatpush.bf16.msra.mxu0 0
      %695 = vmatpush.bf16.msra.mxu0 0
      %696 = vmatpush.bf16.msra.mxu0 0
      %697 = vmatpush.bf16.msra.mxu0 %v688
      %698 = vmatmul.bf16.gmra.mxu0 %v682
      %v699 = vpop.f32.mrf.mxu0
      %v700 = vadd.f32 0.0, %v699
      %v701 = vpop.f32.mrf.mxu0
      %v702 = vadd.f32 0.0, %v701
      %703 = vmatmul.bf16.gmra.mxu0 %v685
      %v704 = vpop.f32.mrf.mxu0
      %v705 = vadd.f32 0.0, %v704
      %v706 = vpop.f32.mrf.mxu0
      %v707 = vadd.f32 0.0, %v706
      %708 = vdwg.mxu0
      %v709 = vadd.f32 %v665, %v700
      %v710 = vadd.f32 %v666, %v702
      %v711 = vadd.f32 %v667, %v705
      %v712 = vadd.f32 %v668, %v707
      %713 = vst.msk [vmem:[#allocation3] sm:$0xff] %vm433, %v709
      %714 = vst.msk [vmem:[#allocation3 + $0x8] sm:$0xff] %vm433, %v710
      %715 = vst.msk [vmem:[#allocation3 + $0x10] sm:$0xff] %vm433, %v711
      %716 = vst.msk [vmem:[#allocation3 + $0x18] sm:$0xff] %vm433, %v712
      %v721 = vrot.slane %v657, 5
      %v722 = vrot.slane %v721, 4
      %v723 = vrot.slane %v658, 5
      %v724 = vsel %vm514, %v722, %v723
      %v725 = vrot.slane %v659, 5
      %v726 = vrot.slane %v725, 4
      %v727 = vrot.slane %v660, 5
      %v728 = vsel %vm514, %v726, %v727
      %v729 = vrot.slane %v661, 5
      %v730 = vrot.slane %v729, 4
      %v731 = vrot.slane %v662, 5
      %v732 = vsel %vm514, %v730, %v731
      %v733 = vrot.slane %v663, 5
      %v734 = vrot.slane %v733, 4
      %v735 = vrot.slane %v664, 5
      %v736 = vsel %vm514, %v734, %v735
      %v737 = vld [vmem:[#allocation3] sm:$0xff]
      %v738 = vld [vmem:[#allocation3 + $0x8] sm:$0xff]
      %v739 = vld [vmem:[#allocation3 + $0x10] sm:$0xff]
      %v740 = vld [vmem:[#allocation3 + $0x18] sm:$0xff]
      %s741 = scalar_lea.vmem %s3, 8
      %v742 = vld [vmem:[%s741] sm:$0x3]
      %v743 = vunpack.c.l.b16 %v724
      %v744 = vunpack.c.l.b16 %v728
      %v745 = vunpack.c.l.b16 %v732
      %v746 = vunpack.c.l.b16 %v736
      %v747 = vpack.c.b16 %v744, %v743
      %v748 = vpack.c.b16 %v746, %v745
      %v750 = vsel %vm433, %v747, 0
      %v753 = vsel %vm433, %v748, 0
      %v756 = vsel %vm477, %v742, 0
      %758 = vmatpush.bf16.msra.mxu0 0
      %759 = vmatpush.bf16.msra.mxu0 0
      %760 = vmatpush.bf16.msra.mxu0 0
      %761 = vmatpush.bf16.msra.mxu0 0
      %762 = vmatpush.bf16.msra.mxu0 0
      %763 = vmatpush.bf16.msra.mxu0 0
      %764 = vmatpush.bf16.msra.mxu0 0
      %765 = vmatpush.bf16.msra.mxu0 %v756
      %766 = vmatmul.bf16.gmra.mxu0 %v750
      %v767 = vpop.f32.mrf.mxu0
      %v768 = vadd.f32 0.0, %v767
      %v769 = vpop.f32.mrf.mxu0
      %v770 = vadd.f32 0.0, %v769
      %771 = vmatmul.bf16.gmra.mxu0 %v753
      %v772 = vpop.f32.mrf.mxu0
      %v773 = vadd.f32 0.0, %v772
      %v774 = vpop.f32.mrf.mxu0
      %v775 = vadd.f32 0.0, %v774
      %776 = vdwg.mxu0
      %v777 = vadd.f32 %v737, %v768
      %v778 = vadd.f32 %v738, %v770
      %v779 = vadd.f32 %v739, %v773
      %v780 = vadd.f32 %v740, %v775
      %781 = vst.msk [vmem:[#allocation3] sm:$0xff] %vm433, %v777
      %782 = vst.msk [vmem:[#allocation3 + $0x8] sm:$0xff] %vm433, %v778
      %783 = vst.msk [vmem:[#allocation3 + $0x10] sm:$0xff] %vm433, %v779
      %784 = vst.msk [vmem:[#allocation3 + $0x18] sm:$0xff] %vm433, %v780
      %v785 = vrot.slane %v657, 6
      %v786 = vrot.slane %v785, 4
      %v787 = vrot.slane %v658, 6
      %v788 = vsel %vm581, %v786, %v787
      %v789 = vrot.slane %v659, 6
      %v790 = vrot.slane %v789, 4
      %v791 = vrot.slane %v660, 6
      %v792 = vsel %vm581, %v790, %v791
      %v793 = vrot.slane %v661, 6
      %v794 = vrot.slane %v793, 4
      %v795 = vrot.slane %v662, 6
      %v796 = vsel %vm581, %v794, %v795
      %v797 = vrot.slane %v663, 6
      %v798 = vrot.slane %v797, 4
      %v799 = vrot.slane %v664, 6
      %v800 = vsel %vm581, %v798, %v799
      %v801 = vld [vmem:[#allocation3] sm:$0xff]
      %v802 = vld [vmem:[#allocation3 + $0x8] sm:$0xff]
      %v803 = vld [vmem:[#allocation3 + $0x10] sm:$0xff]
      %v804 = vld [vmem:[#allocation3 + $0x18] sm:$0xff]
      %s805 = scalar_lea.vmem %s3, 10
      %v806 = vld [vmem:[%s805] sm:$0x3]
      %v807 = vunpack.c.l.b16 %v788
      %v808 = vunpack.c.l.b16 %v792
      %v809 = vunpack.c.l.b16 %v796
      %v810 = vunpack.c.l.b16 %v800
      %v811 = vpack.c.b16 %v808, %v807
      %v812 = vpack.c.b16 %v810, %v809
      %v814 = vsel %vm433, %v811, 0
      %v817 = vsel %vm433, %v812, 0
      %v820 = vsel %vm477, %v806, 0
      %822 = vmatpush.bf16.msra.mxu0 0
      %823 = vmatpush.bf16.msra.mxu0 0
      %824 = vmatpush.bf16.msra.mxu0 0
      %825 = vmatpush.bf16.msra.mxu0 0
      %826 = vmatpush.bf16.msra.mxu0 0
      %827 = vmatpush.bf16.msra.mxu0 0
      %828 = vmatpush.bf16.msra.mxu0 0
      %829 = vmatpush.bf16.msra.mxu0 %v820
      %830 = vmatmul.bf16.gmra.mxu0 %v814
      %v831 = vpop.f32.mrf.mxu0
      %v832 = vadd.f32 0.0, %v831
      %v833 = vpop.f32.mrf.mxu0
      %v834 = vadd.f32 0.0, %v833
      %835 = vmatmul.bf16.gmra.mxu0 %v817
      %v836 = vpop.f32.mrf.mxu0
      %v837 = vadd.f32 0.0, %v836
      %v838 = vpop.f32.mrf.mxu0
      %v839 = vadd.f32 0.0, %v838
      %840 = vdwg.mxu0
      %v841 = vadd.f32 %v801, %v832
      %v842 = vadd.f32 %v802, %v834
      %v843 = vadd.f32 %v803, %v837
      %v844 = vadd.f32 %v804, %v839
      %845 = vst.msk [vmem:[#allocation3] sm:$0xff] %vm433, %v841
      %846 = vst.msk [vmem:[#allocation3 + $0x8] sm:$0xff] %vm433, %v842
      %847 = vst.msk [vmem:[#allocation3 + $0x10] sm:$0xff] %vm433, %v843
      %848 = vst.msk [vmem:[#allocation3 + $0x18] sm:$0xff] %vm433, %v844
      %s849 = sadd.s32 %s432, 4
      %s850 = smul.u32 %s849, 16
      %s851 = scalar_lea.vmem [#allocation2], %s850
      %v852 = vld [vmem:[%s851] sm:$0xff]
      %v853 = vld [vmem:[%s851 + $0x8] sm:$0xf]
      %v854 = vld [vmem:[%s851 + $0x10] sm:$0xff]
      %v855 = vld [vmem:[%s851 + $0x18] sm:$0xf]
      %v856 = vld [vmem:[%s851 + $0x20] sm:$0xff]
      %v857 = vld [vmem:[%s851 + $0x28] sm:$0xf]
      %v858 = vld [vmem:[%s851 + $0x30] sm:$0xff]
      %v859 = vld [vmem:[%s851 + $0x38] sm:$0xf]
      %v860 = vpack.c.bf16 %v852, %v852
      %v861 = vpack.c.bf16 %v853, %v853
      %v862 = vpack.c.bf16 %v854, %v854
      %v863 = vpack.c.bf16 %v855, %v855
      %v864 = vpack.c.bf16 %v856, %v856
      %v865 = vpack.c.bf16 %v857, %v857
      %v866 = vpack.c.bf16 %v858, %v858
      %v867 = vpack.c.bf16 %v859, %v859
      %v868 = vld [vmem:[#allocation3] sm:$0xff]
      %v869 = vld [vmem:[#allocation3 + $0x8] sm:$0xff]
      %v870 = vld [vmem:[#allocation3 + $0x10] sm:$0xff]
      %v871 = vld [vmem:[#allocation3 + $0x18] sm:$0xff]
      %s872 = scalar_lea.vmem %s3, 12
      %v873 = vld [vmem:[%s872] sm:$0x3]
      %v878 = vunpack.c.l.b16 %v860
      %v879 = vunpack.c.l.b16 %v862
      %v880 = vunpack.c.l.b16 %v864
      %v881 = vunpack.c.l.b16 %v866
      %v882 = vpack.c.b16 %v879, %v878
      %v883 = vpack.c.b16 %v881, %v880
      %v885 = vsel %vm433, %v882, 0
      %v888 = vsel %vm433, %v883, 0
      %v891 = vsel %vm477, %v873, 0
      %893 = vmatpush.bf16.msra.mxu0 0
      %894 = vmatpush.bf16.msra.mxu0 0
      %895 = vmatpush.bf16.msra.mxu0 0
      %896 = vmatpush.bf16.msra.mxu0 0
      %897 = vmatpush.bf16.msra.mxu0 0
      %898 = vmatpush.bf16.msra.mxu0 0
      %899 = vmatpush.bf16.msra.mxu0 0
      %900 = vmatpush.bf16.msra.mxu0 %v891
      %901 = vmatmul.bf16.gmra.mxu0 %v885
      %v902 = vpop.f32.mrf.mxu0
      %v903 = vadd.f32 0.0, %v902
      %v904 = vpop.f32.mrf.mxu0
      %v905 = vadd.f32 0.0, %v904
      %906 = vmatmul.bf16.gmra.mxu0 %v888
      %v907 = vpop.f32.mrf.mxu0
      %v908 = vadd.f32 0.0, %v907
      %v909 = vpop.f32.mrf.mxu0
      %v910 = vadd.f32 0.0, %v909
      %911 = vdwg.mxu0
      %v912 = vadd.f32 %v868, %v903
      %v913 = vadd.f32 %v869, %v905
      %v914 = vadd.f32 %v870, %v908
      %v915 = vadd.f32 %v871, %v910
      %916 = vst.msk [vmem:[#allocation3] sm:$0xff] %vm433, %v912
      %917 = vst.msk [vmem:[#allocation3 + $0x8] sm:$0xff] %vm433, %v913
      %918 = vst.msk [vmem:[#allocation3 + $0x10] sm:$0xff] %vm433, %v914
      %919 = vst.msk [vmem:[#allocation3 + $0x18] sm:$0xff] %vm433, %v915
      %v924 = vrot.slane %v860, 5
      %v925 = vrot.slane %v924, 4
      %v926 = vrot.slane %v861, 5
      %v927 = vsel %vm514, %v925, %v926
      %v928 = vrot.slane %v862, 5
      %v929 = vrot.slane %v928, 4
      %v930 = vrot.slane %v863, 5
      %v931 = vsel %vm514, %v929, %v930
      %v932 = vrot.slane %v864, 5
      %v933 = vrot.slane %v932, 4
      %v934 = vrot.slane %v865, 5
      %v935 = vsel %vm514, %v933, %v934
      %v936 = vrot.slane %v866, 5
      %v937 = vrot.slane %v936, 4
      %v938 = vrot.slane %v867, 5
      %v939 = vsel %vm514, %v937, %v938
      %v940 = vld [vmem:[#allocation3] sm:$0xff]
      %v941 = vld [vmem:[#allocation3 + $0x8] sm:$0xff]
      %v942 = vld [vmem:[#allocation3 + $0x10] sm:$0xff]
      %v943 = vld [vmem:[#allocation3 + $0x18] sm:$0xff]
      %s944 = scalar_lea.vmem %s3, 14
      %v945 = vld [vmem:[%s944] sm:$0x3]
      %v946 = vunpack.c.l.b16 %v927
      %v947 = vunpack.c.l.b16 %v931
      %v948 = vunpack.c.l.b16 %v935
      %v949 = vunpack.c.l.b16 %v939
      %v950 = vpack.c.b16 %v947, %v946
      %v951 = vpack.c.b16 %v949, %v948
      %v953 = vsel %vm433, %v950, 0
      %v956 = vsel %vm433, %v951, 0
      %v959 = vsel %vm477, %v945, 0
      %961 = vmatpush.bf16.msra.mxu0 0
      %962 = vmatpush.bf16.msra.mxu0 0
      %963 = vmatpush.bf16.msra.mxu0 0
      %964 = vmatpush.bf16.msra.mxu0 0
      %965 = vmatpush.bf16.msra.mxu0 0
      %966 = vmatpush.bf16.msra.mxu0 0
      %967 = vmatpush.bf16.msra.mxu0 0
      %968 = vmatpush.bf16.msra.mxu0 %v959
      %969 = vmatmul.bf16.gmra.mxu0 %v953
      %v970 = vpop.f32.mrf.mxu0
      %v971 = vadd.f32 0.0, %v970
      %v972 = vpop.f32.mrf.mxu0
      %v973 = vadd.f32 0.0, %v972
      %974 = vmatmul.bf16.gmra.mxu0 %v956
      %v975 = vpop.f32.mrf.mxu0
      %v976 = vadd.f32 0.0, %v975
      %v977 = vpop.f32.mrf.mxu0
      %v978 = vadd.f32 0.0, %v977
      %979 = vdwg.mxu0
      %v980 = vadd.f32 %v940, %v971
      %v981 = vadd.f32 %v941, %v973
      %v982 = vadd.f32 %v942, %v976
      %v983 = vadd.f32 %v943, %v978
      %984 = vst.msk [vmem:[#allocation3] sm:$0xff] %vm433, %v980
      %985 = vst.msk [vmem:[#allocation3 + $0x8] sm:$0xff] %vm433, %v981
      %986 = vst.msk [vmem:[#allocation3 + $0x10] sm:$0xff] %vm433, %v982
      %987 = vst.msk [vmem:[#allocation3 + $0x18] sm:$0xff] %vm433, %v983
      %v988 = vrot.slane %v860, 6
      %v989 = vrot.slane %v988, 4
      %v990 = vrot.slane %v861, 6
      %v991 = vsel %vm581, %v989, %v990
      %v992 = vrot.slane %v862, 6
      %v993 = vrot.slane %v992, 4
      %v994 = vrot.slane %v863, 6
      %v995 = vsel %vm581, %v993, %v994
      %v996 = vrot.slane %v864, 6
      %v997 = vrot.slane %v996, 4
      %v998 = vrot.slane %v865, 6
      %v999 = vsel %vm581, %v997, %v998
      %v1000 = vrot.slane %v866, 6
      %v1001 = vrot.slane %v1000, 4
      %v1002 = vrot.slane %v867, 6
      %v1003 = vsel %vm581, %v1001, %v1002
      %v1004 = vld [vmem:[#allocation3] sm:$0xff]
      %v1005 = vld [vmem:[#allocation3 + $0x8] sm:$0xff]
      %v1006 = vld [vmem:[#allocation3 + $0x10] sm:$0xff]
      %v1007 = vld [vmem:[#allocation3 + $0x18] sm:$0xff]
      %s1008 = scalar_lea.vmem %s3, 16
      %v1009 = vld [vmem:[%s1008] sm:$0x3]
      %v1010 = vunpack.c.l.b16 %v991
      %v1011 = vunpack.c.l.b16 %v995
      %v1012 = vunpack.c.l.b16 %v999
      %v1013 = vunpack.c.l.b16 %v1003
      %v1014 = vpack.c.b16 %v1011, %v1010
      %v1015 = vpack.c.b16 %v1013, %v1012
      %v1017 = vsel %vm433, %v1014, 0
      %v1020 = vsel %vm433, %v1015, 0
      %v1023 = vsel %vm477, %v1009, 0
      %1025 = vmatpush.bf16.msra.mxu0 0
      %1026 = vmatpush.bf16.msra.mxu0 0
      %1027 = vmatpush.bf16.msra.mxu0 0
      %1028 = vmatpush.bf16.msra.mxu0 0
      %1029 = vmatpush.bf16.msra.mxu0 0
      %1030 = vmatpush.bf16.msra.mxu0 0
      %1031 = vmatpush.bf16.msra.mxu0 0
      %1032 = vmatpush.bf16.msra.mxu0 %v1023
      %1033 = vmatmul.bf16.gmra.mxu0 %v1017
      %v1034 = vpop.f32.mrf.mxu0
      %v1035 = vadd.f32 0.0, %v1034
      %v1036 = vpop.f32.mrf.mxu0
      %v1037 = vadd.f32 0.0, %v1036
      %1038 = vmatmul.bf16.gmra.mxu0 %v1020
      %v1039 = vpop.f32.mrf.mxu0
      %v1040 = vadd.f32 0.0, %v1039
      %v1041 = vpop.f32.mrf.mxu0
      %v1042 = vadd.f32 0.0, %v1041
      %1043 = vdwg.mxu0
      %v1044 = vadd.f32 %v1004, %v1035
      %v1045 = vadd.f32 %v1005, %v1037
      %v1046 = vadd.f32 %v1006, %v1040
      %v1047 = vadd.f32 %v1007, %v1042
      %1048 = vst.msk [vmem:[#allocation3] sm:$0xff] %vm433, %v1044
      %1049 = vst.msk [vmem:[#allocation3 + $0x8] sm:$0xff] %vm433, %v1045
      %1050 = vst.msk [vmem:[#allocation3 + $0x10] sm:$0xff] %vm433, %v1046
      %1051 = vst.msk [vmem:[#allocation3 + $0x18] sm:$0xff] %vm433, %v1047
      %v1052 = vld [vmem:[#allocation3] sm:$0xff]
      %v1053 = vld [vmem:[#allocation3 + $0x8] sm:$0xff]
      %v1054 = vld [vmem:[#allocation3 + $0x10] sm:$0xff]
      %v1055 = vld [vmem:[#allocation3 + $0x18] sm:$0xff]
      %v1056 = vld [vmem:[%s4] sm:$0x1]
      %v1058 = vperm.slane %v1056, 0
      %v1060 = vadd.f32 %v1052, %v1058
      %v1061 = vadd.f32 %v1053, %v1058
      %v1062 = vadd.f32 %v1054, %v1058
      %v1063 = vadd.f32 %v1055, %v1058
      %v1064 = vmax.f32 %v1060, 0.0
      %v1065 = vmax.f32 %v1061, 0.0
      %v1066 = vmax.f32 %v1062, 0.0
      %v1067 = vmax.f32 %v1063, 0.0
      %v1068 = vpack.c.bf16 %v1065, %v1064
      %v1069 = vpack.c.bf16 %v1067, %v1066
      %v1070 = vld [vmem:[%s5] sm:$0x3]
      %v1071 = vld [vmem:[%s6] sm:$0x1]
      %v1073 = vperm.slane %v1071, 0
      %v1076 = vsel %vm433, %v1068, 0
      %v1079 = vsel %vm433, %v1069, 0
      %v1082 = vsel %vm477, %v1070, 0
      %1084 = vmatpush.bf16.msra.mxu0 0
      %1085 = vmatpush.bf16.msra.mxu0 0
      %1086 = vmatpush.bf16.msra.mxu0 0
      %1087 = vmatpush.bf16.msra.mxu0 0
      %1088 = vmatpush.bf16.msra.mxu0 0
      %1089 = vmatpush.bf16.msra.mxu0 0
      %1090 = vmatpush.bf16.msra.mxu0 0
      %1091 = vmatpush.bf16.msra.mxu0 %v1082
      %1092 = vmatmul.bf16.gmra.mxu0 %v1076
      %v1093 = vpop.f32.mrf.mxu0
      %v1094 = vadd.f32 %v1073, %v1093
      %v1095 = vpop.f32.mrf.mxu0
      %v1096 = vadd.f32 %v1073, %v1095
      %1097 = vmatmul.bf16.gmra.mxu0 %v1079
      %v1098 = vpop.f32.mrf.mxu0
      %v1099 = vadd.f32 %v1073, %v1098
      %v1100 = vpop.f32.mrf.mxu0
      %v1101 = vadd.f32 %v1073, %v1100
      %1102 = vdwg.mxu0
      %s1103 = smul.addr %s432, 4
      %s1104 = scalar_lea.vmem %s291, %s1103
      %v1105 = vld [vmem:[%s1104] sm:$0xf]
      %v1106 = vld [vmem:[%s1104 + $0x4] sm:$0xf]
      %v1107 = vld [vmem:[%s1104 + $0x8] sm:$0xf]
      %v1108 = vld [vmem:[%s1104 + $0xc] sm:$0xf]
      %v1109 = vunpack.c.l.bf16 %v1105
      %v1110 = vunpack.c.l.bf16 %v1106
      %v1111 = vunpack.c.l.bf16 %v1107
      %v1112 = vunpack.c.l.bf16 %v1108
      %v1113 = vadd.f32 %v1094, %v1109
      %v1114 = vadd.f32 %v1096, %v1110
      %v1115 = vadd.f32 %v1099, %v1111
      %v1116 = vadd.f32 %v1101, %v1112
      %v1117 = vmax.f32 %v1113, 0.0
      %v1118 = vmax.f32 %v1114, 0.0
      %v1119 = vmax.f32 %v1115, 0.0
      %v1120 = vmax.f32 %v1116, 0.0
      %v1121 = vpack.c.bf16 %v1117, %v1117
      %v1122 = vpack.c.bf16 %v1118, %v1118
      %v1123 = vpack.c.bf16 %v1119, %v1119
      %v1124 = vpack.c.bf16 %v1120, %v1120
      %vm1125 = vcmask 125952
      %1126 = vst.msk [vmem:[%s300] sm:$0xf] %vm1125, %v1121
      %1127 = vst.msk [vmem:[%s300 + $0x4] sm:$0xf] %vm1125, %v1122
      %1128 = vst.msk [vmem:[%s300 + $0x8] sm:$0xf] %vm1125, %v1123
      %1129 = vst.msk [vmem:[%s300 + $0xc] sm:$0xf] %vm1125, %v1124
      %s1130 = smul.u32 4, %s23
      %p1131 = scmp.lt.s32.totalorder %s22, 1
      %s1132 = scalar_select %p1131, %s22, 1
      %p1133 = scmp.lt.s32.totalorder %s1130, 7
      %s1134 = scalar_select %p1133, %s1130, 7
      %s1135 = smul.addr %s1132, 8
      %s1136 = sadd.s32 %s1134, %s1135
      %s1137 = smul.addr %s1136, 4
      %s1138 = scalar_lea.vmem %s7, %s1137
      // Predicated region
      $region53: #{resblock_forward.3} parent=47 // pred_check
        %p1139 = pneg %p202
      $region54: #{resblock_forward.3} parent=47 // pred_check_branch
        %1141 = sbr.rel (%p1139) target = $region56
      $region55: #{resblock_forward.3} parent=47 // pred_region
        %s1142 = smul.u32 4, %s23
      $region56: #{resblock_forward.3} parent=47 // pred_fallthru
        _
    $region48: #{resblock_forward.3} parent=5 // pred_fallthru
      _
    %p1143 = scmp.le.s32.totalorder 2, %s13
    // Predicated region
    $region57: #{resblock_forward.3} parent=5 // pred_check
      %p1144 = pneg %p1143
    $region58: #{resblock_forward.3} parent=5 // pred_check_branch
      %1146 = sbr.rel (%p1144) target = $region60
    $region59: #{resblock_forward.3} parent=5 // pred_region
      %s1147 = ssub.s32 %s13, 2
      // Predicated region
      $region61: #{resblock_forward.3} parent=59 // pred_check
        %p1148 = pneg %p208
      $region62: #{resblock_forward.3} parent=59 // pred_check_branch
        %1150 = sbr.rel (%p1148) target = $region64
      $region63: #{resblock_forward.3} parent=59 // pred_region
        %s1151 = smul.u32 4, %s25
        %p1152 = scmp.lt.s32.totalorder %s24, 1
        %s1153 = scalar_select %p1152, %s24, 1
        %p1154 = scmp.lt.s32.totalorder %s1151, 7
        %s1155 = scalar_select %p1154, %s1151, 7
        %s1156 = smul.addr %s1153, 8
        %s1157 = sadd.s32 %s1155, %s1156
        %s1158 = smul.addr %s1157, 4
        %s1159 = scalar_lea.vmem %s7, %s1158
      $region64: #{resblock_forward.3} parent=59 // pred_fallthru
        _
    $region60: #{resblock_forward.3} parent=5 // pred_fallthru
      _
  $region6: #{resblock_forward.3} parent=0 // loop_footer
    %s17 = sadd.s32 1, %s13
  $region7: #{resblock_forward.3} parent=0 // loop_footer_branch
    %12 = sbr.rel target = $region3
  $region8: #{resblock_forward.3} parent=0 // loop_exit
    _

</llo_original>
